<compile_context>
chip_gen: v7x
topology: tpu7x:2x2x1
jax: 0.10.0
libtpu: 0.0.40
codegen_flags: <defaults>
</compile_context>

<pallas_src>
import math

import numpy as np

import jax
import jax.numpy as jnp
from jax.experimental import pallas as pl
from jax.experimental.pallas import tpu as pltpu


def _taylor_exp_kernel(x_ref, pa_ref, pb_ref, ba_ref, bb_ref, o_ref):
    # x_ref:  (tn, d)
    # pa_ref: (d, d_out)   pb_ref: (d, d_out)     (selector matrices, scales folded in)
    # ba_ref: (1, d_out)   bb_ref: (1, d_out)     (constant bias rows)
    # o_ref:  (tn, d_out)
    x = x_ref[...]
    a = jnp.dot(x, pa_ref[...], preferred_element_type=jnp.float32,
                precision=jax.lax.Precision.HIGHEST)
    b = jnp.dot(x, pb_ref[...], preferred_element_type=jnp.float32,
                precision=jax.lax.Precision.HIGHEST)
    out = (a + ba_ref[...]) * (b + bb_ref[...])
    o_ref[...] = out.astype(o_ref.dtype)


def _build_selectors(d, inv_rrd, inv_r2rd):
    """Constant selector matrices / bias rows so that
       (x @ PA + bA) * (x @ PB + bB) == [1, x*inv_rrd, outer(x,x).flatten()*inv_r2rd]."""
    d_out = 1 + d + d * d
    pa = np.zeros((d, d_out), np.float32)
    pb = np.zeros((d, d_out), np.float32)
    ba = np.zeros((1, d_out), np.float32)
    bb = np.zeros((1, d_out), np.float32)

    # column 0: A = 1 (bias), B = 1 (bias)  ->  out = 1
    ba[0, 0] = 1.0
    bb[0, 0] = 1.0

    # columns 1 .. d: A = x_j * inv_rrd, B = 1  ->  out = x_j / d^(1/4)
    for j in range(d):
        pa[j, 1 + j] = inv_rrd
        bb[0, 1 + j] = 1.0

    # columns 1+d + i*d + j: A = x_i, B = x_j * inv_r2rd  ->  out = x_i*x_j/(sqrt(2)*sqrt(d))
    for i in range(d):
        for j in range(d):
            c = 1 + d + i * d + j
            pa[i, c] = 1.0
            pb[j, c] = inv_r2rd
    return pa, pb, ba, bb


def _default_tile_rows():
    try:
        kind = jax.devices()[0].device_kind.lower()
    except Exception:
        return 1024
    if "v7" in kind or "7x" in kind or "v6" in kind:
        return 2048      # HBM is fast enough that 512-row tiles are step-overhead-bound
    return 1024          # v5e & older / unknown: keep double-buffered tiles well in VMEM


def taylor_exp(x, *, scale_dim=None, tile_rows=None):
    """Pallas implementation of TaylorExp.forward for feature-dim-last input."""
    orig_shape = x.shape
    d = orig_shape[-1]
    if scale_dim is None:
        scale_dim = d
    rd = math.sqrt(scale_dim)
    inv_rrd = 1.0 / math.sqrt(rd)
    inv_r2rd = 1.0 / (math.sqrt(2.0) * rd)
    d_out = 1 + d + d * d

    x2d = x.reshape(-1, d)
    n = x2d.shape[0]

    if tile_rows is None:
        tile_rows = _default_tile_rows()

    # Sublane minimum: 8 for 32-bit dtypes, 16 for packed (bf16 etc.).
    min_sub = 8 if x2d.dtype.itemsize >= 4 else 16
    tile_rows = max(min_sub, (int(tile_rows) // min_sub) * min_sub)
    n_ceil = ((n + min_sub - 1) // min_sub) * min_sub
    tn = min(tile_rows, n_ceil)

    pa_np, pb_np, ba_np, bb_np = _build_selectors(d, inv_rrd, inv_r2rd)
    sel_dtype = x.dtype  # bf16 selectors for bf16 input -> bf16 MXU, f32 accumulation
    pa = jnp.asarray(pa_np, dtype=sel_dtype)
    pb = jnp.asarray(pb_np, dtype=sel_dtype)
    ba = jnp.asarray(ba_np, dtype=jnp.float32)
    bb = jnp.asarray(bb_np, dtype=jnp.float32)

    grid = (pl.cdiv(n, tn),)

    out2d = pl.pallas_call(
        _taylor_exp_kernel,
        out_shape=jax.ShapeDtypeStruct((n, d_out), x.dtype),
        grid_spec=pltpu.PrefetchScalarGridSpec(
            num_scalar_prefetch=0,
            grid=grid,
            in_specs=[
                pl.BlockSpec((tn, d), lambda i: (i, 0)),
                pl.BlockSpec((d, d_out), lambda i: (0, 0)),   # resident across steps
                pl.BlockSpec((d, d_out), lambda i: (0, 0)),
                pl.BlockSpec((1, d_out), lambda i: (0, 0)),
                pl.BlockSpec((1, d_out), lambda i: (0, 0)),
            ],
            out_specs=pl.BlockSpec((tn, d_out), lambda i: (i, 0)),
        ),
        compiler_params=pltpu.CompilerParams(
            dimension_semantics=("parallel",)),
    )(x2d, pa, pb, ba, bb)

    return out2d.reshape(*orig_shape[:-1], d_out)


def _taylor_exp_ref(x, scale_dim=None):
    d = x.shape[-1]
    if scale_dim is None:
        scale_dim = d
    r2 = math.sqrt(2.0)
    rd = math.sqrt(scale_dim)
    rrd = math.sqrt(rd)
    x2 = (x[..., :, None] * x[..., None, :]).reshape(*x.shape[:-1], d * d) / r2
    return jnp.concatenate([x[..., :1] ** 0, x / rrd, x2 / rd], axis=-1)


if __name__ == "__main__":
    key = jax.random.PRNGKey(0)
    k1, k2 = jax.random.split(key)

    # (batch=2, heads=4, seq=8, head_dim=16) -> output feature dim = 1 + 16 + 256 = 273
    x = jax.random.normal(k1, (2, 4, 8, 16), dtype=jnp.float32)
    out = jax.block_until_ready(taylor_exp(x))
    ref = _taylor_exp_ref(x)
    assert out.shape == ref.shape, (out.shape, ref.shape)
    assert jnp.allclose(out, ref, atol=1e-5, rtol=1e-5), "mismatch vs reference"

    # Ragged-tail path: 3*2*5 = 30 rows with a 16-row tile -> grid of 2, last block ragged.
    y = jax.random.normal(k2, (3, 2, 5, 16), dtype=jnp.float32)
    out_y = jax.block_until_ready(taylor_exp(y, tile_rows=16))
    ref_y = _taylor_exp_ref(y)
    assert out_y.shape == ref_y.shape, (out_y.shape, ref_y.shape)
    assert jnp.allclose(out_y, ref_y, atol=1e-5, rtol=1e-5), "mismatch (ragged tail)"

    print("KERNEL_OK")
</pallas_src>

<mosaic_0001>
module attributes {stable_mosaic.version = 11 : i64} {
  func.func @_taylor_exp_kernel(%arg0: i32, %arg1: memref<64x16xf32, #tpu.memory_space<vmem>>, %arg2: memref<16x273xf32, #tpu.memory_space<vmem>>, %arg3: memref<16x273xf32, #tpu.memory_space<vmem>>, %arg4: memref<1x273xf32, #tpu.memory_space<vmem>>, %arg5: memref<1x273xf32, #tpu.memory_space<vmem>>, %arg6: memref<64x273xf32, #tpu.memory_space<vmem>>) attributes {dimension_semantics = [#tpu.dimension_semantics<parallel>], iteration_bounds = array<i64: 1>, scalar_prefetch = 0 : i64, scratch_operands = 0 : i64, tpu.core_type = #tpu.core_type<tc>, window_params = [{transform_indices = @transform_0, window_bounds = array<i64: 64, 16>}, {pipeline_mode = #tpu.pipeline_mode<synchronous>, transform_indices = @transform_1, window_bounds = array<i64: 16, 273>}, {pipeline_mode = #tpu.pipeline_mode<synchronous>, transform_indices = @transform_2, window_bounds = array<i64: 16, 273>}, {pipeline_mode = #tpu.pipeline_mode<synchronous>, transform_indices = @transform_3, window_bounds = array<i64: 1, 273>}, {pipeline_mode = #tpu.pipeline_mode<synchronous>, transform_indices = @transform_4, window_bounds = array<i64: 1, 273>}, {transform_indices = @transform_5, window_bounds = array<i64: 64, 273>}]} {
    %c0 = arith.constant 0 : index
    %c0_0 = arith.constant 0 : index
    %0 = vector.load %arg1[%c0, %c0_0] : memref<64x16xf32, #tpu.memory_space<vmem>>, vector<64x16xf32>
    %c0_1 = arith.constant 0 : index
    %c0_2 = arith.constant 0 : index
    %1 = vector.load %arg2[%c0_1, %c0_2] : memref<16x273xf32, #tpu.memory_space<vmem>>, vector<16x273xf32>
    %cst = arith.constant dense<0.000000e+00> : vector<64x273xf32>
    %2 = tpu.matmul %0, %1, %cst {dimension_numbers = #tpu.dot_dimension_numbers<[1], [0], [0], [1], [0, 0, 1, 1], [], []>, precision = #tpu.contract_precision<fp32>} : vector<64x16xf32>, vector<16x273xf32>, vector<64x273xf32> -> vector<64x273xf32>
    %c0_3 = arith.constant 0 : index
    %c0_4 = arith.constant 0 : index
    %3 = vector.load %arg3[%c0_3, %c0_4] : memref<16x273xf32, #tpu.memory_space<vmem>>, vector<16x273xf32>
    %cst_5 = arith.constant dense<0.000000e+00> : vector<64x273xf32>
    %4 = tpu.matmul %0, %3, %cst_5 {dimension_numbers = #tpu.dot_dimension_numbers<[1], [0], [0], [1], [0, 0, 1, 1], [], []>, precision = #tpu.contract_precision<fp32>} : vector<64x16xf32>, vector<16x273xf32>, vector<64x273xf32> -> vector<64x273xf32>
    %c0_6 = arith.constant 0 : index
    %c0_7 = arith.constant 0 : index
    %5 = vector.load %arg4[%c0_6, %c0_7] : memref<1x273xf32, #tpu.memory_space<vmem>>, vector<1x273xf32>
    %6 = vector.broadcast %5 : vector<1x273xf32> to vector<64x273xf32>
    %7 = arith.addf %2, %6 : vector<64x273xf32>
    %c0_8 = arith.constant 0 : index
    %c0_9 = arith.constant 0 : index
    %8 = vector.load %arg5[%c0_8, %c0_9] : memref<1x273xf32, #tpu.memory_space<vmem>>, vector<1x273xf32>
    %9 = vector.broadcast %8 : vector<1x273xf32> to vector<64x273xf32>
    %10 = arith.addf %4, %9 : vector<64x273xf32>
    %11 = arith.mulf %7, %10 : vector<64x273xf32>
    %c0_10 = arith.constant 0 : index
    %c0_11 = arith.constant 0 : index
    %12 = vector.load %arg6[%c0_10, %c0_11] : memref<64x273xf32, #tpu.memory_space<vmem>>, vector<64x273xf32>
    tpu.vector_store %arg6[%c0_10, %c0_11], %11 {strides = array<i32>} : memref<64x273xf32, #tpu.memory_space<vmem>>, vector<64x273xf32>,
    return
  }
  func.func @transform_0(%arg0: i32) -> (i32, i32) {
    %c0_i32 = arith.constant 0 : i32
    %c0_i32_0 = arith.constant 0 : i32
    return %arg0, %c0_i32 : i32, i32
  }
  func.func @transform_1(%arg0: i32) -> (i32, i32) {
    %c0_i32 = arith.constant 0 : i32
    %c0_i32_0 = arith.constant 0 : i32
    %c0_i32_1 = arith.constant 0 : i32
    return %c0_i32, %c0_i32_0 : i32, i32
  }
  func.func @transform_2(%arg0: i32) -> (i32, i32) {
    %c0_i32 = arith.constant 0 : i32
    %c0_i32_0 = arith.constant 0 : i32
    %c0_i32_1 = arith.constant 0 : i32
    return %c0_i32, %c0_i32_0 : i32, i32
  }
  func.func @transform_3(%arg0: i32) -> (i32, i32) {
    %c0_i32 = arith.constant 0 : i32
    %c0_i32_0 = arith.constant 0 : i32
    %c0_i32_1 = arith.constant 0 : i32
    return %c0_i32, %c0_i32_0 : i32, i32
  }
  func.func @transform_4(%arg0: i32) -> (i32, i32) {
    %c0_i32 = arith.constant 0 : i32
    %c0_i32_0 = arith.constant 0 : i32
    %c0_i32_1 = arith.constant 0 : i32
    return %c0_i32, %c0_i32_0 : i32, i32
  }
  func.func @transform_5(%arg0: i32) -> (i32, i32) {
    %c0_i32 = arith.constant 0 : i32
    %c0_i32_0 = arith.constant 0 : i32
    return %arg0, %c0_i32 : i32, i32
  }
}

</mosaic_0001>

<llo_original>
// kernel: tpu_custom_call.1
$region0: #{tpu_custom_call.1}
  #allocation0 [shape = 'u32[]', space=smem, size = 0x4, offset = 0x4, fixed_abs, tag = 'smem constant byte address 0x4 - core index']
  #allocation1 [shape = 'u32[144,128]{1,0:T(1,128)}', space=vmem, size = 0x12000, scoped, tag = 'internal scratch']
  %s0 = inlined_call_operand.vmem [shape: f32[64,16], index: 0, kind: input, shape index: {}]
  %s1 = inlined_call_operand.vmem [shape: f32[16,273], index: 1, kind: input, shape index: {}]
  %s2 = inlined_call_operand.hbm [shape: f32[16,273], index: 2, kind: input, shape index: {}]
  %s3 = inlined_call_operand.vmem [shape: f32[1,273], index: 3, kind: input, shape index: {}]
  %s4 = inlined_call_operand.vmem [shape: f32[1,273], index: 4, kind: input, shape index: {}]
  %s5 = inlined_call_operand.hbm [shape: f32[64,273], index: 5, kind: output, shape index: {}]
  %s6 = sld [smem:[#allocation0]]
  $region34: #{tpu_custom_call.1} parent=0
    _
  %s8 = ssub.s32 1, %s6
  %s9 = scalar_select 0, %s8, %s6
  $region1: #{tpu_custom_call.1} parent=0
    #allocation2 [shape = 'u8[24576]{0}', space=vmem, size = 0x6000, scoped, tag = 'input window, operand 2, single buffered']
    #allocation3 [shape = 's32[1]{0}', space=sflag, size = 0x4, scoped, tag = 'scoped memory for tpu_custom_call.1']
    #allocation4 [shape = 's32[1]{0}', space=sflag, size = 0x4, scoped, tag = 'scoped memory for tpu_custom_call.1']
    #allocation5 [shape = 'u8[98304]{0}', space=vmem, size = 0x18000, scoped, tag = 'output window, operand 0, single buffered']
    %10 = vsyncpa [#allocation3], 0
    %11 = vsyncpa [#allocation4], 0
    // Predicated region
    $region2: #{tpu_custom_call.1} parent=1 // pred_check
      _
    $region3: #{tpu_custom_call.1} parent=1 // pred_check_branch
      %13 = sbr.rel (0) target = $region5
    $region4: #{tpu_custom_call.1} parent=1 // pred_region
      _
    $region5: #{tpu_custom_call.1} parent=1 // pred_fallthru
      _
    // Predicated region
    $region6: #{tpu_custom_call.1} parent=1 // pred_check
      _
    $region7: #{tpu_custom_call.1} parent=1 // pred_check_branch
      %15 = sbr.rel (0) target = $region9
    $region8: #{tpu_custom_call.1} parent=1 // pred_region
      _
    $region9: #{tpu_custom_call.1} parent=1 // pred_fallthru
      _
    // Predicated region
    $region10: #{tpu_custom_call.1} parent=1 // pred_check
      _
    $region11: #{tpu_custom_call.1} parent=1 // pred_check_branch
      %17 = sbr.rel (0) target = $region13
    $region12: #{tpu_custom_call.1} parent=1 // pred_region
      %s19 = ssub.s32 768, 768
      %20 = vsyncadd [#allocation3], %s19
      %s21 = sshll.u32 [#allocation2], 4
      %s22 = int_to_ptr.vmem [resolvable:$true] %s21
      %27 = dma.hbm_to_vmem [thread:$0]  %s2, 768, %s22, [#allocation3], 384, 384, 24
    $region13: #{tpu_custom_call.1} parent=1 // pred_fallthru
      _
    // Predicated region
    $region14: #{tpu_custom_call.1} parent=1 // pred_check
      _
    $region15: #{tpu_custom_call.1} parent=1 // pred_check_branch
      %29 = sbr.rel (0) target = $region17
    $region16: #{tpu_custom_call.1} parent=1 // pred_region
      _
    $region17: #{tpu_custom_call.1} parent=1 // pred_fallthru
      _
    // Predicated region
    $region18: #{tpu_custom_call.1} parent=1 // pred_check
      _
    $region19: #{tpu_custom_call.1} parent=1 // pred_check_branch
      %31 = sbr.rel (0) target = $region21
    $region20: #{tpu_custom_call.1} parent=1 // pred_region
      _
    $region21: #{tpu_custom_call.1} parent=1 // pred_fallthru
      _
    // Predicated region
    $region22: #{tpu_custom_call.1} parent=1 // pred_check
      _
    $region23: #{tpu_custom_call.1} parent=1 // pred_check_branch
      %33 = sbr.rel (0) target = $region25
    $region24: #{tpu_custom_call.1} parent=1 // pred_region
      %34 = dma.done [#allocation3], 768
    $region25: #{tpu_custom_call.1} parent=1 // pred_fallthru
      _
    %v35 = vld [vmem:[%s0] sm:$0xff]
    %v36 = vld [vmem:[%s0 + $0x8] sm:$0xff]
    %v37 = vld [vmem:[%s0 + $0x10] sm:$0xff]
    %v38 = vld [vmem:[%s0 + $0x18] sm:$0xff]
    %v39 = vld [vmem:[%s0 + $0x20] sm:$0xff]
    %v40 = vld [vmem:[%s0 + $0x28] sm:$0xff]
    %v41 = vld [vmem:[%s0 + $0x30] sm:$0xff]
    %v42 = vld [vmem:[%s0 + $0x38] sm:$0xff]
    %v43 = vld [vmem:[%s1] sm:$0xff]
    %v44 = vld [vmem:[%s1 + $0x8] sm:$0xff]
    %v45 = vld [vmem:[%s1 + $0x10] sm:$0xff]
    %v46 = vld [vmem:[%s1 + $0x18] sm:$0xff]
    %v47 = vld [vmem:[%s1 + $0x20] sm:$0xff]
    %v48 = vld [vmem:[%s1 + $0x28] sm:$0xff]
    %v49 = vld [vmem:[#allocation2] sm:$0xff]
    %v50 = vld [vmem:[#allocation2 + $0x8] sm:$0xff]
    %v51 = vld [vmem:[#allocation2 + $0x10] sm:$0xff]
    %v52 = vld [vmem:[#allocation2 + $0x18] sm:$0xff]
    %v53 = vld [vmem:[#allocation2 + $0x20] sm:$0xff]
    %v54 = vld [vmem:[#allocation2 + $0x28] sm:$0xff]
    %v55 = vld [vmem:[%s3] sm:$0x7]
    %v57 = vlaneseq
    %v58 = vshrl.u32 %v57, 7
    %v59 = vsub.s32 0, %v58
    %v60 = vrot.slane %v55, %v59
    %v61 = vlaneseq
    %v62 = vshrl.u32 %v61, 7
    %v63 = vsub.s32 1, %v62
    %v64 = vrot.slane %v55, %v63
    %v65 = vlaneseq
    %v66 = vshrl.u32 %v65, 7
    %v67 = vsub.s32 2, %v66
    %v68 = vrot.slane %v55, %v67
    %vm72 = vcmask 130048
    %v74 = vsel %vm72, %v35, 0
    %v77 = vsel %vm72, %v36, 0
    %v80 = vsel %vm72, %v37, 0
    %v83 = vsel %vm72, %v38, 0
    %v86 = vsel %vm72, %v39, 0
    %v89 = vsel %vm72, %v40, 0
    %v92 = vsel %vm72, %v41, 0
    %v95 = vsel %vm72, %v42, 0
    %v97 = vand.u32 %v44, 4294901760
    %98 = vmatprep.subr.mxu0 %v97
    %v99 = vand.u32 %v43, 4294901760
    %100 = vmatpush1.msra.mxu0 %v99
    %v101 = vand.u32 %v47, 4294901760
    %102 = vmatprep.subr.mxu0 %v101
    %v103 = vand.u32 %v46, 4294901760
    %104 = vmatpush1.msra.mxu0 %v103
    %105 = vmatprep.subr.mxu0 0.0
    %106 = vmatpush1.msra.mxu0 0.0
    %107 = vmatprep.subr.mxu0 0.0
    %108 = vmatpush1.msra.mxu0 0.0
    %109 = vmatprep.subr.mxu0 0.0
    %110 = vmatpush1.msra.mxu0 0.0
    %111 = vmatprep.subr.mxu0 0.0
    %112 = vmatpush1.msra.mxu0 0.0
    %113 = vmatprep.subr.mxu0 0.0
    %114 = vmatpush1.msra.mxu0 0.0
    %115 = vmatprep.subr.mxu0 0.0
    %116 = vmatpush1.msra.mxu0 0.0
    %117 = vmatprep.subr.mxu0 0.0
    %118 = vmatpush1.msra.mxu0 0.0
    %119 = vmatprep.subr.mxu0 0.0
    %120 = vmatpush1.msra.mxu0 0.0
    %121 = vmatprep.subr.mxu0 0.0
    %122 = vmatpush1.msra.mxu0 0.0
    %123 = vmatprep.subr.mxu0 0.0
    %124 = vmatpush1.msra.mxu0 0.0
    %125 = vmatprep.subr.mxu0 0.0
    %126 = vmatpush1.msra.mxu0 0.0
    %127 = vmatprep.subr.mxu0 0.0
    %128 = vmatpush1.msra.mxu0 0.0
    %129 = vmatprep.subr.mxu0 0.0
    %130 = vmatpush1.msra.mxu0 0.0
    %131 = vmatprep.subr.mxu0 0.0
    %132 = vmatpush1.msra.mxu0 0.0
    %133 = vmatprep.subr.mxu0 0.0
    %134 = vmatpush1.msra.mxu0 0.0
    %135 = vmatprep.subr.mxu0 0.0
    %136 = vmatpush1.msra.mxu0 0.0
    %137 = vmatprep.subr.mxu0 0.0
    %138 = vmatpush1.msra.mxu0 0.0
    %139 = vmatprep.subr.mxu0 0.0
    %140 = vmatpush1.msra.mxu0 0.0
    %141 = vmatprep.subr.mxu0 0.0
    %142 = vmatpush1.msra.mxu0 0.0
    %143 = vmatprep.subr.mxu0 0.0
    %144 = vmatpush1.msra.mxu0 0.0
    %145 = vmatprep.subr.mxu0 0.0
    %146 = vmatpush1.msra.mxu0 0.0
    %147 = vmatprep.subr.mxu0 0.0
    %148 = vmatpush1.msra.mxu0 0.0
    %149 = vmatprep.subr.mxu0 0.0
    %150 = vmatpush1.msra.mxu0 0.0
    %151 = vmatprep.subr.mxu0 0.0
    %152 = vmatpush1.msra.mxu0 0.0
    %153 = vmatprep.subr.mxu0 0.0
    %154 = vmatpush1.msra.mxu0 0.0
    %155 = vmatprep.subr.mxu0 0.0
    %156 = vmatpush1.msra.mxu0 0.0
    %157 = vmatprep.subr.mxu0 0.0
    %158 = vmatpush1.msra.mxu0 0.0
    %159 = vmatprep.subr.mxu0 0.0
    %160 = vmatpush1.msra.mxu0 0.0
    %161 = vmatprep.subr.mxu0 0.0
    %162 = vmatpush1.msra.mxu0 0.0
    %163 = vmatprep.subr.mxu0 0.0
    %164 = vmatpush1.msra.mxu0 0.0
    %165 = vmatprep.mubr.f32.mxu0 0.0
    %v166 = vand.u32 %v74, 4294901760
    %v167 = vsub.f32 %v74, %v166
    %v168 = vand.u32 %v167, 4294901760
    %v169 = vsub.f32 %v167, %v168
    %v170 = vand.u32 %v169, 4294901760
    %171 = vmatmul.mubr.f32.gmra.mrb[0].mxu0 %v170
    %v172 = vpop.f32.mrb[0].mxu0
    %v173 = vadd.f32 %v60, %v172
    %v174 = vpop.f32.mrb[0].mxu0
    %v175 = vadd.f32 %v64, %v174
    %176 = vmatprep.mubr.f32.mxu0 0.0
    %v177 = vand.u32 %v77, 4294901760
    %v178 = vsub.f32 %v77, %v177
    %v179 = vand.u32 %v178, 4294901760
    %v180 = vsub.f32 %v178, %v179
    %v181 = vand.u32 %v180, 4294901760
    %182 = vmatmul.mubr.f32.gmra.mrb[0].mxu0 %v181
    %v183 = vpop.f32.mrb[0].mxu0
    %v184 = vadd.f32 %v60, %v183
    %v185 = vpop.f32.mrb[0].mxu0
    %v186 = vadd.f32 %v64, %v185
    %187 = vmatprep.mubr.f32.mxu0 0.0
    %v188 = vand.u32 %v80, 4294901760
    %v189 = vsub.f32 %v80, %v188
    %v190 = vand.u32 %v189, 4294901760
    %v191 = vsub.f32 %v189, %v190
    %v192 = vand.u32 %v191, 4294901760
    %193 = vmatmul.mubr.f32.gmra.mrb[0].mxu0 %v192
    %v194 = vpop.f32.mrb[0].mxu0
    %v195 = vadd.f32 %v60, %v194
    %v196 = vpop.f32.mrb[0].mxu0
    %v197 = vadd.f32 %v64, %v196
    %198 = vmatprep.mubr.f32.mxu0 0.0
    %v199 = vand.u32 %v83, 4294901760
    %v200 = vsub.f32 %v83, %v199
    %v201 = vand.u32 %v200, 4294901760
    %v202 = vsub.f32 %v200, %v201
    %v203 = vand.u32 %v202, 4294901760
    %204 = vmatmul.mubr.f32.gmra.mrb[0].mxu0 %v203
    %v205 = vpop.f32.mrb[0].mxu0
    %v206 = vadd.f32 %v60, %v205
    %v207 = vpop.f32.mrb[0].mxu0
    %v208 = vadd.f32 %v64, %v207
    %209 = vmatprep.mubr.f32.mxu0 0.0
    %v210 = vand.u32 %v86, 4294901760
    %v211 = vsub.f32 %v86, %v210
    %v212 = vand.u32 %v211, 4294901760
    %v213 = vsub.f32 %v211, %v212
    %v214 = vand.u32 %v213, 4294901760
    %215 = vmatmul.mubr.f32.gmra.mrb[0].mxu0 %v214
    %v216 = vpop.f32.mrb[0].mxu0
    %v217 = vadd.f32 %v60, %v216
    %v218 = vpop.f32.mrb[0].mxu0
    %v219 = vadd.f32 %v64, %v218
    %220 = vmatprep.mubr.f32.mxu0 0.0
    %v221 = vand.u32 %v89, 4294901760
    %v222 = vsub.f32 %v89, %v221
    %v223 = vand.u32 %v222, 4294901760
    %v224 = vsub.f32 %v222, %v223
    %v225 = vand.u32 %v224, 4294901760
    %226 = vmatmul.mubr.f32.gmra.mrb[0].mxu0 %v225
    %v227 = vpop.f32.mrb[0].mxu0
    %v228 = vadd.f32 %v60, %v227
    %v229 = vpop.f32.mrb[0].mxu0
    %v230 = vadd.f32 %v64, %v229
    %231 = vmatprep.mubr.f32.mxu0 0.0
    %v232 = vand.u32 %v92, 4294901760
    %v233 = vsub.f32 %v92, %v232
    %v234 = vand.u32 %v233, 4294901760
    %v235 = vsub.f32 %v233, %v234
    %v236 = vand.u32 %v235, 4294901760
    %237 = vmatmul.mubr.f32.gmra.mrb[0].mxu0 %v236
    %v238 = vpop.f32.mrb[0].mxu0
    %v239 = vadd.f32 %v60, %v238
    %v240 = vpop.f32.mrb[0].mxu0
    %v241 = vadd.f32 %v64, %v240
    %242 = vmatprep.mubr.f32.mxu0 0.0
    %v243 = vand.u32 %v95, 4294901760
    %v244 = vsub.f32 %v95, %v243
    %v245 = vand.u32 %v244, 4294901760
    %v246 = vsub.f32 %v244, %v245
    %v247 = vand.u32 %v246, 4294901760
    %248 = vmatmul.mubr.f32.gmra.mrb[0].mxu0 %v247
    %v249 = vpop.f32.mrb[0].mxu0
    %v250 = vadd.f32 %v60, %v249
    %v251 = vpop.f32.mrb[0].mxu0
    %v252 = vadd.f32 %v64, %v251
    %253 = vdwg.mxu0
    %v254 = vand.u32 %v44, 4294901760
    %v255 = vsub.f32 %v44, %v254
    %v256 = vand.u32 %v255, 4294901760
    %v257 = vsub.f32 %v255, %v256
    %v258 = vand.u32 %v257, 4294901760
    %259 = vmatprep.subr.mxu0 %v258
    %v260 = vand.u32 %v43, 4294901760
    %v261 = vsub.f32 %v43, %v260
    %v262 = vand.u32 %v261, 4294901760
    %v263 = vsub.f32 %v261, %v262
    %v264 = vand.u32 %v263, 4294901760
    %265 = vmatpush1.msra.mxu0 %v264
    %v266 = vand.u32 %v47, 4294901760
    %v267 = vsub.f32 %v47, %v266
    %v268 = vand.u32 %v267, 4294901760
    %v269 = vsub.f32 %v267, %v268
    %v270 = vand.u32 %v269, 4294901760
    %271 = vmatprep.subr.mxu0 %v270
    %v272 = vand.u32 %v46, 4294901760
    %v273 = vsub.f32 %v46, %v272
    %v274 = vand.u32 %v273, 4294901760
    %v275 = vsub.f32 %v273, %v274
    %v276 = vand.u32 %v275, 4294901760
    %277 = vmatpush1.msra.mxu0 %v276
    %278 = vmatprep.subr.mxu0 0.0
    %279 = vmatpush1.msra.mxu0 0.0
    %280 = vmatprep.subr.mxu0 0.0
    %281 = vmatpush1.msra.mxu0 0.0
    %282 = vmatprep.subr.mxu0 0.0
    %283 = vmatpush1.msra.mxu0 0.0
    %284 = vmatprep.subr.mxu0 0.0
    %285 = vmatpush1.msra.mxu0 0.0
    %286 = vmatprep.subr.mxu0 0.0
    %287 = vmatpush1.msra.mxu0 0.0
    %288 = vmatprep.subr.mxu0 0.0
    %289 = vmatpush1.msra.mxu0 0.0
    %290 = vmatprep.subr.mxu0 0.0
    %291 = vmatpush1.msra.mxu0 0.0
    %292 = vmatprep.subr.mxu0 0.0
    %293 = vmatpush1.msra.mxu0 0.0
    %294 = vmatprep.subr.mxu0 0.0
    %295 = vmatpush1.msra.mxu0 0.0
    %296 = vmatprep.subr.mxu0 0.0
    %297 = vmatpush1.msra.mxu0 0.0
    %298 = vmatprep.subr.mxu0 0.0
    %299 = vmatpush1.msra.mxu0 0.0
    %300 = vmatprep.subr.mxu0 0.0
    %301 = vmatpush1.msra.mxu0 0.0
    %302 = vmatprep.subr.mxu0 0.0
    %303 = vmatpush1.msra.mxu0 0.0
    %304 = vmatprep.subr.mxu0 0.0
    %305 = vmatpush1.msra.mxu0 0.0
    %306 = vmatprep.subr.mxu0 0.0
    %307 = vmatpush1.msra.mxu0 0.0
    %308 = vmatprep.subr.mxu0 0.0
    %309 = vmatpush1.msra.mxu0 0.0
    %310 = vmatprep.subr.mxu0 0.0
    %311 = vmatpush1.msra.mxu0 0.0
    %312 = vmatprep.subr.mxu0 0.0
    %313 = vmatpush1.msra.mxu0 0.0
    %314 = vmatprep.subr.mxu0 0.0
    %315 = vmatpush1.msra.mxu0 0.0
    %316 = vmatprep.subr.mxu0 0.0
    %317 = vmatpush1.msra.mxu0 0.0
    %318 = vmatprep.subr.mxu0 0.0
    %319 = vmatpush1.msra.mxu0 0.0
    %320 = vmatprep.subr.mxu0 0.0
    %321 = vmatpush1.msra.mxu0 0.0
    %322 = vmatprep.subr.mxu0 0.0
    %323 = vmatpush1.msra.mxu0 0.0
    %324 = vmatprep.subr.mxu0 0.0
    %325 = vmatpush1.msra.mxu0 0.0
    %326 = vmatprep.subr.mxu0 0.0
    %327 = vmatpush1.msra.mxu0 0.0
    %328 = vmatprep.subr.mxu0 0.0
    %329 = vmatpush1.msra.mxu0 0.0
    %330 = vmatprep.subr.mxu0 0.0
    %331 = vmatpush1.msra.mxu0 0.0
    %332 = vmatprep.subr.mxu0 0.0
    %333 = vmatpush1.msra.mxu0 0.0
    %334 = vmatprep.subr.mxu0 0.0
    %335 = vmatpush1.msra.mxu0 0.0
    %336 = vmatprep.subr.mxu0 0.0
    %337 = vmatpush1.msra.mxu0 0.0
    %338 = vmatprep.mubr.f32.mxu0 0.0
    %v339 = vand.u32 %v74, 4294901760
    %340 = vmatmul.mubr.f32.gmra.mrb[0].mxu0 %v339
    %v341 = vpop.f32.mrb[0].mxu0
    %v342 = vadd.f32 %v173, %v341
    %v343 = vpop.f32.mrb[0].mxu0
    %v344 = vadd.f32 %v175, %v343
    %345 = vmatprep.mubr.f32.mxu0 0.0
    %v346 = vand.u32 %v77, 4294901760
    %347 = vmatmul.mubr.f32.gmra.mrb[0].mxu0 %v346
    %v348 = vpop.f32.mrb[0].mxu0
    %v349 = vadd.f32 %v184, %v348
    %v350 = vpop.f32.mrb[0].mxu0
    %v351 = vadd.f32 %v186, %v350
    %352 = vmatprep.mubr.f32.mxu0 0.0
    %v353 = vand.u32 %v80, 4294901760
    %354 = vmatmul.mubr.f32.gmra.mrb[0].mxu0 %v353
    %v355 = vpop.f32.mrb[0].mxu0
    %v356 = vadd.f32 %v195, %v355
    %v357 = vpop.f32.mrb[0].mxu0
    %v358 = vadd.f32 %v197, %v357
    %359 = vmatprep.mubr.f32.mxu0 0.0
    %v360 = vand.u32 %v83, 4294901760
    %361 = vmatmul.mubr.f32.gmra.mrb[0].mxu0 %v360
    %v362 = vpop.f32.mrb[0].mxu0
    %v363 = vadd.f32 %v206, %v362
    %v364 = vpop.f32.mrb[0].mxu0
    %v365 = vadd.f32 %v208, %v364
    %366 = vmatprep.mubr.f32.mxu0 0.0
    %v367 = vand.u32 %v86, 4294901760
    %368 = vmatmul.mubr.f32.gmra.mrb[0].mxu0 %v367
    %v369 = vpop.f32.mrb[0].mxu0
    %v370 = vadd.f32 %v217, %v369
    %v371 = vpop.f32.mrb[0].mxu0
    %v372 = vadd.f32 %v219, %v371
    %373 = vmatprep.mubr.f32.mxu0 0.0
    %v374 = vand.u32 %v89, 4294901760
    %375 = vmatmul.mubr.f32.gmra.mrb[0].mxu0 %v374
    %v376 = vpop.f32.mrb[0].mxu0
    %v377 = vadd.f32 %v228, %v376
    %v378 = vpop.f32.mrb[0].mxu0
    %v379 = vadd.f32 %v230, %v378
    %380 = vmatprep.mubr.f32.mxu0 0.0
    %v381 = vand.u32 %v92, 4294901760
    %382 = vmatmul.mubr.f32.gmra.mrb[0].mxu0 %v381
    %v383 = vpop.f32.mrb[0].mxu0
    %v384 = vadd.f32 %v239, %v383
    %v385 = vpop.f32.mrb[0].mxu0
    %v386 = vadd.f32 %v241, %v385
    %387 = vmatprep.mubr.f32.mxu0 0.0
    %v388 = vand.u32 %v95, 4294901760
    %389 = vmatmul.mubr.f32.gmra.mrb[0].mxu0 %v388
    %v390 = vpop.f32.mrb[0].mxu0
    %v391 = vadd.f32 %v250, %v390
    %v392 = vpop.f32.mrb[0].mxu0
    %v393 = vadd.f32 %v252, %v392
    %394 = vdwg.mxu0
    %v395 = vand.u32 %v44, 4294901760
    %v396 = vsub.f32 %v44, %v395
    %397 = vmatprep.subr.mxu0 %v396
    %v398 = vand.u32 %v43, 4294901760
    %v399 = vsub.f32 %v43, %v398
    %400 = vmatpush1.msra.mxu0 %v399
    %v401 = vand.u32 %v47, 4294901760
    %v402 = vsub.f32 %v47, %v401
    %403 = vmatprep.subr.mxu0 %v402
    %v404 = vand.u32 %v46, 4294901760
    %v405 = vsub.f32 %v46, %v404
    %406 = vmatpush1.msra.mxu0 %v405
    %407 = vmatprep.subr.mxu0 0.0
    %408 = vmatpush1.msra.mxu0 0.0
    %409 = vmatprep.subr.mxu0 0.0
    %410 = vmatpush1.msra.mxu0 0.0
    %411 = vmatprep.subr.mxu0 0.0
    %412 = vmatpush1.msra.mxu0 0.0
    %413 = vmatprep.subr.mxu0 0.0
    %414 = vmatpush1.msra.mxu0 0.0
    %415 = vmatprep.subr.mxu0 0.0
    %416 = vmatpush1.msra.mxu0 0.0
    %417 = vmatprep.subr.mxu0 0.0
    %418 = vmatpush1.msra.mxu0 0.0
    %419 = vmatprep.subr.mxu0 0.0
    %420 = vmatpush1.msra.mxu0 0.0
    %421 = vmatprep.subr.mxu0 0.0
    %422 = vmatpush1.msra.mxu0 0.0
    %423 = vmatprep.subr.mxu0 0.0
    %424 = vmatpush1.msra.mxu0 0.0
    %425 = vmatprep.subr.mxu0 0.0
    %426 = vmatpush1.msra.mxu0 0.0
    %427 = vmatprep.subr.mxu0 0.0
    %428 = vmatpush1.msra.mxu0 0.0
    %429 = vmatprep.subr.mxu0 0.0
    %430 = vmatpush1.msra.mxu0 0.0
    %431 = vmatprep.subr.mxu0 0.0
    %432 = vmatpush1.msra.mxu0 0.0
    %433 = vmatprep.subr.mxu0 0.0
    %434 = vmatpush1.msra.mxu0 0.0
    %435 = vmatprep.subr.mxu0 0.0
    %436 = vmatpush1.msra.mxu0 0.0
    %437 = vmatprep.subr.mxu0 0.0
    %438 = vmatpush1.msra.mxu0 0.0
    %439 = vmatprep.subr.mxu0 0.0
    %440 = vmatpush1.msra.mxu0 0.0
    %441 = vmatprep.subr.mxu0 0.0
    %442 = vmatpush1.msra.mxu0 0.0
    %443 = vmatprep.subr.mxu0 0.0
    %444 = vmatpush1.msra.mxu0 0.0
    %445 = vmatprep.subr.mxu0 0.0
    %446 = vmatpush1.msra.mxu0 0.0
    %447 = vmatprep.subr.mxu0 0.0
    %448 = vmatpush1.msra.mxu0 0.0
    %449 = vmatprep.subr.mxu0 0.0
    %450 = vmatpush1.msra.mxu0 0.0
    %451 = vmatprep.subr.mxu0 0.0
    %452 = vmatpush1.msra.mxu0 0.0
    %453 = vmatprep.subr.mxu0 0.0
    %454 = vmatpush1.msra.mxu0 0.0
    %455 = vmatprep.subr.mxu0 0.0
    %456 = vmatpush1.msra.mxu0 0.0
    %457 = vmatprep.subr.mxu0 0.0
    %458 = vmatpush1.msra.mxu0 0.0
    %459 = vmatprep.subr.mxu0 0.0
    %460 = vmatpush1.msra.mxu0 0.0
    %461 = vmatprep.subr.mxu0 0.0
    %462 = vmatpush1.msra.mxu0 0.0
    %463 = vmatprep.subr.mxu0 0.0
    %464 = vmatpush1.msra.mxu0 0.0
    %465 = vmatprep.subr.mxu0 0.0
    %466 = vmatpush1.msra.mxu0 0.0
    %467 = vmatprep.mubr.f32.mxu0 0.0
    %v468 = vand.u32 %v74, 4294901760
    %v469 = vsub.f32 %v74, %v468
    %470 = vmatmul.mubr.f32.gmra.mrb[0].mxu0 %v469
    %v471 = vpop.f32.mrb[0].mxu0
    %v472 = vadd.f32 %v342, %v471
    %v473 = vpop.f32.mrb[0].mxu0
    %v474 = vadd.f32 %v344, %v473
    %475 = vmatprep.mubr.f32.mxu0 0.0
    %v476 = vand.u32 %v77, 4294901760
    %v477 = vsub.f32 %v77, %v476
    %478 = vmatmul.mubr.f32.gmra.mrb[0].mxu0 %v477
    %v479 = vpop.f32.mrb[0].mxu0
    %v480 = vadd.f32 %v349, %v479
    %v481 = vpop.f32.mrb[0].mxu0
    %v482 = vadd.f32 %v351, %v481
    %483 = vmatprep.mubr.f32.mxu0 0.0
    %v484 = vand.u32 %v80, 4294901760
    %v485 = vsub.f32 %v80, %v484
    %486 = vmatmul.mubr.f32.gmra.mrb[0].mxu0 %v485
    %v487 = vpop.f32.mrb[0].mxu0
    %v488 = vadd.f32 %v356, %v487
    %v489 = vpop.f32.mrb[0].mxu0
    %v490 = vadd.f32 %v358, %v489
    %491 = vmatprep.mubr.f32.mxu0 0.0
    %v492 = vand.u32 %v83, 4294901760
    %v493 = vsub.f32 %v83, %v492
    %494 = vmatmul.mubr.f32.gmra.mrb[0].mxu0 %v493
    %v495 = vpop.f32.mrb[0].mxu0
    %v496 = vadd.f32 %v363, %v495
    %v497 = vpop.f32.mrb[0].mxu0
    %v498 = vadd.f32 %v365, %v497
    %499 = vmatprep.mubr.f32.mxu0 0.0
    %v500 = vand.u32 %v86, 4294901760
    %v501 = vsub.f32 %v86, %v500
    %502 = vmatmul.mubr.f32.gmra.mrb[0].mxu0 %v501
    %v503 = vpop.f32.mrb[0].mxu0
    %v504 = vadd.f32 %v370, %v503
    %v505 = vpop.f32.mrb[0].mxu0
    %v506 = vadd.f32 %v372, %v505
    %507 = vmatprep.mubr.f32.mxu0 0.0
    %v508 = vand.u32 %v89, 4294901760
    %v509 = vsub.f32 %v89, %v508
    %510 = vmatmul.mubr.f32.gmra.mrb[0].mxu0 %v509
    %v511 = vpop.f32.mrb[0].mxu0
    %v512 = vadd.f32 %v377, %v511
    %v513 = vpop.f32.mrb[0].mxu0
    %v514 = vadd.f32 %v379, %v513
    %515 = vmatprep.mubr.f32.mxu0 0.0
    %v516 = vand.u32 %v92, 4294901760
    %v517 = vsub.f32 %v92, %v516
    %518 = vmatmul.mubr.f32.gmra.mrb[0].mxu0 %v517
    %v519 = vpop.f32.mrb[0].mxu0
    %v520 = vadd.f32 %v384, %v519
    %v521 = vpop.f32.mrb[0].mxu0
    %v522 = vadd.f32 %v386, %v521
    %523 = vmatprep.mubr.f32.mxu0 0.0
    %v524 = vand.u32 %v95, 4294901760
    %v525 = vsub.f32 %v95, %v524
    %526 = vmatmul.mubr.f32.gmra.mrb[0].mxu0 %v525
    %v527 = vpop.f32.mrb[0].mxu0
    %v528 = vadd.f32 %v391, %v527
    %v529 = vpop.f32.mrb[0].mxu0
    %v530 = vadd.f32 %v393, %v529
    %531 = vdwg.mxu0
    %v532 = vand.u32 %v44, 4294901760
    %533 = vmatprep.subr.mxu0 %v532
    %v534 = vand.u32 %v43, 4294901760
    %535 = vmatpush1.msra.mxu0 %v534
    %v536 = vand.u32 %v47, 4294901760
    %537 = vmatprep.subr.mxu0 %v536
    %v538 = vand.u32 %v46, 4294901760
    %539 = vmatpush1.msra.mxu0 %v538
    %540 = vmatprep.subr.mxu0 0.0
    %541 = vmatpush1.msra.mxu0 0.0
    %542 = vmatprep.subr.mxu0 0.0
    %543 = vmatpush1.msra.mxu0 0.0
    %544 = vmatprep.subr.mxu0 0.0
    %545 = vmatpush1.msra.mxu0 0.0
    %546 = vmatprep.subr.mxu0 0.0
    %547 = vmatpush1.msra.mxu0 0.0
    %548 = vmatprep.subr.mxu0 0.0
    %549 = vmatpush1.msra.mxu0 0.0
    %550 = vmatprep.subr.mxu0 0.0
    %551 = vmatpush1.msra.mxu0 0.0
    %552 = vmatprep.subr.mxu0 0.0
    %553 = vmatpush1.msra.mxu0 0.0
    %554 = vmatprep.subr.mxu0 0.0
    %555 = vmatpush1.msra.mxu0 0.0
    %556 = vmatprep.subr.mxu0 0.0
    %557 = vmatpush1.msra.mxu0 0.0
    %558 = vmatprep.subr.mxu0 0.0
    %559 = vmatpush1.msra.mxu0 0.0
    %560 = vmatprep.subr.mxu0 0.0
    %561 = vmatpush1.msra.mxu0 0.0
    %562 = vmatprep.subr.mxu0 0.0
    %563 = vmatpush1.msra.mxu0 0.0
    %564 = vmatprep.subr.mxu0 0.0
    %565 = vmatpush1.msra.mxu0 0.0
    %566 = vmatprep.subr.mxu0 0.0
    %567 = vmatpush1.msra.mxu0 0.0
    %568 = vmatprep.subr.mxu0 0.0
    %569 = vmatpush1.msra.mxu0 0.0
    %570 = vmatprep.subr.mxu0 0.0
    %571 = vmatpush1.msra.mxu0 0.0
    %572 = vmatprep.subr.mxu0 0.0
    %573 = vmatpush1.msra.mxu0 0.0
    %574 = vmatprep.subr.mxu0 0.0
    %575 = vmatpush1.msra.mxu0 0.0
    %576 = vmatprep.subr.mxu0 0.0
    %577 = vmatpush1.msra.mxu0 0.0
    %578 = vmatprep.subr.mxu0 0.0
    %579 = vmatpush1.msra.mxu0 0.0
    %580 = vmatprep.subr.mxu0 0.0
    %581 = vmatpush1.msra.mxu0 0.0
    %582 = vmatprep.subr.mxu0 0.0
    %583 = vmatpush1.msra.mxu0 0.0
    %584 = vmatprep.subr.mxu0 0.0
    %585 = vmatpush1.msra.mxu0 0.0
    %586 = vmatprep.subr.mxu0 0.0
    %587 = vmatpush1.msra.mxu0 0.0
    %588 = vmatprep.subr.mxu0 0.0
    %589 = vmatpush1.msra.mxu0 0.0
    %590 = vmatprep.subr.mxu0 0.0
    %591 = vmatpush1.msra.mxu0 0.0
    %592 = vmatprep.subr.mxu0 0.0
    %593 = vmatpush1.msra.mxu0 0.0
    %594 = vmatprep.subr.mxu0 0.0
    %595 = vmatpush1.msra.mxu0 0.0
    %596 = vmatprep.subr.mxu0 0.0
    %597 = vmatpush1.msra.mxu0 0.0
    %598 = vmatprep.subr.mxu0 0.0
    %599 = vmatpush1.msra.mxu0 0.0
    %600 = vmatprep.mubr.f32.mxu0 0.0
    %v601 = vand.u32 %v74, 4294901760
    %v602 = vsub.f32 %v74, %v601
    %v603 = vand.u32 %v602, 4294901760
    %604 = vmatmul.mubr.f32.gmra.mrb[0].mxu0 %v603
    %v605 = vpop.f32.mrb[0].mxu0
    %v606 = vadd.f32 %v472, %v605
    %v607 = vpop.f32.mrb[0].mxu0
    %v608 = vadd.f32 %v474, %v607
    %609 = vmatprep.mubr.f32.mxu0 0.0
    %v610 = vand.u32 %v77, 4294901760
    %v611 = vsub.f32 %v77, %v610
    %v612 = vand.u32 %v611, 4294901760
    %613 = vmatmul.mubr.f32.gmra.mrb[0].mxu0 %v612
    %v614 = vpop.f32.mrb[0].mxu0
    %v615 = vadd.f32 %v480, %v614
    %v616 = vpop.f32.mrb[0].mxu0
    %v617 = vadd.f32 %v482, %v616
    %618 = vmatprep.mubr.f32.mxu0 0.0
    %v619 = vand.u32 %v80, 4294901760
    %v620 = vsub.f32 %v80, %v619
    %v621 = vand.u32 %v620, 4294901760
    %622 = vmatmul.mubr.f32.gmra.mrb[0].mxu0 %v621
    %v623 = vpop.f32.mrb[0].mxu0
    %v624 = vadd.f32 %v488, %v623
    %v625 = vpop.f32.mrb[0].mxu0
    %v626 = vadd.f32 %v490, %v625
    %627 = vmatprep.mubr.f32.mxu0 0.0
    %v628 = vand.u32 %v83, 4294901760
    %v629 = vsub.f32 %v83, %v628
    %v630 = vand.u32 %v629, 4294901760
    %631 = vmatmul.mubr.f32.gmra.mrb[0].mxu0 %v630
    %v632 = vpop.f32.mrb[0].mxu0
    %v633 = vadd.f32 %v496, %v632
    %v634 = vpop.f32.mrb[0].mxu0
    %v635 = vadd.f32 %v498, %v634
    %636 = vmatprep.mubr.f32.mxu0 0.0
    %v637 = vand.u32 %v86, 4294901760
    %v638 = vsub.f32 %v86, %v637
    %v639 = vand.u32 %v638, 4294901760
    %640 = vmatmul.mubr.f32.gmra.mrb[0].mxu0 %v639
    %v641 = vpop.f32.mrb[0].mxu0
    %v642 = vadd.f32 %v504, %v641
    %v643 = vpop.f32.mrb[0].mxu0
    %v644 = vadd.f32 %v506, %v643
    %645 = vmatprep.mubr.f32.mxu0 0.0
    %v646 = vand.u32 %v89, 4294901760
    %v647 = vsub.f32 %v89, %v646
    %v648 = vand.u32 %v647, 4294901760
    %649 = vmatmul.mubr.f32.gmra.mrb[0].mxu0 %v648
    %v650 = vpop.f32.mrb[0].mxu0
    %v651 = vadd.f32 %v512, %v650
    %v652 = vpop.f32.mrb[0].mxu0
    %v653 = vadd.f32 %v514, %v652
    %654 = vmatprep.mubr.f32.mxu0 0.0
    %v655 = vand.u32 %v92, 4294901760
    %v656 = vsub.f32 %v92, %v655
    %v657 = vand.u32 %v656, 4294901760
    %658 = vmatmul.mubr.f32.gmra.mrb[0].mxu0 %v657
    %v659 = vpop.f32.mrb[0].mxu0
    %v660 = vadd.f32 %v520, %v659
    %v661 = vpop.f32.mrb[0].mxu0
    %v662 = vadd.f32 %v522, %v661
    %663 = vmatprep.mubr.f32.mxu0 0.0
    %v664 = vand.u32 %v95, 4294901760
    %v665 = vsub.f32 %v95, %v664
    %v666 = vand.u32 %v665, 4294901760
    %667 = vmatmul.mubr.f32.gmra.mrb[0].mxu0 %v666
    %v668 = vpop.f32.mrb[0].mxu0
    %v669 = vadd.f32 %v528, %v668
    %v670 = vpop.f32.mrb[0].mxu0
    %v671 = vadd.f32 %v530, %v670
    %672 = vdwg.mxu0
    %v673 = vand.u32 %v44, 4294901760
    %v674 = vsub.f32 %v44, %v673
    %v675 = vand.u32 %v674, 4294901760
    %676 = vmatprep.subr.mxu0 %v675
    %v677 = vand.u32 %v43, 4294901760
    %v678 = vsub.f32 %v43, %v677
    %v679 = vand.u32 %v678, 4294901760
    %680 = vmatpush1.msra.mxu0 %v679
    %v681 = vand.u32 %v47, 4294901760
    %v682 = vsub.f32 %v47, %v681
    %v683 = vand.u32 %v682, 4294901760
    %684 = vmatprep.subr.mxu0 %v683
    %v685 = vand.u32 %v46, 4294901760
    %v686 = vsub.f32 %v46, %v685
    %v687 = vand.u32 %v686, 4294901760
    %688 = vmatpush1.msra.mxu0 %v687
    %689 = vmatprep.subr.mxu0 0.0
    %690 = vmatpush1.msra.mxu0 0.0
    %691 = vmatprep.subr.mxu0 0.0
    %692 = vmatpush1.msra.mxu0 0.0
    %693 = vmatprep.subr.mxu0 0.0
    %694 = vmatpush1.msra.mxu0 0.0
    %695 = vmatprep.subr.mxu0 0.0
    %696 = vmatpush1.msra.mxu0 0.0
    %697 = vmatprep.subr.mxu0 0.0
    %698 = vmatpush1.msra.mxu0 0.0
    %699 = vmatprep.subr.mxu0 0.0
    %700 = vmatpush1.msra.mxu0 0.0
    %701 = vmatprep.subr.mxu0 0.0
    %702 = vmatpush1.msra.mxu0 0.0
    %703 = vmatprep.subr.mxu0 0.0
    %704 = vmatpush1.msra.mxu0 0.0
    %705 = vmatprep.subr.mxu0 0.0
    %706 = vmatpush1.msra.mxu0 0.0
    %707 = vmatprep.subr.mxu0 0.0
    %708 = vmatpush1.msra.mxu0 0.0
    %709 = vmatprep.subr.mxu0 0.0
    %710 = vmatpush1.msra.mxu0 0.0
    %711 = vmatprep.subr.mxu0 0.0
    %712 = vmatpush1.msra.mxu0 0.0
    %713 = vmatprep.subr.mxu0 0.0
    %714 = vmatpush1.msra.mxu0 0.0
    %715 = vmatprep.subr.mxu0 0.0
    %716 = vmatpush1.msra.mxu0 0.0
    %717 = vmatprep.subr.mxu0 0.0
    %718 = vmatpush1.msra.mxu0 0.0
    %719 = vmatprep.subr.mxu0 0.0
    %720 = vmatpush1.msra.mxu0 0.0
    %721 = vmatprep.subr.mxu0 0.0
    %722 = vmatpush1.msra.mxu0 0.0
    %723 = vmatprep.subr.mxu0 0.0
    %724 = vmatpush1.msra.mxu0 0.0
    %725 = vmatprep.subr.mxu0 0.0
    %726 = vmatpush1.msra.mxu0 0.0
    %727 = vmatprep.subr.mxu0 0.0
    %728 = vmatpush1.msra.mxu0 0.0
    %729 = vmatprep.subr.mxu0 0.0
    %730 = vmatpush1.msra.mxu0 0.0
    %731 = vmatprep.subr.mxu0 0.0
    %732 = vmatpush1.msra.mxu0 0.0
    %733 = vmatprep.subr.mxu0 0.0
    %734 = vmatpush1.msra.mxu0 0.0
    %735 = vmatprep.subr.mxu0 0.0
    %736 = vmatpush1.msra.mxu0 0.0
    %737 = vmatprep.subr.mxu0 0.0
    %738 = vmatpush1.msra.mxu0 0.0
    %739 = vmatprep.subr.mxu0 0.0
    %740 = vmatpush1.msra.mxu0 0.0
    %741 = vmatprep.subr.mxu0 0.0
    %742 = vmatpush1.msra.mxu0 0.0
    %743 = vmatprep.subr.mxu0 0.0
    %744 = vmatpush1.msra.mxu0 0.0
    %745 = vmatprep.subr.mxu0 0.0
    %746 = vmatpush1.msra.mxu0 0.0
    %747 = vmatprep.subr.mxu0 0.0
    %748 = vmatpush1.msra.mxu0 0.0
    %749 = vmatprep.mubr.f32.mxu0 0.0
    %v750 = vand.u32 %v74, 4294901760
    %751 = vmatmul.mubr.f32.gmra.mrb[0].mxu0 %v750
    %v752 = vpop.f32.mrb[0].mxu0
    %v753 = vadd.f32 %v606, %v752
    %v754 = vpop.f32.mrb[0].mxu0
    %v755 = vadd.f32 %v608, %v754
    %756 = vmatprep.mubr.f32.mxu0 0.0
    %v757 = vand.u32 %v77, 4294901760
    %758 = vmatmul.mubr.f32.gmra.mrb[0].mxu0 %v757
    %v759 = vpop.f32.mrb[0].mxu0
    %v760 = vadd.f32 %v615, %v759
    %v761 = vpop.f32.mrb[0].mxu0
    %v762 = vadd.f32 %v617, %v761
    %763 = vmatprep.mubr.f32.mxu0 0.0
    %v764 = vand.u32 %v80, 4294901760
    %765 = vmatmul.mubr.f32.gmra.mrb[0].mxu0 %v764
    %v766 = vpop.f32.mrb[0].mxu0
    %v767 = vadd.f32 %v624, %v766
    %v768 = vpop.f32.mrb[0].mxu0
    %v769 = vadd.f32 %v626, %v768
    %770 = vmatprep.mubr.f32.mxu0 0.0
    %v771 = vand.u32 %v83, 4294901760
    %772 = vmatmul.mubr.f32.gmra.mrb[0].mxu0 %v771
    %v773 = vpop.f32.mrb[0].mxu0
    %v774 = vadd.f32 %v633, %v773
    %v775 = vpop.f32.mrb[0].mxu0
    %v776 = vadd.f32 %v635, %v775
    %777 = vmatprep.mubr.f32.mxu0 0.0
    %v778 = vand.u32 %v86, 4294901760
    %779 = vmatmul.mubr.f32.gmra.mrb[0].mxu0 %v778
    %v780 = vpop.f32.mrb[0].mxu0
    %v781 = vadd.f32 %v642, %v780
    %v782 = vpop.f32.mrb[0].mxu0
    %v783 = vadd.f32 %v644, %v782
    %784 = vmatprep.mubr.f32.mxu0 0.0
    %v785 = vand.u32 %v89, 4294901760
    %786 = vmatmul.mubr.f32.gmra.mrb[0].mxu0 %v785
    %v787 = vpop.f32.mrb[0].mxu0
    %v788 = vadd.f32 %v651, %v787
    %v789 = vpop.f32.mrb[0].mxu0
    %v790 = vadd.f32 %v653, %v789
    %791 = vmatprep.mubr.f32.mxu0 0.0
    %v792 = vand.u32 %v92, 4294901760
    %793 = vmatmul.mubr.f32.gmra.mrb[0].mxu0 %v792
    %v794 = vpop.f32.mrb[0].mxu0
    %v795 = vadd.f32 %v660, %v794
    %v796 = vpop.f32.mrb[0].mxu0
    %v797 = vadd.f32 %v662, %v796
    %798 = vmatprep.mubr.f32.mxu0 0.0
    %v799 = vand.u32 %v95, 4294901760
    %800 = vmatmul.mubr.f32.gmra.mrb[0].mxu0 %v799
    %v801 = vpop.f32.mrb[0].mxu0
    %v802 = vadd.f32 %v669, %v801
    %v803 = vpop.f32.mrb[0].mxu0
    %v804 = vadd.f32 %v671, %v803
    %805 = vdwg.mxu0
    %v806 = vand.u32 %v44, 4294901760
    %807 = vmatprep.subr.mxu0 %v806
    %v808 = vand.u32 %v43, 4294901760
    %809 = vmatpush1.msra.mxu0 %v808
    %v810 = vand.u32 %v47, 4294901760
    %811 = vmatprep.subr.mxu0 %v810
    %v812 = vand.u32 %v46, 4294901760
    %813 = vmatpush1.msra.mxu0 %v812
    %814 = vmatprep.subr.mxu0 0.0
    %815 = vmatpush1.msra.mxu0 0.0
    %816 = vmatprep.subr.mxu0 0.0
    %817 = vmatpush1.msra.mxu0 0.0
    %818 = vmatprep.subr.mxu0 0.0
    %819 = vmatpush1.msra.mxu0 0.0
    %820 = vmatprep.subr.mxu0 0.0
    %821 = vmatpush1.msra.mxu0 0.0
    %822 = vmatprep.subr.mxu0 0.0
    %823 = vmatpush1.msra.mxu0 0.0
    %824 = vmatprep.subr.mxu0 0.0
    %825 = vmatpush1.msra.mxu0 0.0
    %826 = vmatprep.subr.mxu0 0.0
    %827 = vmatpush1.msra.mxu0 0.0
    %828 = vmatprep.subr.mxu0 0.0
    %829 = vmatpush1.msra.mxu0 0.0
    %830 = vmatprep.subr.mxu0 0.0
    %831 = vmatpush1.msra.mxu0 0.0
    %832 = vmatprep.subr.mxu0 0.0
    %833 = vmatpush1.msra.mxu0 0.0
    %834 = vmatprep.subr.mxu0 0.0
    %835 = vmatpush1.msra.mxu0 0.0
    %836 = vmatprep.subr.mxu0 0.0
    %837 = vmatpush1.msra.mxu0 0.0
    %838 = vmatprep.subr.mxu0 0.0
    %839 = vmatpush1.msra.mxu0 0.0
    %840 = vmatprep.subr.mxu0 0.0
    %841 = vmatpush1.msra.mxu0 0.0
    %842 = vmatprep.subr.mxu0 0.0
    %843 = vmatpush1.msra.mxu0 0.0
    %844 = vmatprep.subr.mxu0 0.0
    %845 = vmatpush1.msra.mxu0 0.0
    %846 = vmatprep.subr.mxu0 0.0
    %847 = vmatpush1.msra.mxu0 0.0
    %848 = vmatprep.subr.mxu0 0.0
    %849 = vmatpush1.msra.mxu0 0.0
    %850 = vmatprep.subr.mxu0 0.0
    %851 = vmatpush1.msra.mxu0 0.0
    %852 = vmatprep.subr.mxu0 0.0
    %853 = vmatpush1.msra.mxu0 0.0
    %854 = vmatprep.subr.mxu0 0.0
    %855 = vmatpush1.msra.mxu0 0.0
    %856 = vmatprep.subr.mxu0 0.0
    %857 = vmatpush1.msra.mxu0 0.0
    %858 = vmatprep.subr.mxu0 0.0
    %859 = vmatpush1.msra.mxu0 0.0
    %860 = vmatprep.subr.mxu0 0.0
    %861 = vmatpush1.msra.mxu0 0.0
    %862 = vmatprep.subr.mxu0 0.0
    %863 = vmatpush1.msra.mxu0 0.0
    %864 = vmatprep.subr.mxu0 0.0
    %865 = vmatpush1.msra.mxu0 0.0
    %866 = vmatprep.subr.mxu0 0.0
    %867 = vmatpush1.msra.mxu0 0.0
    %868 = vmatprep.subr.mxu0 0.0
    %869 = vmatpush1.msra.mxu0 0.0
    %870 = vmatprep.subr.mxu0 0.0
    %871 = vmatpush1.msra.mxu0 0.0
    %872 = vmatprep.subr.mxu0 0.0
    %873 = vmatpush1.msra.mxu0 0.0
    %874 = vmatprep.mubr.f32.mxu0 0.0
    %v875 = vand.u32 %v74, 4294901760
    %876 = vmatmul.mubr.f32.gmra.mrb[0].mxu0 %v875
    %v877 = vpop.f32.mrb[0].mxu0
    %v878 = vadd.f32 %v753, %v877
    %v879 = vpop.f32.mrb[0].mxu0
    %v880 = vadd.f32 %v755, %v879
    %881 = vmatprep.mubr.f32.mxu0 0.0
    %v882 = vand.u32 %v77, 4294901760
    %883 = vmatmul.mubr.f32.gmra.mrb[0].mxu0 %v882
    %v884 = vpop.f32.mrb[0].mxu0
    %v885 = vadd.f32 %v760, %v884
    %v886 = vpop.f32.mrb[0].mxu0
    %v887 = vadd.f32 %v762, %v886
    %888 = vmatprep.mubr.f32.mxu0 0.0
    %v889 = vand.u32 %v80, 4294901760
    %890 = vmatmul.mubr.f32.gmra.mrb[0].mxu0 %v889
    %v891 = vpop.f32.mrb[0].mxu0
    %v892 = vadd.f32 %v767, %v891
    %v893 = vpop.f32.mrb[0].mxu0
    %v894 = vadd.f32 %v769, %v893
    %895 = vmatprep.mubr.f32.mxu0 0.0
    %v896 = vand.u32 %v83, 4294901760
    %897 = vmatmul.mubr.f32.gmra.mrb[0].mxu0 %v896
    %v898 = vpop.f32.mrb[0].mxu0
    %v899 = vadd.f32 %v774, %v898
    %v900 = vpop.f32.mrb[0].mxu0
    %v901 = vadd.f32 %v776, %v900
    %902 = vmatprep.mubr.f32.mxu0 0.0
    %v903 = vand.u32 %v86, 4294901760
    %904 = vmatmul.mubr.f32.gmra.mrb[0].mxu0 %v903
    %v905 = vpop.f32.mrb[0].mxu0
    %v906 = vadd.f32 %v781, %v905
    %v907 = vpop.f32.mrb[0].mxu0
    %v908 = vadd.f32 %v783, %v907
    %909 = vmatprep.mubr.f32.mxu0 0.0
    %v910 = vand.u32 %v89, 4294901760
    %911 = vmatmul.mubr.f32.gmra.mrb[0].mxu0 %v910
    %v912 = vpop.f32.mrb[0].mxu0
    %v913 = vadd.f32 %v788, %v912
    %v914 = vpop.f32.mrb[0].mxu0
    %v915 = vadd.f32 %v790, %v914
    %916 = vmatprep.mubr.f32.mxu0 0.0
    %v917 = vand.u32 %v92, 4294901760
    %918 = vmatmul.mubr.f32.gmra.mrb[0].mxu0 %v917
    %v919 = vpop.f32.mrb[0].mxu0
    %v920 = vadd.f32 %v795, %v919
    %v921 = vpop.f32.mrb[0].mxu0
    %v922 = vadd.f32 %v797, %v921
    %923 = vmatprep.mubr.f32.mxu0 0.0
    %v924 = vand.u32 %v95, 4294901760
    %925 = vmatmul.mubr.f32.gmra.mrb[0].mxu0 %v924
    %v926 = vpop.f32.mrb[0].mxu0
    %v927 = vadd.f32 %v802, %v926
    %v928 = vpop.f32.mrb[0].mxu0
    %v929 = vadd.f32 %v804, %v928
    %930 = vdwg.mxu0
    %931 = vmatprep.subr.mxu0 0.0
    %v932 = vand.u32 %v45, 4294901760
    %933 = vmatpush1.msra.mxu0 %v932
    %934 = vmatprep.subr.mxu0 0.0
    %v935 = vand.u32 %v48, 4294901760
    %936 = vmatpush1.msra.mxu0 %v935
    %937 = vmatprep.subr.mxu0 0.0
    %938 = vmatpush1.msra.mxu0 0.0
    %939 = vmatprep.subr.mxu0 0.0
    %940 = vmatpush1.msra.mxu0 0.0
    %941 = vmatprep.subr.mxu0 0.0
    %942 = vmatpush1.msra.mxu0 0.0
    %943 = vmatprep.subr.mxu0 0.0
    %944 = vmatpush1.msra.mxu0 0.0
    %945 = vmatprep.subr.mxu0 0.0
    %946 = vmatpush1.msra.mxu0 0.0
    %947 = vmatprep.subr.mxu0 0.0
    %948 = vmatpush1.msra.mxu0 0.0
    %949 = vmatprep.subr.mxu0 0.0
    %950 = vmatpush1.msra.mxu0 0.0
    %951 = vmatprep.subr.mxu0 0.0
    %952 = vmatpush1.msra.mxu0 0.0
    %953 = vmatprep.subr.mxu0 0.0
    %954 = vmatpush1.msra.mxu0 0.0
    %955 = vmatprep.subr.mxu0 0.0
    %956 = vmatpush1.msra.mxu0 0.0
    %957 = vmatprep.subr.mxu0 0.0
    %958 = vmatpush1.msra.mxu0 0.0
    %959 = vmatprep.subr.mxu0 0.0
    %960 = vmatpush1.msra.mxu0 0.0
    %961 = vmatprep.subr.mxu0 0.0
    %962 = vmatpush1.msra.mxu0 0.0
    %963 = vmatprep.subr.mxu0 0.0
    %964 = vmatpush1.msra.mxu0 0.0
    %965 = vmatprep.subr.mxu0 0.0
    %966 = vmatpush1.msra.mxu0 0.0
    %967 = vmatprep.subr.mxu0 0.0
    %968 = vmatpush1.msra.mxu0 0.0
    %969 = vmatprep.subr.mxu0 0.0
    %970 = vmatpush1.msra.mxu0 0.0
    %971 = vmatprep.subr.mxu0 0.0
    %972 = vmatpush1.msra.mxu0 0.0
    %973 = vmatprep.subr.mxu0 0.0
    %974 = vmatpush1.msra.mxu0 0.0
    %975 = vmatprep.subr.mxu0 0.0
    %976 = vmatpush1.msra.mxu0 0.0
    %977 = vmatprep.subr.mxu0 0.0
    %978 = vmatpush1.msra.mxu0 0.0
    %979 = vmatprep.subr.mxu0 0.0
    %980 = vmatpush1.msra.mxu0 0.0
    %981 = vmatprep.subr.mxu0 0.0
    %982 = vmatpush1.msra.mxu0 0.0
    %983 = vmatprep.subr.mxu0 0.0
    %984 = vmatpush1.msra.mxu0 0.0
    %985 = vmatprep.subr.mxu0 0.0
    %986 = vmatpush1.msra.mxu0 0.0
    %987 = vmatprep.subr.mxu0 0.0
    %988 = vmatpush1.msra.mxu0 0.0
    %989 = vmatprep.subr.mxu0 0.0
    %990 = vmatpush1.msra.mxu0 0.0
    %991 = vmatprep.subr.mxu0 0.0
    %992 = vmatpush1.msra.mxu0 0.0
    %993 = vmatprep.subr.mxu0 0.0
    %994 = vmatpush1.msra.mxu0 0.0
    %995 = vmatprep.subr.mxu0 0.0
    %996 = vmatpush1.msra.mxu0 0.0
    %997 = vmatprep.mubr.f32.mxu0 0.0
    %v998 = vand.u32 %v74, 4294901760
    %v999 = vsub.f32 %v74, %v998
    %v1000 = vand.u32 %v999, 4294901760
    %v1001 = vsub.f32 %v999, %v1000
    %v1002 = vand.u32 %v1001, 4294901760
    %1003 = vmatmul.mubr.f32.gmra.mrb[0].mxu0 %v1002
    %v1004 = vpop.f32.mrb[0].mxu0
    %v1005 = vadd.f32 %v68, %v1004
    %v1006 = vpop.f32.mrb[0].mxu0
    %1007 = vmatprep.mubr.f32.mxu0 0.0
    %v1008 = vand.u32 %v77, 4294901760
    %v1009 = vsub.f32 %v77, %v1008
    %v1010 = vand.u32 %v1009, 4294901760
    %v1011 = vsub.f32 %v1009, %v1010
    %v1012 = vand.u32 %v1011, 4294901760
    %1013 = vmatmul.mubr.f32.gmra.mrb[0].mxu0 %v1012
    %v1014 = vpop.f32.mrb[0].mxu0
    %v1015 = vadd.f32 %v68, %v1014
    %v1016 = vpop.f32.mrb[0].mxu0
    %1017 = vmatprep.mubr.f32.mxu0 0.0
    %v1018 = vand.u32 %v80, 4294901760
    %v1019 = vsub.f32 %v80, %v1018
    %v1020 = vand.u32 %v1019, 4294901760
    %v1021 = vsub.f32 %v1019, %v1020
    %v1022 = vand.u32 %v1021, 4294901760
    %1023 = vmatmul.mubr.f32.gmra.mrb[0].mxu0 %v1022
    %v1024 = vpop.f32.mrb[0].mxu0
    %v1025 = vadd.f32 %v68, %v1024
    %v1026 = vpop.f32.mrb[0].mxu0
    %1027 = vmatprep.mubr.f32.mxu0 0.0
    %v1028 = vand.u32 %v83, 4294901760
    %v1029 = vsub.f32 %v83, %v1028
    %v1030 = vand.u32 %v1029, 4294901760
    %v1031 = vsub.f32 %v1029, %v1030
    %v1032 = vand.u32 %v1031, 4294901760
    %1033 = vmatmul.mubr.f32.gmra.mrb[0].mxu0 %v1032
    %v1034 = vpop.f32.mrb[0].mxu0
    %v1035 = vadd.f32 %v68, %v1034
    %v1036 = vpop.f32.mrb[0].mxu0
    %1037 = vmatprep.mubr.f32.mxu0 0.0
    %v1038 = vand.u32 %v86, 4294901760
    %v1039 = vsub.f32 %v86, %v1038
    %v1040 = vand.u32 %v1039, 4294901760
    %v1041 = vsub.f32 %v1039, %v1040
    %v1042 = vand.u32 %v1041, 4294901760
    %1043 = vmatmul.mubr.f32.gmra.mrb[0].mxu0 %v1042
    %v1044 = vpop.f32.mrb[0].mxu0
    %v1045 = vadd.f32 %v68, %v1044
    %v1046 = vpop.f32.mrb[0].mxu0
    %1047 = vmatprep.mubr.f32.mxu0 0.0
    %v1048 = vand.u32 %v89, 4294901760
    %v1049 = vsub.f32 %v89, %v1048
    %v1050 = vand.u32 %v1049, 4294901760
    %v1051 = vsub.f32 %v1049, %v1050
    %v1052 = vand.u32 %v1051, 4294901760
    %1053 = vmatmul.mubr.f32.gmra.mrb[0].mxu0 %v1052
    %v1054 = vpop.f32.mrb[0].mxu0
    %v1055 = vadd.f32 %v68, %v1054
    %v1056 = vpop.f32.mrb[0].mxu0
    %1057 = vmatprep.mubr.f32.mxu0 0.0
    %v1058 = vand.u32 %v92, 4294901760
    %v1059 = vsub.f32 %v92, %v1058
    %v1060 = vand.u32 %v1059, 4294901760
    %v1061 = vsub.f32 %v1059, %v1060
    %v1062 = vand.u32 %v1061, 4294901760
    %1063 = vmatmul.mubr.f32.gmra.mrb[0].mxu0 %v1062
    %v1064 = vpop.f32.mrb[0].mxu0
    %v1065 = vadd.f32 %v68, %v1064
    %v1066 = vpop.f32.mrb[0].mxu0
    %1067 = vmatprep.mubr.f32.mxu0 0.0
    %v1068 = vand.u32 %v95, 4294901760
    %v1069 = vsub.f32 %v95, %v1068
    %v1070 = vand.u32 %v1069, 4294901760
    %v1071 = vsub.f32 %v1069, %v1070
    %v1072 = vand.u32 %v1071, 4294901760
    %1073 = vmatmul.mubr.f32.gmra.mrb[0].mxu0 %v1072
    %v1074 = vpop.f32.mrb[0].mxu0
    %v1075 = vadd.f32 %v68, %v1074
    %v1076 = vpop.f32.mrb[0].mxu0
    %1077 = vdwg.mxu0
    %1078 = vmatprep.subr.mxu0 0.0
    %v1079 = vand.u32 %v45, 4294901760
    %v1080 = vsub.f32 %v45, %v1079
    %v1081 = vand.u32 %v1080, 4294901760
    %v1082 = vsub.f32 %v1080, %v1081
    %v1083 = vand.u32 %v1082, 4294901760
    %1084 = vmatpush1.msra.mxu0 %v1083
    %1085 = vmatprep.subr.mxu0 0.0
    %v1086 = vand.u32 %v48, 4294901760
    %v1087 = vsub.f32 %v48, %v1086
    %v1088 = vand.u32 %v1087, 4294901760
    %v1089 = vsub.f32 %v1087, %v1088
    %v1090 = vand.u32 %v1089, 4294901760
    %1091 = vmatpush1.msra.mxu0 %v1090
    %1092 = vmatprep.subr.mxu0 0.0
    %1093 = vmatpush1.msra.mxu0 0.0
    %1094 = vmatprep.subr.mxu0 0.0
    %1095 = vmatpush1.msra.mxu0 0.0
    %1096 = vmatprep.subr.mxu0 0.0
    %1097 = vmatpush1.msra.mxu0 0.0
    %1098 = vmatprep.subr.mxu0 0.0
    %1099 = vmatpush1.msra.mxu0 0.0
    %1100 = vmatprep.subr.mxu0 0.0
    %1101 = vmatpush1.msra.mxu0 0.0
    %1102 = vmatprep.subr.mxu0 0.0
    %1103 = vmatpush1.msra.mxu0 0.0
    %1104 = vmatprep.subr.mxu0 0.0
    %1105 = vmatpush1.msra.mxu0 0.0
    %1106 = vmatprep.subr.mxu0 0.0
    %1107 = vmatpush1.msra.mxu0 0.0
    %1108 = vmatprep.subr.mxu0 0.0
    %1109 = vmatpush1.msra.mxu0 0.0
    %1110 = vmatprep.subr.mxu0 0.0
    %1111 = vmatpush1.msra.mxu0 0.0
    %1112 = vmatprep.subr.mxu0 0.0
    %1113 = vmatpush1.msra.mxu0 0.0
    %1114 = vmatprep.subr.mxu0 0.0
    %1115 = vmatpush1.msra.mxu0 0.0
    %1116 = vmatprep.subr.mxu0 0.0
    %1117 = vmatpush1.msra.mxu0 0.0
    %1118 = vmatprep.subr.mxu0 0.0
    %1119 = vmatpush1.msra.mxu0 0.0
    %1120 = vmatprep.subr.mxu0 0.0
    %1121 = vmatpush1.msra.mxu0 0.0
    %1122 = vmatprep.subr.mxu0 0.0
    %1123 = vmatpush1.msra.mxu0 0.0
    %1124 = vmatprep.subr.mxu0 0.0
    %1125 = vmatpush1.msra.mxu0 0.0
    %1126 = vmatprep.subr.mxu0 0.0
    %1127 = vmatpush1.msra.mxu0 0.0
    %1128 = vmatprep.subr.mxu0 0.0
    %1129 = vmatpush1.msra.mxu0 0.0
    %1130 = vmatprep.subr.mxu0 0.0
    %1131 = vmatpush1.msra.mxu0 0.0
    %1132 = vmatprep.subr.mxu0 0.0
    %1133 = vmatpush1.msra.mxu0 0.0
    %1134 = vmatprep.subr.mxu0 0.0
    %1135 = vmatpush1.msra.mxu0 0.0
    %1136 = vmatprep.subr.mxu0 0.0
    %1137 = vmatpush1.msra.mxu0 0.0
    %1138 = vmatprep.subr.mxu0 0.0
    %1139 = vmatpush1.msra.mxu0 0.0
    %1140 = vmatprep.subr.mxu0 0.0
    %1141 = vmatpush1.msra.mxu0 0.0
    %1142 = vmatprep.subr.mxu0 0.0
    %1143 = vmatpush1.msra.mxu0 0.0
    %1144 = vmatprep.subr.mxu0 0.0
    %1145 = vmatpush1.msra.mxu0 0.0
    %1146 = vmatprep.subr.mxu0 0.0
    %1147 = vmatpush1.msra.mxu0 0.0
    %1148 = vmatprep.subr.mxu0 0.0
    %1149 = vmatpush1.msra.mxu0 0.0
    %1150 = vmatprep.subr.mxu0 0.0
    %1151 = vmatpush1.msra.mxu0 0.0
    %1152 = vmatprep.mubr.f32.mxu0 0.0
    %v1153 = vand.u32 %v74, 4294901760
    %1154 = vmatmul.mubr.f32.gmra.mrb[0].mxu0 %v1153
    %v1155 = vpop.f32.mrb[0].mxu0
    %v1156 = vadd.f32 %v1005, %v1155
    %v1157 = vpop.f32.mrb[0].mxu0
    %1158 = vmatprep.mubr.f32.mxu0 0.0
    %v1159 = vand.u32 %v77, 4294901760
    %1160 = vmatmul.mubr.f32.gmra.mrb[0].mxu0 %v1159
    %v1161 = vpop.f32.mrb[0].mxu0
    %v1162 = vadd.f32 %v1015, %v1161
    %v1163 = vpop.f32.mrb[0].mxu0
    %1164 = vmatprep.mubr.f32.mxu0 0.0
    %v1165 = vand.u32 %v80, 4294901760
    %1166 = vmatmul.mubr.f32.gmra.mrb[0].mxu0 %v1165
    %v1167 = vpop.f32.mrb[0].mxu0
    %v1168 = vadd.f32 %v1025, %v1167
    %v1169 = vpop.f32.mrb[0].mxu0
    %1170 = vmatprep.mubr.f32.mxu0 0.0
    %v1171 = vand.u32 %v83, 4294901760
    %1172 = vmatmul.mubr.f32.gmra.mrb[0].mxu0 %v1171
    %v1173 = vpop.f32.mrb[0].mxu0
    %v1174 = vadd.f32 %v1035, %v1173
    %v1175 = vpop.f32.mrb[0].mxu0
    %1176 = vmatprep.mubr.f32.mxu0 0.0
    %v1177 = vand.u32 %v86, 4294901760
    %1178 = vmatmul.mubr.f32.gmra.mrb[0].mxu0 %v1177
    %v1179 = vpop.f32.mrb[0].mxu0
    %v1180 = vadd.f32 %v1045, %v1179
    %v1181 = vpop.f32.mrb[0].mxu0
    %1182 = vmatprep.mubr.f32.mxu0 0.0
    %v1183 = vand.u32 %v89, 4294901760
    %1184 = vmatmul.mubr.f32.gmra.mrb[0].mxu0 %v1183
    %v1185 = vpop.f32.mrb[0].mxu0
    %v1186 = vadd.f32 %v1055, %v1185
    %v1187 = vpop.f32.mrb[0].mxu0
    %1188 = vmatprep.mubr.f32.mxu0 0.0
    %v1189 = vand.u32 %v92, 4294901760
    %1190 = vmatmul.mubr.f32.gmra.mrb[0].mxu0 %v1189
    %v1191 = vpop.f32.mrb[0].mxu0
    %v1192 = vadd.f32 %v1065, %v1191
    %v1193 = vpop.f32.mrb[0].mxu0
    %1194 = vmatprep.mubr.f32.mxu0 0.0
    %v1195 = vand.u32 %v95, 4294901760
    %1196 = vmatmul.mubr.f32.gmra.mrb[0].mxu0 %v1195
    %v1197 = vpop.f32.mrb[0].mxu0
    %v1198 = vadd.f32 %v1075, %v1197
    %v1199 = vpop.f32.mrb[0].mxu0
    %1200 = vdwg.mxu0
    %1201 = vmatprep.subr.mxu0 0.0
    %v1202 = vand.u32 %v45, 4294901760
    %v1203 = vsub.f32 %v45, %v1202
    %1204 = vmatpush1.msra.mxu0 %v1203
    %1205 = vmatprep.subr.mxu0 0.0
    %v1206 = vand.u32 %v48, 4294901760
    %v1207 = vsub.f32 %v48, %v1206
    %1208 = vmatpush1.msra.mxu0 %v1207
    %1209 = vmatprep.subr.mxu0 0.0
    %1210 = vmatpush1.msra.mxu0 0.0
    %1211 = vmatprep.subr.mxu0 0.0
    %1212 = vmatpush1.msra.mxu0 0.0
    %1213 = vmatprep.subr.mxu0 0.0
    %1214 = vmatpush1.msra.mxu0 0.0
    %1215 = vmatprep.subr.mxu0 0.0
    %1216 = vmatpush1.msra.mxu0 0.0
    %1217 = vmatprep.subr.mxu0 0.0
    %1218 = vmatpush1.msra.mxu0 0.0
    %1219 = vmatprep.subr.mxu0 0.0
    %1220 = vmatpush1.msra.mxu0 0.0
    %1221 = vmatprep.subr.mxu0 0.0
    %1222 = vmatpush1.msra.mxu0 0.0
    %1223 = vmatprep.subr.mxu0 0.0
    %1224 = vmatpush1.msra.mxu0 0.0
    %1225 = vmatprep.subr.mxu0 0.0
    %1226 = vmatpush1.msra.mxu0 0.0
    %1227 = vmatprep.subr.mxu0 0.0
    %1228 = vmatpush1.msra.mxu0 0.0
    %1229 = vmatprep.subr.mxu0 0.0
    %1230 = vmatpush1.msra.mxu0 0.0
    %1231 = vmatprep.subr.mxu0 0.0
    %1232 = vmatpush1.msra.mxu0 0.0
    %1233 = vmatprep.subr.mxu0 0.0
    %1234 = vmatpush1.msra.mxu0 0.0
    %1235 = vmatprep.subr.mxu0 0.0
    %1236 = vmatpush1.msra.mxu0 0.0
    %1237 = vmatprep.subr.mxu0 0.0
    %1238 = vmatpush1.msra.mxu0 0.0
    %1239 = vmatprep.subr.mxu0 0.0
    %1240 = vmatpush1.msra.mxu0 0.0
    %1241 = vmatprep.subr.mxu0 0.0
    %1242 = vmatpush1.msra.mxu0 0.0
    %1243 = vmatprep.subr.mxu0 0.0
    %1244 = vmatpush1.msra.mxu0 0.0
    %1245 = vmatprep.subr.mxu0 0.0
    %1246 = vmatpush1.msra.mxu0 0.0
    %1247 = vmatprep.subr.mxu0 0.0
    %1248 = vmatpush1.msra.mxu0 0.0
    %1249 = vmatprep.subr.mxu0 0.0
    %1250 = vmatpush1.msra.mxu0 0.0
    %1251 = vmatprep.subr.mxu0 0.0
    %1252 = vmatpush1.msra.mxu0 0.0
    %1253 = vmatprep.subr.mxu0 0.0
    %1254 = vmatpush1.msra.mxu0 0.0
    %1255 = vmatprep.subr.mxu0 0.0
    %1256 = vmatpush1.msra.mxu0 0.0
    %1257 = vmatprep.subr.mxu0 0.0
    %1258 = vmatpush1.msra.mxu0 0.0
    %1259 = vmatprep.subr.mxu0 0.0
    %1260 = vmatpush1.msra.mxu0 0.0
    %1261 = vmatprep.subr.mxu0 0.0
    %1262 = vmatpush1.msra.mxu0 0.0
    %1263 = vmatprep.subr.mxu0 0.0
    %1264 = vmatpush1.msra.mxu0 0.0
    %1265 = vmatprep.subr.mxu0 0.0
    %1266 = vmatpush1.msra.mxu0 0.0
    %1267 = vmatprep.subr.mxu0 0.0
    %1268 = vmatpush1.msra.mxu0 0.0
    %1269 = vmatprep.mubr.f32.mxu0 0.0
    %v1270 = vand.u32 %v74, 4294901760
    %v1271 = vsub.f32 %v74, %v1270
    %1272 = vmatmul.mubr.f32.gmra.mrb[0].mxu0 %v1271
    %v1273 = vpop.f32.mrb[0].mxu0
    %v1274 = vadd.f32 %v1156, %v1273
    %v1275 = vpop.f32.mrb[0].mxu0
    %1276 = vmatprep.mubr.f32.mxu0 0.0
    %v1277 = vand.u32 %v77, 4294901760
    %v1278 = vsub.f32 %v77, %v1277
    %1279 = vmatmul.mubr.f32.gmra.mrb[0].mxu0 %v1278
    %v1280 = vpop.f32.mrb[0].mxu0
    %v1281 = vadd.f32 %v1162, %v1280
    %v1282 = vpop.f32.mrb[0].mxu0
    %1283 = vmatprep.mubr.f32.mxu0 0.0
    %v1284 = vand.u32 %v80, 4294901760
    %v1285 = vsub.f32 %v80, %v1284
    %1286 = vmatmul.mubr.f32.gmra.mrb[0].mxu0 %v1285
    %v1287 = vpop.f32.mrb[0].mxu0
    %v1288 = vadd.f32 %v1168, %v1287
    %v1289 = vpop.f32.mrb[0].mxu0
    %1290 = vmatprep.mubr.f32.mxu0 0.0
    %v1291 = vand.u32 %v83, 4294901760
    %v1292 = vsub.f32 %v83, %v1291
    %1293 = vmatmul.mubr.f32.gmra.mrb[0].mxu0 %v1292
    %v1294 = vpop.f32.mrb[0].mxu0
    %v1295 = vadd.f32 %v1174, %v1294
    %v1296 = vpop.f32.mrb[0].mxu0
    %1297 = vmatprep.mubr.f32.mxu0 0.0
    %v1298 = vand.u32 %v86, 4294901760
    %v1299 = vsub.f32 %v86, %v1298
    %1300 = vmatmul.mubr.f32.gmra.mrb[0].mxu0 %v1299
    %v1301 = vpop.f32.mrb[0].mxu0
    %v1302 = vadd.f32 %v1180, %v1301
    %v1303 = vpop.f32.mrb[0].mxu0
    %1304 = vmatprep.mubr.f32.mxu0 0.0
    %v1305 = vand.u32 %v89, 4294901760
    %v1306 = vsub.f32 %v89, %v1305
    %1307 = vmatmul.mubr.f32.gmra.mrb[0].mxu0 %v1306
    %v1308 = vpop.f32.mrb[0].mxu0
    %v1309 = vadd.f32 %v1186, %v1308
    %v1310 = vpop.f32.mrb[0].mxu0
    %1311 = vmatprep.mubr.f32.mxu0 0.0
    %v1312 = vand.u32 %v92, 4294901760
    %v1313 = vsub.f32 %v92, %v1312
    %1314 = vmatmul.mubr.f32.gmra.mrb[0].mxu0 %v1313
    %v1315 = vpop.f32.mrb[0].mxu0
    %v1316 = vadd.f32 %v1192, %v1315
    %v1317 = vpop.f32.mrb[0].mxu0
    %1318 = vmatprep.mubr.f32.mxu0 0.0
    %v1319 = vand.u32 %v95, 4294901760
    %v1320 = vsub.f32 %v95, %v1319
    %1321 = vmatmul.mubr.f32.gmra.mrb[0].mxu0 %v1320
    %v1322 = vpop.f32.mrb[0].mxu0
    %v1323 = vadd.f32 %v1198, %v1322
    %v1324 = vpop.f32.mrb[0].mxu0
    %1325 = vdwg.mxu0
    %1326 = vmatprep.subr.mxu0 0.0
    %v1327 = vand.u32 %v45, 4294901760
    %1328 = vmatpush1.msra.mxu0 %v1327
    %1329 = vmatprep.subr.mxu0 0.0
    %v1330 = vand.u32 %v48, 4294901760
    %1331 = vmatpush1.msra.mxu0 %v1330
    %1332 = vmatprep.subr.mxu0 0.0
    %1333 = vmatpush1.msra.mxu0 0.0
    %1334 = vmatprep.subr.mxu0 0.0
    %1335 = vmatpush1.msra.mxu0 0.0
    %1336 = vmatprep.subr.mxu0 0.0
    %1337 = vmatpush1.msra.mxu0 0.0
    %1338 = vmatprep.subr.mxu0 0.0
    %1339 = vmatpush1.msra.mxu0 0.0
    %1340 = vmatprep.subr.mxu0 0.0
    %1341 = vmatpush1.msra.mxu0 0.0
    %1342 = vmatprep.subr.mxu0 0.0
    %1343 = vmatpush1.msra.mxu0 0.0
    %1344 = vmatprep.subr.mxu0 0.0
    %1345 = vmatpush1.msra.mxu0 0.0
    %1346 = vmatprep.subr.mxu0 0.0
    %1347 = vmatpush1.msra.mxu0 0.0
    %1348 = vmatprep.subr.mxu0 0.0
    %1349 = vmatpush1.msra.mxu0 0.0
    %1350 = vmatprep.subr.mxu0 0.0
    %1351 = vmatpush1.msra.mxu0 0.0
    %1352 = vmatprep.subr.mxu0 0.0
    %1353 = vmatpush1.msra.mxu0 0.0
    %1354 = vmatprep.subr.mxu0 0.0
    %1355 = vmatpush1.msra.mxu0 0.0
    %1356 = vmatprep.subr.mxu0 0.0
    %1357 = vmatpush1.msra.mxu0 0.0
    %1358 = vmatprep.subr.mxu0 0.0
    %1359 = vmatpush1.msra.mxu0 0.0
    %1360 = vmatprep.subr.mxu0 0.0
    %1361 = vmatpush1.msra.mxu0 0.0
    %1362 = vmatprep.subr.mxu0 0.0
    %1363 = vmatpush1.msra.mxu0 0.0
    %1364 = vmatprep.subr.mxu0 0.0
    %1365 = vmatpush1.msra.mxu0 0.0
    %1366 = vmatprep.subr.mxu0 0.0
    %1367 = vmatpush1.msra.mxu0 0.0
    %1368 = vmatprep.subr.mxu0 0.0
    %1369 = vmatpush1.msra.mxu0 0.0
    %1370 = vmatprep.subr.mxu0 0.0
    %1371 = vmatpush1.msra.mxu0 0.0
    %1372 = vmatprep.subr.mxu0 0.0
    %1373 = vmatpush1.msra.mxu0 0.0
    %1374 = vmatprep.subr.mxu0 0.0
    %1375 = vmatpush1.msra.mxu0 0.0
    %1376 = vmatprep.subr.mxu0 0.0
    %1377 = vmatpush1.msra.mxu0 0.0
    %1378 = vmatprep.subr.mxu0 0.0
    %1379 = vmatpush1.msra.mxu0 0.0
    %1380 = vmatprep.subr.mxu0 0.0
    %1381 = vmatpush1.msra.mxu0 0.0
    %1382 = vmatprep.subr.mxu0 0.0
    %1383 = vmatpush1.msra.mxu0 0.0
    %1384 = vmatprep.subr.mxu0 0.0
    %1385 = vmatpush1.msra.mxu0 0.0
    %1386 = vmatprep.subr.mxu0 0.0
    %1387 = vmatpush1.msra.mxu0 0.0
    %1388 = vmatprep.subr.mxu0 0.0
    %1389 = vmatpush1.msra.mxu0 0.0
    %1390 = vmatprep.subr.mxu0 0.0
    %1391 = vmatpush1.msra.mxu0 0.0
    %1392 = vmatprep.mubr.f32.mxu0 0.0
    %v1393 = vand.u32 %v74, 4294901760
    %v1394 = vsub.f32 %v74, %v1393
    %v1395 = vand.u32 %v1394, 4294901760
    %1396 = vmatmul.mubr.f32.gmra.mrb[0].mxu0 %v1395
    %v1397 = vpop.f32.mrb[0].mxu0
    %v1398 = vadd.f32 %v1274, %v1397
    %v1399 = vpop.f32.mrb[0].mxu0
    %1400 = vmatprep.mubr.f32.mxu0 0.0
    %v1401 = vand.u32 %v77, 4294901760
    %v1402 = vsub.f32 %v77, %v1401
    %v1403 = vand.u32 %v1402, 4294901760
    %1404 = vmatmul.mubr.f32.gmra.mrb[0].mxu0 %v1403
    %v1405 = vpop.f32.mrb[0].mxu0
    %v1406 = vadd.f32 %v1281, %v1405
    %v1407 = vpop.f32.mrb[0].mxu0
    %1408 = vmatprep.mubr.f32.mxu0 0.0
    %v1409 = vand.u32 %v80, 4294901760
    %v1410 = vsub.f32 %v80, %v1409
    %v1411 = vand.u32 %v1410, 4294901760
    %1412 = vmatmul.mubr.f32.gmra.mrb[0].mxu0 %v1411
    %v1413 = vpop.f32.mrb[0].mxu0
    %v1414 = vadd.f32 %v1288, %v1413
    %v1415 = vpop.f32.mrb[0].mxu0
    %1416 = vmatprep.mubr.f32.mxu0 0.0
    %v1417 = vand.u32 %v83, 4294901760
    %v1418 = vsub.f32 %v83, %v1417
    %v1419 = vand.u32 %v1418, 4294901760
    %1420 = vmatmul.mubr.f32.gmra.mrb[0].mxu0 %v1419
    %v1421 = vpop.f32.mrb[0].mxu0
    %v1422 = vadd.f32 %v1295, %v1421
    %v1423 = vpop.f32.mrb[0].mxu0
    %1424 = vmatprep.mubr.f32.mxu0 0.0
    %v1425 = vand.u32 %v86, 4294901760
    %v1426 = vsub.f32 %v86, %v1425
    %v1427 = vand.u32 %v1426, 4294901760
    %1428 = vmatmul.mubr.f32.gmra.mrb[0].mxu0 %v1427
    %v1429 = vpop.f32.mrb[0].mxu0
    %v1430 = vadd.f32 %v1302, %v1429
    %v1431 = vpop.f32.mrb[0].mxu0
    %1432 = vmatprep.mubr.f32.mxu0 0.0
    %v1433 = vand.u32 %v89, 4294901760
    %v1434 = vsub.f32 %v89, %v1433
    %v1435 = vand.u32 %v1434, 4294901760
    %1436 = vmatmul.mubr.f32.gmra.mrb[0].mxu0 %v1435
    %v1437 = vpop.f32.mrb[0].mxu0
    %v1438 = vadd.f32 %v1309, %v1437
    %v1439 = vpop.f32.mrb[0].mxu0
    %1440 = vmatprep.mubr.f32.mxu0 0.0
    %v1441 = vand.u32 %v92, 4294901760
    %v1442 = vsub.f32 %v92, %v1441
    %v1443 = vand.u32 %v1442, 4294901760
    %1444 = vmatmul.mubr.f32.gmra.mrb[0].mxu0 %v1443
    %v1445 = vpop.f32.mrb[0].mxu0
    %v1446 = vadd.f32 %v1316, %v1445
    %v1447 = vpop.f32.mrb[0].mxu0
    %1448 = vmatprep.mubr.f32.mxu0 0.0
    %v1449 = vand.u32 %v95, 4294901760
    %v1450 = vsub.f32 %v95, %v1449
    %v1451 = vand.u32 %v1450, 4294901760
    %1452 = vmatmul.mubr.f32.gmra.mrb[0].mxu0 %v1451
    %v1453 = vpop.f32.mrb[0].mxu0
    %v1454 = vadd.f32 %v1323, %v1453
    %v1455 = vpop.f32.mrb[0].mxu0
    %1456 = vdwg.mxu0
    %1457 = vmatprep.subr.mxu0 0.0
    %v1458 = vand.u32 %v45, 4294901760
    %v1459 = vsub.f32 %v45, %v1458
    %v1460 = vand.u32 %v1459, 4294901760
    %1461 = vmatpush1.msra.mxu0 %v1460
    %1462 = vmatprep.subr.mxu0 0.0
    %v1463 = vand.u32 %v48, 4294901760
    %v1464 = vsub.f32 %v48, %v1463
    %v1465 = vand.u32 %v1464, 4294901760
    %1466 = vmatpush1.msra.mxu0 %v1465
    %1467 = vmatprep.subr.mxu0 0.0
    %1468 = vmatpush1.msra.mxu0 0.0
    %1469 = vmatprep.subr.mxu0 0.0
    %1470 = vmatpush1.msra.mxu0 0.0
    %1471 = vmatprep.subr.mxu0 0.0
    %1472 = vmatpush1.msra.mxu0 0.0
    %1473 = vmatprep.subr.mxu0 0.0
    %1474 = vmatpush1.msra.mxu0 0.0
    %1475 = vmatprep.subr.mxu0 0.0
    %1476 = vmatpush1.msra.mxu0 0.0
    %1477 = vmatprep.subr.mxu0 0.0
    %1478 = vmatpush1.msra.mxu0 0.0
    %1479 = vmatprep.subr.mxu0 0.0
    %1480 = vmatpush1.msra.mxu0 0.0
    %1481 = vmatprep.subr.mxu0 0.0
    %1482 = vmatpush1.msra.mxu0 0.0
    %1483 = vmatprep.subr.mxu0 0.0
    %1484 = vmatpush1.msra.mxu0 0.0
    %1485 = vmatprep.subr.mxu0 0.0
    %1486 = vmatpush1.msra.mxu0 0.0
    %1487 = vmatprep.subr.mxu0 0.0
    %1488 = vmatpush1.msra.mxu0 0.0
    %1489 = vmatprep.subr.mxu0 0.0
    %1490 = vmatpush1.msra.mxu0 0.0
    %1491 = vmatprep.subr.mxu0 0.0
    %1492 = vmatpush1.msra.mxu0 0.0
    %1493 = vmatprep.subr.mxu0 0.0
    %1494 = vmatpush1.msra.mxu0 0.0
    %1495 = vmatprep.subr.mxu0 0.0
    %1496 = vmatpush1.msra.mxu0 0.0
    %1497 = vmatprep.subr.mxu0 0.0
    %1498 = vmatpush1.msra.mxu0 0.0
    %1499 = vmatprep.subr.mxu0 0.0
    %1500 = vmatpush1.msra.mxu0 0.0
    %1501 = vmatprep.subr.mxu0 0.0
    %1502 = vmatpush1.msra.mxu0 0.0
    %1503 = vmatprep.subr.mxu0 0.0
    %1504 = vmatpush1.msra.mxu0 0.0
    %1505 = vmatprep.subr.mxu0 0.0
    %1506 = vmatpush1.msra.mxu0 0.0
    %1507 = vmatprep.subr.mxu0 0.0
    %1508 = vmatpush1.msra.mxu0 0.0
    %1509 = vmatprep.subr.mxu0 0.0
    %1510 = vmatpush1.msra.mxu0 0.0
    %1511 = vmatprep.subr.mxu0 0.0
    %1512 = vmatpush1.msra.mxu0 0.0
    %1513 = vmatprep.subr.mxu0 0.0
    %1514 = vmatpush1.msra.mxu0 0.0
    %1515 = vmatprep.subr.mxu0 0.0
    %1516 = vmatpush1.msra.mxu0 0.0
    %1517 = vmatprep.subr.mxu0 0.0
    %1518 = vmatpush1.msra.mxu0 0.0
    %1519 = vmatprep.subr.mxu0 0.0
    %1520 = vmatpush1.msra.mxu0 0.0
    %1521 = vmatprep.subr.mxu0 0.0
    %1522 = vmatpush1.msra.mxu0 0.0
    %1523 = vmatprep.subr.mxu0 0.0
    %1524 = vmatpush1.msra.mxu0 0.0
    %1525 = vmatprep.subr.mxu0 0.0
    %1526 = vmatpush1.msra.mxu0 0.0
    %1527 = vmatprep.mubr.f32.mxu0 0.0
    %v1528 = vand.u32 %v74, 4294901760
    %1529 = vmatmul.mubr.f32.gmra.mrb[0].mxu0 %v1528
    %v1530 = vpop.f32.mrb[0].mxu0
    %v1531 = vadd.f32 %v1398, %v1530
    %v1532 = vpop.f32.mrb[0].mxu0
    %1533 = vmatprep.mubr.f32.mxu0 0.0
    %v1534 = vand.u32 %v77, 4294901760
    %1535 = vmatmul.mubr.f32.gmra.mrb[0].mxu0 %v1534
    %v1536 = vpop.f32.mrb[0].mxu0
    %v1537 = vadd.f32 %v1406, %v1536
    %v1538 = vpop.f32.mrb[0].mxu0
    %1539 = vmatprep.mubr.f32.mxu0 0.0
    %v1540 = vand.u32 %v80, 4294901760
    %1541 = vmatmul.mubr.f32.gmra.mrb[0].mxu0 %v1540
    %v1542 = vpop.f32.mrb[0].mxu0
    %v1543 = vadd.f32 %v1414, %v1542
    %v1544 = vpop.f32.mrb[0].mxu0
    %1545 = vmatprep.mubr.f32.mxu0 0.0
    %v1546 = vand.u32 %v83, 4294901760
    %1547 = vmatmul.mubr.f32.gmra.mrb[0].mxu0 %v1546
    %v1548 = vpop.f32.mrb[0].mxu0
    %v1549 = vadd.f32 %v1422, %v1548
    %v1550 = vpop.f32.mrb[0].mxu0
    %1551 = vmatprep.mubr.f32.mxu0 0.0
    %v1552 = vand.u32 %v86, 4294901760
    %1553 = vmatmul.mubr.f32.gmra.mrb[0].mxu0 %v1552
    %v1554 = vpop.f32.mrb[0].mxu0
    %v1555 = vadd.f32 %v1430, %v1554
    %v1556 = vpop.f32.mrb[0].mxu0
    %1557 = vmatprep.mubr.f32.mxu0 0.0
    %v1558 = vand.u32 %v89, 4294901760
    %1559 = vmatmul.mubr.f32.gmra.mrb[0].mxu0 %v1558
    %v1560 = vpop.f32.mrb[0].mxu0
    %v1561 = vadd.f32 %v1438, %v1560
    %v1562 = vpop.f32.mrb[0].mxu0
    %1563 = vmatprep.mubr.f32.mxu0 0.0
    %v1564 = vand.u32 %v92, 4294901760
    %1565 = vmatmul.mubr.f32.gmra.mrb[0].mxu0 %v1564
    %v1566 = vpop.f32.mrb[0].mxu0
    %v1567 = vadd.f32 %v1446, %v1566
    %v1568 = vpop.f32.mrb[0].mxu0
    %1569 = vmatprep.mubr.f32.mxu0 0.0
    %v1570 = vand.u32 %v95, 4294901760
    %1571 = vmatmul.mubr.f32.gmra.mrb[0].mxu0 %v1570
    %v1572 = vpop.f32.mrb[0].mxu0
    %v1573 = vadd.f32 %v1454, %v1572
    %v1574 = vpop.f32.mrb[0].mxu0
    %1575 = vdwg.mxu0
    %1576 = vmatprep.subr.mxu0 0.0
    %v1577 = vand.u32 %v45, 4294901760
    %1578 = vmatpush1.msra.mxu0 %v1577
    %1579 = vmatprep.subr.mxu0 0.0
    %v1580 = vand.u32 %v48, 4294901760
    %1581 = vmatpush1.msra.mxu0 %v1580
    %1582 = vmatprep.subr.mxu0 0.0
    %1583 = vmatpush1.msra.mxu0 0.0
    %1584 = vmatprep.subr.mxu0 0.0
    %1585 = vmatpush1.msra.mxu0 0.0
    %1586 = vmatprep.subr.mxu0 0.0
    %1587 = vmatpush1.msra.mxu0 0.0
    %1588 = vmatprep.subr.mxu0 0.0
    %1589 = vmatpush1.msra.mxu0 0.0
    %1590 = vmatprep.subr.mxu0 0.0
    %1591 = vmatpush1.msra.mxu0 0.0
    %1592 = vmatprep.subr.mxu0 0.0
    %1593 = vmatpush1.msra.mxu0 0.0
    %1594 = vmatprep.subr.mxu0 0.0
    %1595 = vmatpush1.msra.mxu0 0.0
    %1596 = vmatprep.subr.mxu0 0.0
    %1597 = vmatpush1.msra.mxu0 0.0
    %1598 = vmatprep.subr.mxu0 0.0
    %1599 = vmatpush1.msra.mxu0 0.0
    %1600 = vmatprep.subr.mxu0 0.0
    %1601 = vmatpush1.msra.mxu0 0.0
    %1602 = vmatprep.subr.mxu0 0.0
    %1603 = vmatpush1.msra.mxu0 0.0
    %1604 = vmatprep.subr.mxu0 0.0
    %1605 = vmatpush1.msra.mxu0 0.0
    %1606 = vmatprep.subr.mxu0 0.0
    %1607 = vmatpush1.msra.mxu0 0.0
    %1608 = vmatprep.subr.mxu0 0.0
    %1609 = vmatpush1.msra.mxu0 0.0
    %1610 = vmatprep.subr.mxu0 0.0
    %1611 = vmatpush1.msra.mxu0 0.0
    %1612 = vmatprep.subr.mxu0 0.0
    %1613 = vmatpush1.msra.mxu0 0.0
    %1614 = vmatprep.subr.mxu0 0.0
    %1615 = vmatpush1.msra.mxu0 0.0
    %1616 = vmatprep.subr.mxu0 0.0
    %1617 = vmatpush1.msra.mxu0 0.0
    %1618 = vmatprep.subr.mxu0 0.0
    %1619 = vmatpush1.msra.mxu0 0.0
    %1620 = vmatprep.subr.mxu0 0.0
    %1621 = vmatpush1.msra.mxu0 0.0
    %1622 = vmatprep.subr.mxu0 0.0
    %1623 = vmatpush1.msra.mxu0 0.0
    %1624 = vmatprep.subr.mxu0 0.0
    %1625 = vmatpush1.msra.mxu0 0.0
    %1626 = vmatprep.subr.mxu0 0.0
    %1627 = vmatpush1.msra.mxu0 0.0
    %1628 = vmatprep.subr.mxu0 0.0
    %1629 = vmatpush1.msra.mxu0 0.0
    %1630 = vmatprep.subr.mxu0 0.0
    %1631 = vmatpush1.msra.mxu0 0.0
    %1632 = vmatprep.subr.mxu0 0.0
    %1633 = vmatpush1.msra.mxu0 0.0
    %1634 = vmatprep.subr.mxu0 0.0
    %1635 = vmatpush1.msra.mxu0 0.0
    %1636 = vmatprep.subr.mxu0 0.0
    %1637 = vmatpush1.msra.mxu0 0.0
    %1638 = vmatprep.subr.mxu0 0.0
    %1639 = vmatpush1.msra.mxu0 0.0
    %1640 = vmatprep.subr.mxu0 0.0
    %1641 = vmatpush1.msra.mxu0 0.0
    %1642 = vmatprep.mubr.f32.mxu0 0.0
    %v1643 = vand.u32 %v74, 4294901760
    %1644 = vmatmul.mubr.f32.gmra.mrb[0].mxu0 %v1643
    %v1645 = vpop.f32.mrb[0].mxu0
    %v1646 = vadd.f32 %v1531, %v1645
    %v1647 = vpop.f32.mrb[0].mxu0
    %1648 = vmatprep.mubr.f32.mxu0 0.0
    %v1649 = vand.u32 %v77, 4294901760
    %1650 = vmatmul.mubr.f32.gmra.mrb[0].mxu0 %v1649
    %v1651 = vpop.f32.mrb[0].mxu0
    %v1652 = vadd.f32 %v1537, %v1651
    %v1653 = vpop.f32.mrb[0].mxu0
    %1654 = vmatprep.mubr.f32.mxu0 0.0
    %v1655 = vand.u32 %v80, 4294901760
    %1656 = vmatmul.mubr.f32.gmra.mrb[0].mxu0 %v1655
    %v1657 = vpop.f32.mrb[0].mxu0
    %v1658 = vadd.f32 %v1543, %v1657
    %v1659 = vpop.f32.mrb[0].mxu0
    %1660 = vmatprep.mubr.f32.mxu0 0.0
    %v1661 = vand.u32 %v83, 4294901760
    %1662 = vmatmul.mubr.f32.gmra.mrb[0].mxu0 %v1661
    %v1663 = vpop.f32.mrb[0].mxu0
    %v1664 = vadd.f32 %v1549, %v1663
    %v1665 = vpop.f32.mrb[0].mxu0
    %1666 = vmatprep.mubr.f32.mxu0 0.0
    %v1667 = vand.u32 %v86, 4294901760
    %1668 = vmatmul.mubr.f32.gmra.mrb[0].mxu0 %v1667
    %v1669 = vpop.f32.mrb[0].mxu0
    %v1670 = vadd.f32 %v1555, %v1669
    %v1671 = vpop.f32.mrb[0].mxu0
    %1672 = vmatprep.mubr.f32.mxu0 0.0
    %v1673 = vand.u32 %v89, 4294901760
    %1674 = vmatmul.mubr.f32.gmra.mrb[0].mxu0 %v1673
    %v1675 = vpop.f32.mrb[0].mxu0
    %v1676 = vadd.f32 %v1561, %v1675
    %v1677 = vpop.f32.mrb[0].mxu0
    %1678 = vmatprep.mubr.f32.mxu0 0.0
    %v1679 = vand.u32 %v92, 4294901760
    %1680 = vmatmul.mubr.f32.gmra.mrb[0].mxu0 %v1679
    %v1681 = vpop.f32.mrb[0].mxu0
    %v1682 = vadd.f32 %v1567, %v1681
    %v1683 = vpop.f32.mrb[0].mxu0
    %1684 = vmatprep.mubr.f32.mxu0 0.0
    %v1685 = vand.u32 %v95, 4294901760
    %1686 = vmatmul.mubr.f32.gmra.mrb[0].mxu0 %v1685
    %v1687 = vpop.f32.mrb[0].mxu0
    %v1688 = vadd.f32 %v1573, %v1687
    %v1689 = vpop.f32.mrb[0].mxu0
    %1690 = vdwg.mxu0
    %v1691 = vld [vmem:[%s4] sm:$0x7]
    %v1693 = vlaneseq
    %v1694 = vshrl.u32 %v1693, 7
    %v1695 = vsub.s32 0, %v1694
    %v1696 = vrot.slane %v1691, %v1695
    %v1697 = vlaneseq
    %v1698 = vshrl.u32 %v1697, 7
    %v1699 = vsub.s32 1, %v1698
    %v1700 = vrot.slane %v1691, %v1699
    %v1701 = vlaneseq
    %v1702 = vshrl.u32 %v1701, 7
    %v1703 = vsub.s32 2, %v1702
    %v1704 = vrot.slane %v1691, %v1703
    %v1708 = vand.u32 %v50, 4294901760
    %1709 = vmatprep.subr.mxu0 %v1708
    %v1710 = vand.u32 %v49, 4294901760
    %1711 = vmatpush1.msra.mxu0 %v1710
    %v1712 = vand.u32 %v53, 4294901760
    %1713 = vmatprep.subr.mxu0 %v1712
    %v1714 = vand.u32 %v52, 4294901760
    %1715 = vmatpush1.msra.mxu0 %v1714
    %1716 = vmatprep.subr.mxu0 0.0
    %1717 = vmatpush1.msra.mxu0 0.0
    %1718 = vmatprep.subr.mxu0 0.0
    %1719 = vmatpush1.msra.mxu0 0.0
    %1720 = vmatprep.subr.mxu0 0.0
    %1721 = vmatpush1.msra.mxu0 0.0
    %1722 = vmatprep.subr.mxu0 0.0
    %1723 = vmatpush1.msra.mxu0 0.0
    %1724 = vmatprep.subr.mxu0 0.0
    %1725 = vmatpush1.msra.mxu0 0.0
    %1726 = vmatprep.subr.mxu0 0.0
    %1727 = vmatpush1.msra.mxu0 0.0
    %1728 = vmatprep.subr.mxu0 0.0
    %1729 = vmatpush1.msra.mxu0 0.0
    %1730 = vmatprep.subr.mxu0 0.0
    %1731 = vmatpush1.msra.mxu0 0.0
    %1732 = vmatprep.subr.mxu0 0.0
    %1733 = vmatpush1.msra.mxu0 0.0
    %1734 = vmatprep.subr.mxu0 0.0
    %1735 = vmatpush1.msra.mxu0 0.0
    %1736 = vmatprep.subr.mxu0 0.0
    %1737 = vmatpush1.msra.mxu0 0.0
    %1738 = vmatprep.subr.mxu0 0.0
    %1739 = vmatpush1.msra.mxu0 0.0
    %1740 = vmatprep.subr.mxu0 0.0
    %1741 = vmatpush1.msra.mxu0 0.0
    %1742 = vmatprep.subr.mxu0 0.0
    %1743 = vmatpush1.msra.mxu0 0.0
    %1744 = vmatprep.subr.mxu0 0.0
    %1745 = vmatpush1.msra.mxu0 0.0
    %1746 = vmatprep.subr.mxu0 0.0
    %1747 = vmatpush1.msra.mxu0 0.0
    %1748 = vmatprep.subr.mxu0 0.0
    %1749 = vmatpush1.msra.mxu0 0.0
    %1750 = vmatprep.subr.mxu0 0.0
    %1751 = vmatpush1.msra.mxu0 0.0
    %1752 = vmatprep.subr.mxu0 0.0
    %1753 = vmatpush1.msra.mxu0 0.0
    %1754 = vmatprep.subr.mxu0 0.0
    %1755 = vmatpush1.msra.mxu0 0.0
    %1756 = vmatprep.subr.mxu0 0.0
    %1757 = vmatpush1.msra.mxu0 0.0
    %1758 = vmatprep.subr.mxu0 0.0
    %1759 = vmatpush1.msra.mxu0 0.0
    %1760 = vmatprep.subr.mxu0 0.0
    %1761 = vmatpush1.msra.mxu0 0.0
    %1762 = vmatprep.subr.mxu0 0.0
    %1763 = vmatpush1.msra.mxu0 0.0
    %1764 = vmatprep.subr.mxu0 0.0
    %1765 = vmatpush1.msra.mxu0 0.0
    %1766 = vmatprep.subr.mxu0 0.0
    %1767 = vmatpush1.msra.mxu0 0.0
    %1768 = vmatprep.subr.mxu0 0.0
    %1769 = vmatpush1.msra.mxu0 0.0
    %1770 = vmatprep.subr.mxu0 0.0
    %1771 = vmatpush1.msra.mxu0 0.0
    %1772 = vmatprep.subr.mxu0 0.0
    %1773 = vmatpush1.msra.mxu0 0.0
    %1774 = vmatprep.subr.mxu0 0.0
    %1775 = vmatpush1.msra.mxu0 0.0
    %1776 = vmatprep.mubr.f32.mxu0 0.0
    %v1777 = vand.u32 %v74, 4294901760
    %v1778 = vsub.f32 %v74, %v1777
    %v1779 = vand.u32 %v1778, 4294901760
    %v1780 = vsub.f32 %v1778, %v1779
    %v1781 = vand.u32 %v1780, 4294901760
    %1782 = vmatmul.mubr.f32.gmra.mrb[0].mxu0 %v1781
    %v1783 = vpop.f32.mrb[0].mxu0
    %v1784 = vadd.f32 %v1696, %v1783
    %v1785 = vpop.f32.mrb[0].mxu0
    %v1786 = vadd.f32 %v1700, %v1785
    %1787 = vmatprep.mubr.f32.mxu0 0.0
    %v1788 = vand.u32 %v77, 4294901760
    %v1789 = vsub.f32 %v77, %v1788
    %v1790 = vand.u32 %v1789, 4294901760
    %v1791 = vsub.f32 %v1789, %v1790
    %v1792 = vand.u32 %v1791, 4294901760
    %1793 = vmatmul.mubr.f32.gmra.mrb[0].mxu0 %v1792
    %v1794 = vpop.f32.mrb[0].mxu0
    %v1795 = vadd.f32 %v1696, %v1794
    %v1796 = vpop.f32.mrb[0].mxu0
    %v1797 = vadd.f32 %v1700, %v1796
    %1798 = vmatprep.mubr.f32.mxu0 0.0
    %v1799 = vand.u32 %v80, 4294901760
    %v1800 = vsub.f32 %v80, %v1799
    %v1801 = vand.u32 %v1800, 4294901760
    %v1802 = vsub.f32 %v1800, %v1801
    %v1803 = vand.u32 %v1802, 4294901760
    %1804 = vmatmul.mubr.f32.gmra.mrb[0].mxu0 %v1803
    %v1805 = vpop.f32.mrb[0].mxu0
    %v1806 = vadd.f32 %v1696, %v1805
    %v1807 = vpop.f32.mrb[0].mxu0
    %v1808 = vadd.f32 %v1700, %v1807
    %1809 = vmatprep.mubr.f32.mxu0 0.0
    %v1810 = vand.u32 %v83, 4294901760
    %v1811 = vsub.f32 %v83, %v1810
    %v1812 = vand.u32 %v1811, 4294901760
    %v1813 = vsub.f32 %v1811, %v1812
    %v1814 = vand.u32 %v1813, 4294901760
    %1815 = vmatmul.mubr.f32.gmra.mrb[0].mxu0 %v1814
    %v1816 = vpop.f32.mrb[0].mxu0
    %v1817 = vadd.f32 %v1696, %v1816
    %v1818 = vpop.f32.mrb[0].mxu0
    %v1819 = vadd.f32 %v1700, %v1818
    %1820 = vmatprep.mubr.f32.mxu0 0.0
    %v1821 = vand.u32 %v86, 4294901760
    %v1822 = vsub.f32 %v86, %v1821
    %v1823 = vand.u32 %v1822, 4294901760
    %v1824 = vsub.f32 %v1822, %v1823
    %v1825 = vand.u32 %v1824, 4294901760
    %1826 = vmatmul.mubr.f32.gmra.mrb[0].mxu0 %v1825
    %v1827 = vpop.f32.mrb[0].mxu0
    %v1828 = vadd.f32 %v1696, %v1827
    %v1829 = vpop.f32.mrb[0].mxu0
    %v1830 = vadd.f32 %v1700, %v1829
    %1831 = vmatprep.mubr.f32.mxu0 0.0
    %v1832 = vand.u32 %v89, 4294901760
    %v1833 = vsub.f32 %v89, %v1832
    %v1834 = vand.u32 %v1833, 4294901760
    %v1835 = vsub.f32 %v1833, %v1834
    %v1836 = vand.u32 %v1835, 4294901760
    %1837 = vmatmul.mubr.f32.gmra.mrb[0].mxu0 %v1836
    %v1838 = vpop.f32.mrb[0].mxu0
    %v1839 = vadd.f32 %v1696, %v1838
    %v1840 = vpop.f32.mrb[0].mxu0
    %v1841 = vadd.f32 %v1700, %v1840
    %1842 = vmatprep.mubr.f32.mxu0 0.0
    %v1843 = vand.u32 %v92, 4294901760
    %v1844 = vsub.f32 %v92, %v1843
    %v1845 = vand.u32 %v1844, 4294901760
    %v1846 = vsub.f32 %v1844, %v1845
    %v1847 = vand.u32 %v1846, 4294901760
    %1848 = vmatmul.mubr.f32.gmra.mrb[0].mxu0 %v1847
    %v1849 = vpop.f32.mrb[0].mxu0
    %v1850 = vadd.f32 %v1696, %v1849
    %v1851 = vpop.f32.mrb[0].mxu0
    %v1852 = vadd.f32 %v1700, %v1851
    %1853 = vmatprep.mubr.f32.mxu0 0.0
    %v1854 = vand.u32 %v95, 4294901760
    %v1855 = vsub.f32 %v95, %v1854
    %v1856 = vand.u32 %v1855, 4294901760
    %v1857 = vsub.f32 %v1855, %v1856
    %v1858 = vand.u32 %v1857, 4294901760
    %1859 = vmatmul.mubr.f32.gmra.mrb[0].mxu0 %v1858
    %v1860 = vpop.f32.mrb[0].mxu0
    %v1861 = vadd.f32 %v1696, %v1860
    %v1862 = vpop.f32.mrb[0].mxu0
    %v1863 = vadd.f32 %v1700, %v1862
    %1864 = vdwg.mxu0
    %v1865 = vand.u32 %v50, 4294901760
    %v1866 = vsub.f32 %v50, %v1865
    %v1867 = vand.u32 %v1866, 4294901760
    %v1868 = vsub.f32 %v1866, %v1867
    %v1869 = vand.u32 %v1868, 4294901760
    %1870 = vmatprep.subr.mxu0 %v1869
    %v1871 = vand.u32 %v49, 4294901760
    %v1872 = vsub.f32 %v49, %v1871
    %v1873 = vand.u32 %v1872, 4294901760
    %v1874 = vsub.f32 %v1872, %v1873
    %v1875 = vand.u32 %v1874, 4294901760
    %1876 = vmatpush1.msra.mxu0 %v1875
    %v1877 = vand.u32 %v53, 4294901760
    %v1878 = vsub.f32 %v53, %v1877
    %v1879 = vand.u32 %v1878, 4294901760
    %v1880 = vsub.f32 %v1878, %v1879
    %v1881 = vand.u32 %v1880, 4294901760
    %1882 = vmatprep.subr.mxu0 %v1881
    %v1883 = vand.u32 %v52, 4294901760
    %v1884 = vsub.f32 %v52, %v1883
    %v1885 = vand.u32 %v1884, 4294901760
    %v1886 = vsub.f32 %v1884, %v1885
    %v1887 = vand.u32 %v1886, 4294901760
    %1888 = vmatpush1.msra.mxu0 %v1887
    %1889 = vmatprep.subr.mxu0 0.0
    %1890 = vmatpush1.msra.mxu0 0.0
    %1891 = vmatprep.subr.mxu0 0.0
    %1892 = vmatpush1.msra.mxu0 0.0
    %1893 = vmatprep.subr.mxu0 0.0
    %1894 = vmatpush1.msra.mxu0 0.0
    %1895 = vmatprep.subr.mxu0 0.0
    %1896 = vmatpush1.msra.mxu0 0.0
    %1897 = vmatprep.subr.mxu0 0.0
    %1898 = vmatpush1.msra.mxu0 0.0
    %1899 = vmatprep.subr.mxu0 0.0
    %1900 = vmatpush1.msra.mxu0 0.0
    %1901 = vmatprep.subr.mxu0 0.0
    %1902 = vmatpush1.msra.mxu0 0.0
    %1903 = vmatprep.subr.mxu0 0.0
    %1904 = vmatpush1.msra.mxu0 0.0
    %1905 = vmatprep.subr.mxu0 0.0
    %1906 = vmatpush1.msra.mxu0 0.0
    %1907 = vmatprep.subr.mxu0 0.0
    %1908 = vmatpush1.msra.mxu0 0.0
    %1909 = vmatprep.subr.mxu0 0.0
    %1910 = vmatpush1.msra.mxu0 0.0
    %1911 = vmatprep.subr.mxu0 0.0
    %1912 = vmatpush1.msra.mxu0 0.0
    %1913 = vmatprep.subr.mxu0 0.0
    %1914 = vmatpush1.msra.mxu0 0.0
    %1915 = vmatprep.subr.mxu0 0.0
    %1916 = vmatpush1.msra.mxu0 0.0
    %1917 = vmatprep.subr.mxu0 0.0
    %1918 = vmatpush1.msra.mxu0 0.0
    %1919 = vmatprep.subr.mxu0 0.0
    %1920 = vmatpush1.msra.mxu0 0.0
    %1921 = vmatprep.subr.mxu0 0.0
    %1922 = vmatpush1.msra.mxu0 0.0
    %1923 = vmatprep.subr.mxu0 0.0
    %1924 = vmatpush1.msra.mxu0 0.0
    %1925 = vmatprep.subr.mxu0 0.0
    %1926 = vmatpush1.msra.mxu0 0.0
    %1927 = vmatprep.subr.mxu0 0.0
    %1928 = vmatpush1.msra.mxu0 0.0
    %1929 = vmatprep.subr.mxu0 0.0
    %1930 = vmatpush1.msra.mxu0 0.0
    %1931 = vmatprep.subr.mxu0 0.0
    %1932 = vmatpush1.msra.mxu0 0.0
    %1933 = vmatprep.subr.mxu0 0.0
    %1934 = vmatpush1.msra.mxu0 0.0
    %1935 = vmatprep.subr.mxu0 0.0
    %1936 = vmatpush1.msra.mxu0 0.0
    %1937 = vmatprep.subr.mxu0 0.0
    %1938 = vmatpush1.msra.mxu0 0.0
    %1939 = vmatprep.subr.mxu0 0.0
    %1940 = vmatpush1.msra.mxu0 0.0
    %1941 = vmatprep.subr.mxu0 0.0
    %1942 = vmatpush1.msra.mxu0 0.0
    %1943 = vmatprep.subr.mxu0 0.0
    %1944 = vmatpush1.msra.mxu0 0.0
    %1945 = vmatprep.subr.mxu0 0.0
    %1946 = vmatpush1.msra.mxu0 0.0
    %1947 = vmatprep.subr.mxu0 0.0
    %1948 = vmatpush1.msra.mxu0 0.0
    %1949 = vmatprep.mubr.f32.mxu0 0.0
    %v1950 = vand.u32 %v74, 4294901760
    %1951 = vmatmul.mubr.f32.gmra.mrb[0].mxu0 %v1950
    %v1952 = vpop.f32.mrb[0].mxu0
    %v1953 = vadd.f32 %v1784, %v1952
    %v1954 = vpop.f32.mrb[0].mxu0
    %v1955 = vadd.f32 %v1786, %v1954
    %1956 = vmatprep.mubr.f32.mxu0 0.0
    %v1957 = vand.u32 %v77, 4294901760
    %1958 = vmatmul.mubr.f32.gmra.mrb[0].mxu0 %v1957
    %v1959 = vpop.f32.mrb[0].mxu0
    %v1960 = vadd.f32 %v1795, %v1959
    %v1961 = vpop.f32.mrb[0].mxu0
    %v1962 = vadd.f32 %v1797, %v1961
    %1963 = vmatprep.mubr.f32.mxu0 0.0
    %v1964 = vand.u32 %v80, 4294901760
    %1965 = vmatmul.mubr.f32.gmra.mrb[0].mxu0 %v1964
    %v1966 = vpop.f32.mrb[0].mxu0
    %v1967 = vadd.f32 %v1806, %v1966
    %v1968 = vpop.f32.mrb[0].mxu0
    %v1969 = vadd.f32 %v1808, %v1968
    %1970 = vmatprep.mubr.f32.mxu0 0.0
    %v1971 = vand.u32 %v83, 4294901760
    %1972 = vmatmul.mubr.f32.gmra.mrb[0].mxu0 %v1971
    %v1973 = vpop.f32.mrb[0].mxu0
    %v1974 = vadd.f32 %v1817, %v1973
    %v1975 = vpop.f32.mrb[0].mxu0
    %v1976 = vadd.f32 %v1819, %v1975
    %1977 = vmatprep.mubr.f32.mxu0 0.0
    %v1978 = vand.u32 %v86, 4294901760
    %1979 = vmatmul.mubr.f32.gmra.mrb[0].mxu0 %v1978
    %v1980 = vpop.f32.mrb[0].mxu0
    %v1981 = vadd.f32 %v1828, %v1980
    %v1982 = vpop.f32.mrb[0].mxu0
    %v1983 = vadd.f32 %v1830, %v1982
    %1984 = vmatprep.mubr.f32.mxu0 0.0
    %v1985 = vand.u32 %v89, 4294901760
    %1986 = vmatmul.mubr.f32.gmra.mrb[0].mxu0 %v1985
    %v1987 = vpop.f32.mrb[0].mxu0
    %v1988 = vadd.f32 %v1839, %v1987
    %v1989 = vpop.f32.mrb[0].mxu0
    %v1990 = vadd.f32 %v1841, %v1989
    %1991 = vmatprep.mubr.f32.mxu0 0.0
    %v1992 = vand.u32 %v92, 4294901760
    %1993 = vmatmul.mubr.f32.gmra.mrb[0].mxu0 %v1992
    %v1994 = vpop.f32.mrb[0].mxu0
    %v1995 = vadd.f32 %v1850, %v1994
    %v1996 = vpop.f32.mrb[0].mxu0
    %v1997 = vadd.f32 %v1852, %v1996
    %1998 = vmatprep.mubr.f32.mxu0 0.0
    %v1999 = vand.u32 %v95, 4294901760
    %2000 = vmatmul.mubr.f32.gmra.mrb[0].mxu0 %v1999
    %v2001 = vpop.f32.mrb[0].mxu0
    %v2002 = vadd.f32 %v1861, %v2001
    %v2003 = vpop.f32.mrb[0].mxu0
    %v2004 = vadd.f32 %v1863, %v2003
    %2005 = vdwg.mxu0
    %v2006 = vand.u32 %v50, 4294901760
    %v2007 = vsub.f32 %v50, %v2006
    %2008 = vmatprep.subr.mxu0 %v2007
    %v2009 = vand.u32 %v49, 4294901760
    %v2010 = vsub.f32 %v49, %v2009
    %2011 = vmatpush1.msra.mxu0 %v2010
    %v2012 = vand.u32 %v53, 4294901760
    %v2013 = vsub.f32 %v53, %v2012
    %2014 = vmatprep.subr.mxu0 %v2013
    %v2015 = vand.u32 %v52, 4294901760
    %v2016 = vsub.f32 %v52, %v2015
    %2017 = vmatpush1.msra.mxu0 %v2016
    %2018 = vmatprep.subr.mxu0 0.0
    %2019 = vmatpush1.msra.mxu0 0.0
    %2020 = vmatprep.subr.mxu0 0.0
    %2021 = vmatpush1.msra.mxu0 0.0
    %2022 = vmatprep.subr.mxu0 0.0
    %2023 = vmatpush1.msra.mxu0 0.0
    %2024 = vmatprep.subr.mxu0 0.0
    %2025 = vmatpush1.msra.mxu0 0.0
    %2026 = vmatprep.subr.mxu0 0.0
    %2027 = vmatpush1.msra.mxu0 0.0
    %2028 = vmatprep.subr.mxu0 0.0
    %2029 = vmatpush1.msra.mxu0 0.0
    %2030 = vmatprep.subr.mxu0 0.0
    %2031 = vmatpush1.msra.mxu0 0.0
    %2032 = vmatprep.subr.mxu0 0.0
    %2033 = vmatpush1.msra.mxu0 0.0
    %2034 = vmatprep.subr.mxu0 0.0
    %2035 = vmatpush1.msra.mxu0 0.0
    %2036 = vmatprep.subr.mxu0 0.0
    %2037 = vmatpush1.msra.mxu0 0.0
    %2038 = vmatprep.subr.mxu0 0.0
    %2039 = vmatpush1.msra.mxu0 0.0
    %2040 = vmatprep.subr.mxu0 0.0
    %2041 = vmatpush1.msra.mxu0 0.0
    %2042 = vmatprep.subr.mxu0 0.0
    %2043 = vmatpush1.msra.mxu0 0.0
    %2044 = vmatprep.subr.mxu0 0.0
    %2045 = vmatpush1.msra.mxu0 0.0
    %2046 = vmatprep.subr.mxu0 0.0
    %2047 = vmatpush1.msra.mxu0 0.0
    %2048 = vmatprep.subr.mxu0 0.0
    %2049 = vmatpush1.msra.mxu0 0.0
    %2050 = vmatprep.subr.mxu0 0.0
    %2051 = vmatpush1.msra.mxu0 0.0
    %2052 = vmatprep.subr.mxu0 0.0
    %2053 = vmatpush1.msra.mxu0 0.0
    %2054 = vmatprep.subr.mxu0 0.0
    %2055 = vmatpush1.msra.mxu0 0.0
    %2056 = vmatprep.subr.mxu0 0.0
    %2057 = vmatpush1.msra.mxu0 0.0
    %2058 = vmatprep.subr.mxu0 0.0
    %2059 = vmatpush1.msra.mxu0 0.0
    %2060 = vmatprep.subr.mxu0 0.0
    %2061 = vmatpush1.msra.mxu0 0.0
    %2062 = vmatprep.subr.mxu0 0.0
    %2063 = vmatpush1.msra.mxu0 0.0
    %2064 = vmatprep.subr.mxu0 0.0
    %2065 = vmatpush1.msra.mxu0 0.0
    %2066 = vmatprep.subr.mxu0 0.0
    %2067 = vmatpush1.msra.mxu0 0.0
    %2068 = vmatprep.subr.mxu0 0.0
    %2069 = vmatpush1.msra.mxu0 0.0
    %2070 = vmatprep.subr.mxu0 0.0
    %2071 = vmatpush1.msra.mxu0 0.0
    %2072 = vmatprep.subr.mxu0 0.0
    %2073 = vmatpush1.msra.mxu0 0.0
    %2074 = vmatprep.subr.mxu0 0.0
    %2075 = vmatpush1.msra.mxu0 0.0
    %2076 = vmatprep.subr.mxu0 0.0
    %2077 = vmatpush1.msra.mxu0 0.0
    %2078 = vmatprep.mubr.f32.mxu0 0.0
    %v2079 = vand.u32 %v74, 4294901760
    %v2080 = vsub.f32 %v74, %v2079
    %2081 = vmatmul.mubr.f32.gmra.mrb[0].mxu0 %v2080
    %v2082 = vpop.f32.mrb[0].mxu0
    %v2083 = vadd.f32 %v1953, %v2082
    %v2084 = vpop.f32.mrb[0].mxu0
    %v2085 = vadd.f32 %v1955, %v2084
    %2086 = vmatprep.mubr.f32.mxu0 0.0
    %v2087 = vand.u32 %v77, 4294901760
    %v2088 = vsub.f32 %v77, %v2087
    %2089 = vmatmul.mubr.f32.gmra.mrb[0].mxu0 %v2088
    %v2090 = vpop.f32.mrb[0].mxu0
    %v2091 = vadd.f32 %v1960, %v2090
    %v2092 = vpop.f32.mrb[0].mxu0
    %v2093 = vadd.f32 %v1962, %v2092
    %2094 = vmatprep.mubr.f32.mxu0 0.0
    %v2095 = vand.u32 %v80, 4294901760
    %v2096 = vsub.f32 %v80, %v2095
    %2097 = vmatmul.mubr.f32.gmra.mrb[0].mxu0 %v2096
    %v2098 = vpop.f32.mrb[0].mxu0
    %v2099 = vadd.f32 %v1967, %v2098
    %v2100 = vpop.f32.mrb[0].mxu0
    %v2101 = vadd.f32 %v1969, %v2100
    %2102 = vmatprep.mubr.f32.mxu0 0.0
    %v2103 = vand.u32 %v83, 4294901760
    %v2104 = vsub.f32 %v83, %v2103
    %2105 = vmatmul.mubr.f32.gmra.mrb[0].mxu0 %v2104
    %v2106 = vpop.f32.mrb[0].mxu0
    %v2107 = vadd.f32 %v1974, %v2106
    %v2108 = vpop.f32.mrb[0].mxu0
    %v2109 = vadd.f32 %v1976, %v2108
    %2110 = vmatprep.mubr.f32.mxu0 0.0
    %v2111 = vand.u32 %v86, 4294901760
    %v2112 = vsub.f32 %v86, %v2111
    %2113 = vmatmul.mubr.f32.gmra.mrb[0].mxu0 %v2112
    %v2114 = vpop.f32.mrb[0].mxu0
    %v2115 = vadd.f32 %v1981, %v2114
    %v2116 = vpop.f32.mrb[0].mxu0
    %v2117 = vadd.f32 %v1983, %v2116
    %2118 = vmatprep.mubr.f32.mxu0 0.0
    %v2119 = vand.u32 %v89, 4294901760
    %v2120 = vsub.f32 %v89, %v2119
    %2121 = vmatmul.mubr.f32.gmra.mrb[0].mxu0 %v2120
    %v2122 = vpop.f32.mrb[0].mxu0
    %v2123 = vadd.f32 %v1988, %v2122
    %v2124 = vpop.f32.mrb[0].mxu0
    %v2125 = vadd.f32 %v1990, %v2124
    %2126 = vmatprep.mubr.f32.mxu0 0.0
    %v2127 = vand.u32 %v92, 4294901760
    %v2128 = vsub.f32 %v92, %v2127
    %2129 = vmatmul.mubr.f32.gmra.mrb[0].mxu0 %v2128
    %v2130 = vpop.f32.mrb[0].mxu0
    %v2131 = vadd.f32 %v1995, %v2130
    %v2132 = vpop.f32.mrb[0].mxu0
    %v2133 = vadd.f32 %v1997, %v2132
    %2134 = vmatprep.mubr.f32.mxu0 0.0
    %v2135 = vand.u32 %v95, 4294901760
    %v2136 = vsub.f32 %v95, %v2135
    %2137 = vmatmul.mubr.f32.gmra.mrb[0].mxu0 %v2136
    %v2138 = vpop.f32.mrb[0].mxu0
    %v2139 = vadd.f32 %v2002, %v2138
    %v2140 = vpop.f32.mrb[0].mxu0
    %v2141 = vadd.f32 %v2004, %v2140
    %2142 = vdwg.mxu0
    %v2143 = vand.u32 %v50, 4294901760
    %2144 = vmatprep.subr.mxu0 %v2143
    %v2145 = vand.u32 %v49, 4294901760
    %2146 = vmatpush1.msra.mxu0 %v2145
    %v2147 = vand.u32 %v53, 4294901760
    %2148 = vmatprep.subr.mxu0 %v2147
    %v2149 = vand.u32 %v52, 4294901760
    %2150 = vmatpush1.msra.mxu0 %v2149
    %2151 = vmatprep.subr.mxu0 0.0
    %2152 = vmatpush1.msra.mxu0 0.0
    %2153 = vmatprep.subr.mxu0 0.0
    %2154 = vmatpush1.msra.mxu0 0.0
    %2155 = vmatprep.subr.mxu0 0.0
    %2156 = vmatpush1.msra.mxu0 0.0
    %2157 = vmatprep.subr.mxu0 0.0
    %2158 = vmatpush1.msra.mxu0 0.0
    %2159 = vmatprep.subr.mxu0 0.0
    %2160 = vmatpush1.msra.mxu0 0.0
    %2161 = vmatprep.subr.mxu0 0.0
    %2162 = vmatpush1.msra.mxu0 0.0
    %2163 = vmatprep.subr.mxu0 0.0
    %2164 = vmatpush1.msra.mxu0 0.0
    %2165 = vmatprep.subr.mxu0 0.0
    %2166 = vmatpush1.msra.mxu0 0.0
    %2167 = vmatprep.subr.mxu0 0.0
    %2168 = vmatpush1.msra.mxu0 0.0
    %2169 = vmatprep.subr.mxu0 0.0
    %2170 = vmatpush1.msra.mxu0 0.0
    %2171 = vmatprep.subr.mxu0 0.0
    %2172 = vmatpush1.msra.mxu0 0.0
    %2173 = vmatprep.subr.mxu0 0.0
    %2174 = vmatpush1.msra.mxu0 0.0
    %2175 = vmatprep.subr.mxu0 0.0
    %2176 = vmatpush1.msra.mxu0 0.0
    %2177 = vmatprep.subr.mxu0 0.0
    %2178 = vmatpush1.msra.mxu0 0.0
    %2179 = vmatprep.subr.mxu0 0.0
    %2180 = vmatpush1.msra.mxu0 0.0
    %2181 = vmatprep.subr.mxu0 0.0
    %2182 = vmatpush1.msra.mxu0 0.0
    %2183 = vmatprep.subr.mxu0 0.0
    %2184 = vmatpush1.msra.mxu0 0.0
    %2185 = vmatprep.subr.mxu0 0.0
    %2186 = vmatpush1.msra.mxu0 0.0
    %2187 = vmatprep.subr.mxu0 0.0
    %2188 = vmatpush1.msra.mxu0 0.0
    %2189 = vmatprep.subr.mxu0 0.0
    %2190 = vmatpush1.msra.mxu0 0.0
    %2191 = vmatprep.subr.mxu0 0.0
    %2192 = vmatpush1.msra.mxu0 0.0
    %2193 = vmatprep.subr.mxu0 0.0
    %2194 = vmatpush1.msra.mxu0 0.0
    %2195 = vmatprep.subr.mxu0 0.0
    %2196 = vmatpush1.msra.mxu0 0.0
    %2197 = vmatprep.subr.mxu0 0.0
    %2198 = vmatpush1.msra.mxu0 0.0
    %2199 = vmatprep.subr.mxu0 0.0
    %2200 = vmatpush1.msra.mxu0 0.0
    %2201 = vmatprep.subr.mxu0 0.0
    %2202 = vmatpush1.msra.mxu0 0.0
    %2203 = vmatprep.subr.mxu0 0.0
    %2204 = vmatpush1.msra.mxu0 0.0
    %2205 = vmatprep.subr.mxu0 0.0
    %2206 = vmatpush1.msra.mxu0 0.0
    %2207 = vmatprep.subr.mxu0 0.0
    %2208 = vmatpush1.msra.mxu0 0.0
    %2209 = vmatprep.subr.mxu0 0.0
    %2210 = vmatpush1.msra.mxu0 0.0
    %2211 = vmatprep.mubr.f32.mxu0 0.0
    %v2212 = vand.u32 %v74, 4294901760
    %v2213 = vsub.f32 %v74, %v2212
    %v2214 = vand.u32 %v2213, 4294901760
    %2215 = vmatmul.mubr.f32.gmra.mrb[0].mxu0 %v2214
    %v2216 = vpop.f32.mrb[0].mxu0
    %v2217 = vadd.f32 %v2083, %v2216
    %v2218 = vpop.f32.mrb[0].mxu0
    %v2219 = vadd.f32 %v2085, %v2218
    %2220 = vmatprep.mubr.f32.mxu0 0.0
    %v2221 = vand.u32 %v77, 4294901760
    %v2222 = vsub.f32 %v77, %v2221
    %v2223 = vand.u32 %v2222, 4294901760
    %2224 = vmatmul.mubr.f32.gmra.mrb[0].mxu0 %v2223
    %v2225 = vpop.f32.mrb[0].mxu0
    %v2226 = vadd.f32 %v2091, %v2225
    %v2227 = vpop.f32.mrb[0].mxu0
    %v2228 = vadd.f32 %v2093, %v2227
    %2229 = vmatprep.mubr.f32.mxu0 0.0
    %v2230 = vand.u32 %v80, 4294901760
    %v2231 = vsub.f32 %v80, %v2230
    %v2232 = vand.u32 %v2231, 4294901760
    %2233 = vmatmul.mubr.f32.gmra.mrb[0].mxu0 %v2232
    %v2234 = vpop.f32.mrb[0].mxu0
    %v2235 = vadd.f32 %v2099, %v2234
    %v2236 = vpop.f32.mrb[0].mxu0
    %v2237 = vadd.f32 %v2101, %v2236
    %2238 = vmatprep.mubr.f32.mxu0 0.0
    %v2239 = vand.u32 %v83, 4294901760
    %v2240 = vsub.f32 %v83, %v2239
    %v2241 = vand.u32 %v2240, 4294901760
    %2242 = vmatmul.mubr.f32.gmra.mrb[0].mxu0 %v2241
    %v2243 = vpop.f32.mrb[0].mxu0
    %v2244 = vadd.f32 %v2107, %v2243
    %v2245 = vpop.f32.mrb[0].mxu0
    %v2246 = vadd.f32 %v2109, %v2245
    %2247 = vmatprep.mubr.f32.mxu0 0.0
    %v2248 = vand.u32 %v86, 4294901760
    %v2249 = vsub.f32 %v86, %v2248
    %v2250 = vand.u32 %v2249, 4294901760
    %2251 = vmatmul.mubr.f32.gmra.mrb[0].mxu0 %v2250
    %v2252 = vpop.f32.mrb[0].mxu0
    %v2253 = vadd.f32 %v2115, %v2252
    %v2254 = vpop.f32.mrb[0].mxu0
    %v2255 = vadd.f32 %v2117, %v2254
    %2256 = vmatprep.mubr.f32.mxu0 0.0
    %v2257 = vand.u32 %v89, 4294901760
    %v2258 = vsub.f32 %v89, %v2257
    %v2259 = vand.u32 %v2258, 4294901760
    %2260 = vmatmul.mubr.f32.gmra.mrb[0].mxu0 %v2259
    %v2261 = vpop.f32.mrb[0].mxu0
    %v2262 = vadd.f32 %v2123, %v2261
    %v2263 = vpop.f32.mrb[0].mxu0
    %v2264 = vadd.f32 %v2125, %v2263
    %2265 = vmatprep.mubr.f32.mxu0 0.0
    %v2266 = vand.u32 %v92, 4294901760
    %v2267 = vsub.f32 %v92, %v2266
    %v2268 = vand.u32 %v2267, 4294901760
    %2269 = vmatmul.mubr.f32.gmra.mrb[0].mxu0 %v2268
    %v2270 = vpop.f32.mrb[0].mxu0
    %v2271 = vadd.f32 %v2131, %v2270
    %v2272 = vpop.f32.mrb[0].mxu0
    %v2273 = vadd.f32 %v2133, %v2272
    %2274 = vmatprep.mubr.f32.mxu0 0.0
    %v2275 = vand.u32 %v95, 4294901760
    %v2276 = vsub.f32 %v95, %v2275
    %v2277 = vand.u32 %v2276, 4294901760
    %2278 = vmatmul.mubr.f32.gmra.mrb[0].mxu0 %v2277
    %v2279 = vpop.f32.mrb[0].mxu0
    %v2280 = vadd.f32 %v2139, %v2279
    %v2281 = vpop.f32.mrb[0].mxu0
    %v2282 = vadd.f32 %v2141, %v2281
    %2283 = vdwg.mxu0
    %v2284 = vand.u32 %v50, 4294901760
    %v2285 = vsub.f32 %v50, %v2284
    %v2286 = vand.u32 %v2285, 4294901760
    %2287 = vmatprep.subr.mxu0 %v2286
    %v2288 = vand.u32 %v49, 4294901760
    %v2289 = vsub.f32 %v49, %v2288
    %v2290 = vand.u32 %v2289, 4294901760
    %2291 = vmatpush1.msra.mxu0 %v2290
    %v2292 = vand.u32 %v53, 4294901760
    %v2293 = vsub.f32 %v53, %v2292
    %v2294 = vand.u32 %v2293, 4294901760
    %2295 = vmatprep.subr.mxu0 %v2294
    %v2296 = vand.u32 %v52, 4294901760
    %v2297 = vsub.f32 %v52, %v2296
    %v2298 = vand.u32 %v2297, 4294901760
    %2299 = vmatpush1.msra.mxu0 %v2298
    %2300 = vmatprep.subr.mxu0 0.0
    %2301 = vmatpush1.msra.mxu0 0.0
    %2302 = vmatprep.subr.mxu0 0.0
    %2303 = vmatpush1.msra.mxu0 0.0
    %2304 = vmatprep.subr.mxu0 0.0
    %2305 = vmatpush1.msra.mxu0 0.0
    %2306 = vmatprep.subr.mxu0 0.0
    %2307 = vmatpush1.msra.mxu0 0.0
    %2308 = vmatprep.subr.mxu0 0.0
    %2309 = vmatpush1.msra.mxu0 0.0
    %2310 = vmatprep.subr.mxu0 0.0
    %2311 = vmatpush1.msra.mxu0 0.0
    %2312 = vmatprep.subr.mxu0 0.0
    %2313 = vmatpush1.msra.mxu0 0.0
    %2314 = vmatprep.subr.mxu0 0.0
    %2315 = vmatpush1.msra.mxu0 0.0
    %2316 = vmatprep.subr.mxu0 0.0
    %2317 = vmatpush1.msra.mxu0 0.0
    %2318 = vmatprep.subr.mxu0 0.0
    %2319 = vmatpush1.msra.mxu0 0.0
    %2320 = vmatprep.subr.mxu0 0.0
    %2321 = vmatpush1.msra.mxu0 0.0
    %2322 = vmatprep.subr.mxu0 0.0
    %2323 = vmatpush1.msra.mxu0 0.0
    %2324 = vmatprep.subr.mxu0 0.0
    %2325 = vmatpush1.msra.mxu0 0.0
    %2326 = vmatprep.subr.mxu0 0.0
    %2327 = vmatpush1.msra.mxu0 0.0
    %2328 = vmatprep.subr.mxu0 0.0
    %2329 = vmatpush1.msra.mxu0 0.0
    %2330 = vmatprep.subr.mxu0 0.0
    %2331 = vmatpush1.msra.mxu0 0.0
    %2332 = vmatprep.subr.mxu0 0.0
    %2333 = vmatpush1.msra.mxu0 0.0
    %2334 = vmatprep.subr.mxu0 0.0
    %2335 = vmatpush1.msra.mxu0 0.0
    %2336 = vmatprep.subr.mxu0 0.0
    %2337 = vmatpush1.msra.mxu0 0.0
    %2338 = vmatprep.subr.mxu0 0.0
    %2339 = vmatpush1.msra.mxu0 0.0
    %2340 = vmatprep.subr.mxu0 0.0
    %2341 = vmatpush1.msra.mxu0 0.0
    %2342 = vmatprep.subr.mxu0 0.0
    %2343 = vmatpush1.msra.mxu0 0.0
    %2344 = vmatprep.subr.mxu0 0.0
    %2345 = vmatpush1.msra.mxu0 0.0
    %2346 = vmatprep.subr.mxu0 0.0
    %2347 = vmatpush1.msra.mxu0 0.0
    %2348 = vmatprep.subr.mxu0 0.0
    %2349 = vmatpush1.msra.mxu0 0.0
    %2350 = vmatprep.subr.mxu0 0.0
    %2351 = vmatpush1.msra.mxu0 0.0
    %2352 = vmatprep.subr.mxu0 0.0
    %2353 = vmatpush1.msra.mxu0 0.0
    %2354 = vmatprep.subr.mxu0 0.0
    %2355 = vmatpush1.msra.mxu0 0.0
    %2356 = vmatprep.subr.mxu0 0.0
    %2357 = vmatpush1.msra.mxu0 0.0
    %2358 = vmatprep.subr.mxu0 0.0
    %2359 = vmatpush1.msra.mxu0 0.0
    %2360 = vmatprep.mubr.f32.mxu0 0.0
    %v2361 = vand.u32 %v74, 4294901760
    %2362 = vmatmul.mubr.f32.gmra.mrb[0].mxu0 %v2361
    %v2363 = vpop.f32.mrb[0].mxu0
    %v2364 = vadd.f32 %v2217, %v2363
    %v2365 = vpop.f32.mrb[0].mxu0
    %v2366 = vadd.f32 %v2219, %v2365
    %2367 = vmatprep.mubr.f32.mxu0 0.0
    %v2368 = vand.u32 %v77, 4294901760
    %2369 = vmatmul.mubr.f32.gmra.mrb[0].mxu0 %v2368
    %v2370 = vpop.f32.mrb[0].mxu0
    %v2371 = vadd.f32 %v2226, %v2370
    %v2372 = vpop.f32.mrb[0].mxu0
    %v2373 = vadd.f32 %v2228, %v2372
    %2374 = vmatprep.mubr.f32.mxu0 0.0
    %v2375 = vand.u32 %v80, 4294901760
    %2376 = vmatmul.mubr.f32.gmra.mrb[0].mxu0 %v2375
    %v2377 = vpop.f32.mrb[0].mxu0
    %v2378 = vadd.f32 %v2235, %v2377
    %v2379 = vpop.f32.mrb[0].mxu0
    %v2380 = vadd.f32 %v2237, %v2379
    %2381 = vmatprep.mubr.f32.mxu0 0.0
    %v2382 = vand.u32 %v83, 4294901760
    %2383 = vmatmul.mubr.f32.gmra.mrb[0].mxu0 %v2382
    %v2384 = vpop.f32.mrb[0].mxu0
    %v2385 = vadd.f32 %v2244, %v2384
    %v2386 = vpop.f32.mrb[0].mxu0
    %v2387 = vadd.f32 %v2246, %v2386
    %2388 = vmatprep.mubr.f32.mxu0 0.0
    %v2389 = vand.u32 %v86, 4294901760
    %2390 = vmatmul.mubr.f32.gmra.mrb[0].mxu0 %v2389
    %v2391 = vpop.f32.mrb[0].mxu0
    %v2392 = vadd.f32 %v2253, %v2391
    %v2393 = vpop.f32.mrb[0].mxu0
    %v2394 = vadd.f32 %v2255, %v2393
    %2395 = vmatprep.mubr.f32.mxu0 0.0
    %v2396 = vand.u32 %v89, 4294901760
    %2397 = vmatmul.mubr.f32.gmra.mrb[0].mxu0 %v2396
    %v2398 = vpop.f32.mrb[0].mxu0
    %v2399 = vadd.f32 %v2262, %v2398
    %v2400 = vpop.f32.mrb[0].mxu0
    %v2401 = vadd.f32 %v2264, %v2400
    %2402 = vmatprep.mubr.f32.mxu0 0.0
    %v2403 = vand.u32 %v92, 4294901760
    %2404 = vmatmul.mubr.f32.gmra.mrb[0].mxu0 %v2403
    %v2405 = vpop.f32.mrb[0].mxu0
    %v2406 = vadd.f32 %v2271, %v2405
    %v2407 = vpop.f32.mrb[0].mxu0
    %v2408 = vadd.f32 %v2273, %v2407
    %2409 = vmatprep.mubr.f32.mxu0 0.0
    %v2410 = vand.u32 %v95, 4294901760
    %2411 = vmatmul.mubr.f32.gmra.mrb[0].mxu0 %v2410
    %v2412 = vpop.f32.mrb[0].mxu0
    %v2413 = vadd.f32 %v2280, %v2412
    %v2414 = vpop.f32.mrb[0].mxu0
    %v2415 = vadd.f32 %v2282, %v2414
    %2416 = vdwg.mxu0
    %v2417 = vand.u32 %v50, 4294901760
    %2418 = vmatprep.subr.mxu0 %v2417
    %v2419 = vand.u32 %v49, 4294901760
    %2420 = vmatpush1.msra.mxu0 %v2419
    %v2421 = vand.u32 %v53, 4294901760
    %2422 = vmatprep.subr.mxu0 %v2421
    %v2423 = vand.u32 %v52, 4294901760
    %2424 = vmatpush1.msra.mxu0 %v2423
    %2425 = vmatprep.subr.mxu0 0.0
    %2426 = vmatpush1.msra.mxu0 0.0
    %2427 = vmatprep.subr.mxu0 0.0
    %2428 = vmatpush1.msra.mxu0 0.0
    %2429 = vmatprep.subr.mxu0 0.0
    %2430 = vmatpush1.msra.mxu0 0.0
    %2431 = vmatprep.subr.mxu0 0.0
    %2432 = vmatpush1.msra.mxu0 0.0
    %2433 = vmatprep.subr.mxu0 0.0
    %2434 = vmatpush1.msra.mxu0 0.0
    %2435 = vmatprep.subr.mxu0 0.0
    %2436 = vmatpush1.msra.mxu0 0.0
    %2437 = vmatprep.subr.mxu0 0.0
    %2438 = vmatpush1.msra.mxu0 0.0
    %2439 = vmatprep.subr.mxu0 0.0
    %2440 = vmatpush1.msra.mxu0 0.0
    %2441 = vmatprep.subr.mxu0 0.0
    %2442 = vmatpush1.msra.mxu0 0.0
    %2443 = vmatprep.subr.mxu0 0.0
    %2444 = vmatpush1.msra.mxu0 0.0
    %2445 = vmatprep.subr.mxu0 0.0
    %2446 = vmatpush1.msra.mxu0 0.0
    %2447 = vmatprep.subr.mxu0 0.0
    %2448 = vmatpush1.msra.mxu0 0.0
    %2449 = vmatprep.subr.mxu0 0.0
    %2450 = vmatpush1.msra.mxu0 0.0
    %2451 = vmatprep.subr.mxu0 0.0
    %2452 = vmatpush1.msra.mxu0 0.0
    %2453 = vmatprep.subr.mxu0 0.0
    %2454 = vmatpush1.msra.mxu0 0.0
    %2455 = vmatprep.subr.mxu0 0.0
    %2456 = vmatpush1.msra.mxu0 0.0
    %2457 = vmatprep.subr.mxu0 0.0
    %2458 = vmatpush1.msra.mxu0 0.0
    %2459 = vmatprep.subr.mxu0 0.0
    %2460 = vmatpush1.msra.mxu0 0.0
    %2461 = vmatprep.subr.mxu0 0.0
    %2462 = vmatpush1.msra.mxu0 0.0
    %2463 = vmatprep.subr.mxu0 0.0
    %2464 = vmatpush1.msra.mxu0 0.0
    %2465 = vmatprep.subr.mxu0 0.0
    %2466 = vmatpush1.msra.mxu0 0.0
    %2467 = vmatprep.subr.mxu0 0.0
    %2468 = vmatpush1.msra.mxu0 0.0
    %2469 = vmatprep.subr.mxu0 0.0
    %2470 = vmatpush1.msra.mxu0 0.0
    %2471 = vmatprep.subr.mxu0 0.0
    %2472 = vmatpush1.msra.mxu0 0.0
    %2473 = vmatprep.subr.mxu0 0.0
    %2474 = vmatpush1.msra.mxu0 0.0
    %2475 = vmatprep.subr.mxu0 0.0
    %2476 = vmatpush1.msra.mxu0 0.0
    %2477 = vmatprep.subr.mxu0 0.0
    %2478 = vmatpush1.msra.mxu0 0.0
    %2479 = vmatprep.subr.mxu0 0.0
    %2480 = vmatpush1.msra.mxu0 0.0
    %2481 = vmatprep.subr.mxu0 0.0
    %2482 = vmatpush1.msra.mxu0 0.0
    %2483 = vmatprep.subr.mxu0 0.0
    %2484 = vmatpush1.msra.mxu0 0.0
    %2485 = vmatprep.mubr.f32.mxu0 0.0
    %v2486 = vand.u32 %v74, 4294901760
    %2487 = vmatmul.mubr.f32.gmra.mrb[0].mxu0 %v2486
    %v2488 = vpop.f32.mrb[0].mxu0
    %v2489 = vadd.f32 %v2364, %v2488
    %v2490 = vpop.f32.mrb[0].mxu0
    %v2491 = vadd.f32 %v2366, %v2490
    %2492 = vmatprep.mubr.f32.mxu0 0.0
    %v2493 = vand.u32 %v77, 4294901760
    %2494 = vmatmul.mubr.f32.gmra.mrb[0].mxu0 %v2493
    %v2495 = vpop.f32.mrb[0].mxu0
    %v2496 = vadd.f32 %v2371, %v2495
    %v2497 = vpop.f32.mrb[0].mxu0
    %v2498 = vadd.f32 %v2373, %v2497
    %2499 = vmatprep.mubr.f32.mxu0 0.0
    %v2500 = vand.u32 %v80, 4294901760
    %2501 = vmatmul.mubr.f32.gmra.mrb[0].mxu0 %v2500
    %v2502 = vpop.f32.mrb[0].mxu0
    %v2503 = vadd.f32 %v2378, %v2502
    %v2504 = vpop.f32.mrb[0].mxu0
    %v2505 = vadd.f32 %v2380, %v2504
    %2506 = vmatprep.mubr.f32.mxu0 0.0
    %v2507 = vand.u32 %v83, 4294901760
    %2508 = vmatmul.mubr.f32.gmra.mrb[0].mxu0 %v2507
    %v2509 = vpop.f32.mrb[0].mxu0
    %v2510 = vadd.f32 %v2385, %v2509
    %v2511 = vpop.f32.mrb[0].mxu0
    %v2512 = vadd.f32 %v2387, %v2511
    %2513 = vmatprep.mubr.f32.mxu0 0.0
    %v2514 = vand.u32 %v86, 4294901760
    %2515 = vmatmul.mubr.f32.gmra.mrb[0].mxu0 %v2514
    %v2516 = vpop.f32.mrb[0].mxu0
    %v2517 = vadd.f32 %v2392, %v2516
    %v2518 = vpop.f32.mrb[0].mxu0
    %v2519 = vadd.f32 %v2394, %v2518
    %2520 = vmatprep.mubr.f32.mxu0 0.0
    %v2521 = vand.u32 %v89, 4294901760
    %2522 = vmatmul.mubr.f32.gmra.mrb[0].mxu0 %v2521
    %v2523 = vpop.f32.mrb[0].mxu0
    %v2524 = vadd.f32 %v2399, %v2523
    %v2525 = vpop.f32.mrb[0].mxu0
    %v2526 = vadd.f32 %v2401, %v2525
    %2527 = vmatprep.mubr.f32.mxu0 0.0
    %v2528 = vand.u32 %v92, 4294901760
    %2529 = vmatmul.mubr.f32.gmra.mrb[0].mxu0 %v2528
    %v2530 = vpop.f32.mrb[0].mxu0
    %v2531 = vadd.f32 %v2406, %v2530
    %v2532 = vpop.f32.mrb[0].mxu0
    %v2533 = vadd.f32 %v2408, %v2532
    %2534 = vmatprep.mubr.f32.mxu0 0.0
    %v2535 = vand.u32 %v95, 4294901760
    %2536 = vmatmul.mubr.f32.gmra.mrb[0].mxu0 %v2535
    %v2537 = vpop.f32.mrb[0].mxu0
    %v2538 = vadd.f32 %v2413, %v2537
    %v2539 = vpop.f32.mrb[0].mxu0
    %v2540 = vadd.f32 %v2415, %v2539
    %2541 = vdwg.mxu0
    %2542 = vmatprep.subr.mxu0 0.0
    %v2543 = vand.u32 %v51, 4294901760
    %2544 = vmatpush1.msra.mxu0 %v2543
    %2545 = vmatprep.subr.mxu0 0.0
    %v2546 = vand.u32 %v54, 4294901760
    %2547 = vmatpush1.msra.mxu0 %v2546
    %2548 = vmatprep.subr.mxu0 0.0
    %2549 = vmatpush1.msra.mxu0 0.0
    %2550 = vmatprep.subr.mxu0 0.0
    %2551 = vmatpush1.msra.mxu0 0.0
    %2552 = vmatprep.subr.mxu0 0.0
    %2553 = vmatpush1.msra.mxu0 0.0
    %2554 = vmatprep.subr.mxu0 0.0
    %2555 = vmatpush1.msra.mxu0 0.0
    %2556 = vmatprep.subr.mxu0 0.0
    %2557 = vmatpush1.msra.mxu0 0.0
    %2558 = vmatprep.subr.mxu0 0.0
    %2559 = vmatpush1.msra.mxu0 0.0
    %2560 = vmatprep.subr.mxu0 0.0
    %2561 = vmatpush1.msra.mxu0 0.0
    %2562 = vmatprep.subr.mxu0 0.0
    %2563 = vmatpush1.msra.mxu0 0.0
    %2564 = vmatprep.subr.mxu0 0.0
    %2565 = vmatpush1.msra.mxu0 0.0
    %2566 = vmatprep.subr.mxu0 0.0
    %2567 = vmatpush1.msra.mxu0 0.0
    %2568 = vmatprep.subr.mxu0 0.0
    %2569 = vmatpush1.msra.mxu0 0.0
    %2570 = vmatprep.subr.mxu0 0.0
    %2571 = vmatpush1.msra.mxu0 0.0
    %2572 = vmatprep.subr.mxu0 0.0
    %2573 = vmatpush1.msra.mxu0 0.0
    %2574 = vmatprep.subr.mxu0 0.0
    %2575 = vmatpush1.msra.mxu0 0.0
    %2576 = vmatprep.subr.mxu0 0.0
    %2577 = vmatpush1.msra.mxu0 0.0
    %2578 = vmatprep.subr.mxu0 0.0
    %2579 = vmatpush1.msra.mxu0 0.0
    %2580 = vmatprep.subr.mxu0 0.0
    %2581 = vmatpush1.msra.mxu0 0.0
    %2582 = vmatprep.subr.mxu0 0.0
    %2583 = vmatpush1.msra.mxu0 0.0
    %2584 = vmatprep.subr.mxu0 0.0
    %2585 = vmatpush1.msra.mxu0 0.0
    %2586 = vmatprep.subr.mxu0 0.0
    %2587 = vmatpush1.msra.mxu0 0.0
    %2588 = vmatprep.subr.mxu0 0.0
    %2589 = vmatpush1.msra.mxu0 0.0
    %2590 = vmatprep.subr.mxu0 0.0
    %2591 = vmatpush1.msra.mxu0 0.0
    %2592 = vmatprep.subr.mxu0 0.0
    %2593 = vmatpush1.msra.mxu0 0.0
    %2594 = vmatprep.subr.mxu0 0.0
    %2595 = vmatpush1.msra.mxu0 0.0
    %2596 = vmatprep.subr.mxu0 0.0
    %2597 = vmatpush1.msra.mxu0 0.0
    %2598 = vmatprep.subr.mxu0 0.0
    %2599 = vmatpush1.msra.mxu0 0.0
    %2600 = vmatprep.subr.mxu0 0.0
    %2601 = vmatpush1.msra.mxu0 0.0
    %2602 = vmatprep.subr.mxu0 0.0
    %2603 = vmatpush1.msra.mxu0 0.0
    %2604 = vmatprep.subr.mxu0 0.0
    %2605 = vmatpush1.msra.mxu0 0.0
    %2606 = vmatprep.subr.mxu0 0.0
    %2607 = vmatpush1.msra.mxu0 0.0
    %2608 = vmatprep.mubr.f32.mxu0 0.0
    %v2609 = vand.u32 %v74, 4294901760
    %v2610 = vsub.f32 %v74, %v2609
    %v2611 = vand.u32 %v2610, 4294901760
    %v2612 = vsub.f32 %v2610, %v2611
    %v2613 = vand.u32 %v2612, 4294901760
    %2614 = vmatmul.mubr.f32.gmra.mrb[0].mxu0 %v2613
    %v2615 = vpop.f32.mrb[0].mxu0
    %v2616 = vadd.f32 %v1704, %v2615
    %v2617 = vpop.f32.mrb[0].mxu0
    %2618 = vmatprep.mubr.f32.mxu0 0.0
    %v2619 = vand.u32 %v77, 4294901760
    %v2620 = vsub.f32 %v77, %v2619
    %v2621 = vand.u32 %v2620, 4294901760
    %v2622 = vsub.f32 %v2620, %v2621
    %v2623 = vand.u32 %v2622, 4294901760
    %2624 = vmatmul.mubr.f32.gmra.mrb[0].mxu0 %v2623
    %v2625 = vpop.f32.mrb[0].mxu0
    %v2626 = vadd.f32 %v1704, %v2625
    %v2627 = vpop.f32.mrb[0].mxu0
    %2628 = vmatprep.mubr.f32.mxu0 0.0
    %v2629 = vand.u32 %v80, 4294901760
    %v2630 = vsub.f32 %v80, %v2629
    %v2631 = vand.u32 %v2630, 4294901760
    %v2632 = vsub.f32 %v2630, %v2631
    %v2633 = vand.u32 %v2632, 4294901760
    %2634 = vmatmul.mubr.f32.gmra.mrb[0].mxu0 %v2633
    %v2635 = vpop.f32.mrb[0].mxu0
    %v2636 = vadd.f32 %v1704, %v2635
    %v2637 = vpop.f32.mrb[0].mxu0
    %2638 = vmatprep.mubr.f32.mxu0 0.0
    %v2639 = vand.u32 %v83, 4294901760
    %v2640 = vsub.f32 %v83, %v2639
    %v2641 = vand.u32 %v2640, 4294901760
    %v2642 = vsub.f32 %v2640, %v2641
    %v2643 = vand.u32 %v2642, 4294901760
    %2644 = vmatmul.mubr.f32.gmra.mrb[0].mxu0 %v2643
    %v2645 = vpop.f32.mrb[0].mxu0
    %v2646 = vadd.f32 %v1704, %v2645
    %v2647 = vpop.f32.mrb[0].mxu0
    %2648 = vmatprep.mubr.f32.mxu0 0.0
    %v2649 = vand.u32 %v86, 4294901760
    %v2650 = vsub.f32 %v86, %v2649
    %v2651 = vand.u32 %v2650, 4294901760
    %v2652 = vsub.f32 %v2650, %v2651
    %v2653 = vand.u32 %v2652, 4294901760
    %2654 = vmatmul.mubr.f32.gmra.mrb[0].mxu0 %v2653
    %v2655 = vpop.f32.mrb[0].mxu0
    %v2656 = vadd.f32 %v1704, %v2655
    %v2657 = vpop.f32.mrb[0].mxu0
    %2658 = vmatprep.mubr.f32.mxu0 0.0
    %v2659 = vand.u32 %v89, 4294901760
    %v2660 = vsub.f32 %v89, %v2659
    %v2661 = vand.u32 %v2660, 4294901760
    %v2662 = vsub.f32 %v2660, %v2661
    %v2663 = vand.u32 %v2662, 4294901760
    %2664 = vmatmul.mubr.f32.gmra.mrb[0].mxu0 %v2663
    %v2665 = vpop.f32.mrb[0].mxu0
    %v2666 = vadd.f32 %v1704, %v2665
    %v2667 = vpop.f32.mrb[0].mxu0
    %2668 = vmatprep.mubr.f32.mxu0 0.0
    %v2669 = vand.u32 %v92, 4294901760
    %v2670 = vsub.f32 %v92, %v2669
    %v2671 = vand.u32 %v2670, 4294901760
    %v2672 = vsub.f32 %v2670, %v2671
    %v2673 = vand.u32 %v2672, 4294901760
    %2674 = vmatmul.mubr.f32.gmra.mrb[0].mxu0 %v2673
    %v2675 = vpop.f32.mrb[0].mxu0
    %v2676 = vadd.f32 %v1704, %v2675
    %v2677 = vpop.f32.mrb[0].mxu0
    %2678 = vmatprep.mubr.f32.mxu0 0.0
    %v2679 = vand.u32 %v95, 4294901760
    %v2680 = vsub.f32 %v95, %v2679
    %v2681 = vand.u32 %v2680, 4294901760
    %v2682 = vsub.f32 %v2680, %v2681
    %v2683 = vand.u32 %v2682, 4294901760
    %2684 = vmatmul.mubr.f32.gmra.mrb[0].mxu0 %v2683
    %v2685 = vpop.f32.mrb[0].mxu0
    %v2686 = vadd.f32 %v1704, %v2685
    %v2687 = vpop.f32.mrb[0].mxu0
    %2688 = vdwg.mxu0
    %2689 = vmatprep.subr.mxu0 0.0
    %v2690 = vand.u32 %v51, 4294901760
    %v2691 = vsub.f32 %v51, %v2690
    %v2692 = vand.u32 %v2691, 4294901760
    %v2693 = vsub.f32 %v2691, %v2692
    %v2694 = vand.u32 %v2693, 4294901760
    %2695 = vmatpush1.msra.mxu0 %v2694
    %2696 = vmatprep.subr.mxu0 0.0
    %v2697 = vand.u32 %v54, 4294901760
    %v2698 = vsub.f32 %v54, %v2697
    %v2699 = vand.u32 %v2698, 4294901760
    %v2700 = vsub.f32 %v2698, %v2699
    %v2701 = vand.u32 %v2700, 4294901760
    %2702 = vmatpush1.msra.mxu0 %v2701
    %2703 = vmatprep.subr.mxu0 0.0
    %2704 = vmatpush1.msra.mxu0 0.0
    %2705 = vmatprep.subr.mxu0 0.0
    %2706 = vmatpush1.msra.mxu0 0.0
    %2707 = vmatprep.subr.mxu0 0.0
    %2708 = vmatpush1.msra.mxu0 0.0
    %2709 = vmatprep.subr.mxu0 0.0
    %2710 = vmatpush1.msra.mxu0 0.0
    %2711 = vmatprep.subr.mxu0 0.0
    %2712 = vmatpush1.msra.mxu0 0.0
    %2713 = vmatprep.subr.mxu0 0.0
    %2714 = vmatpush1.msra.mxu0 0.0
    %2715 = vmatprep.subr.mxu0 0.0
    %2716 = vmatpush1.msra.mxu0 0.0
    %2717 = vmatprep.subr.mxu0 0.0
    %2718 = vmatpush1.msra.mxu0 0.0
    %2719 = vmatprep.subr.mxu0 0.0
    %2720 = vmatpush1.msra.mxu0 0.0
    %2721 = vmatprep.subr.mxu0 0.0
    %2722 = vmatpush1.msra.mxu0 0.0
    %2723 = vmatprep.subr.mxu0 0.0
    %2724 = vmatpush1.msra.mxu0 0.0
    %2725 = vmatprep.subr.mxu0 0.0
    %2726 = vmatpush1.msra.mxu0 0.0
    %2727 = vmatprep.subr.mxu0 0.0
    %2728 = vmatpush1.msra.mxu0 0.0
    %2729 = vmatprep.subr.mxu0 0.0
    %2730 = vmatpush1.msra.mxu0 0.0
    %2731 = vmatprep.subr.mxu0 0.0
    %2732 = vmatpush1.msra.mxu0 0.0
    %2733 = vmatprep.subr.mxu0 0.0
    %2734 = vmatpush1.msra.mxu0 0.0
    %2735 = vmatprep.subr.mxu0 0.0
    %2736 = vmatpush1.msra.mxu0 0.0
    %2737 = vmatprep.subr.mxu0 0.0
    %2738 = vmatpush1.msra.mxu0 0.0
    %2739 = vmatprep.subr.mxu0 0.0
    %2740 = vmatpush1.msra.mxu0 0.0
    %2741 = vmatprep.subr.mxu0 0.0
    %2742 = vmatpush1.msra.mxu0 0.0
    %2743 = vmatprep.subr.mxu0 0.0
    %2744 = vmatpush1.msra.mxu0 0.0
    %2745 = vmatprep.subr.mxu0 0.0
    %2746 = vmatpush1.msra.mxu0 0.0
    %2747 = vmatprep.subr.mxu0 0.0
    %2748 = vmatpush1.msra.mxu0 0.0
    %2749 = vmatprep.subr.mxu0 0.0
    %2750 = vmatpush1.msra.mxu0 0.0
    %2751 = vmatprep.subr.mxu0 0.0
    %2752 = vmatpush1.msra.mxu0 0.0
    %2753 = vmatprep.subr.mxu0 0.0
    %2754 = vmatpush1.msra.mxu0 0.0
    %2755 = vmatprep.subr.mxu0 0.0
    %2756 = vmatpush1.msra.mxu0 0.0
    %2757 = vmatprep.subr.mxu0 0.0
    %2758 = vmatpush1.msra.mxu0 0.0
    %2759 = vmatprep.subr.mxu0 0.0
    %2760 = vmatpush1.msra.mxu0 0.0
    %2761 = vmatprep.subr.mxu0 0.0
    %2762 = vmatpush1.msra.mxu0 0.0
    %2763 = vmatprep.mubr.f32.mxu0 0.0
    %v2764 = vand.u32 %v74, 4294901760
    %2765 = vmatmul.mubr.f32.gmra.mrb[0].mxu0 %v2764
    %v2766 = vpop.f32.mrb[0].mxu0
    %v2767 = vadd.f32 %v2616, %v2766
    %v2768 = vpop.f32.mrb[0].mxu0
    %2769 = vmatprep.mubr.f32.mxu0 0.0
    %v2770 = vand.u32 %v77, 4294901760
    %2771 = vmatmul.mubr.f32.gmra.mrb[0].mxu0 %v2770
    %v2772 = vpop.f32.mrb[0].mxu0
    %v2773 = vadd.f32 %v2626, %v2772
    %v2774 = vpop.f32.mrb[0].mxu0
    %2775 = vmatprep.mubr.f32.mxu0 0.0
    %v2776 = vand.u32 %v80, 4294901760
    %2777 = vmatmul.mubr.f32.gmra.mrb[0].mxu0 %v2776
    %v2778 = vpop.f32.mrb[0].mxu0
    %v2779 = vadd.f32 %v2636, %v2778
    %v2780 = vpop.f32.mrb[0].mxu0
    %2781 = vmatprep.mubr.f32.mxu0 0.0
    %v2782 = vand.u32 %v83, 4294901760
    %2783 = vmatmul.mubr.f32.gmra.mrb[0].mxu0 %v2782
    %v2784 = vpop.f32.mrb[0].mxu0
    %v2785 = vadd.f32 %v2646, %v2784
    %v2786 = vpop.f32.mrb[0].mxu0
    %2787 = vmatprep.mubr.f32.mxu0 0.0
    %v2788 = vand.u32 %v86, 4294901760
    %2789 = vmatmul.mubr.f32.gmra.mrb[0].mxu0 %v2788
    %v2790 = vpop.f32.mrb[0].mxu0
    %v2791 = vadd.f32 %v2656, %v2790
    %v2792 = vpop.f32.mrb[0].mxu0
    %2793 = vmatprep.mubr.f32.mxu0 0.0
    %v2794 = vand.u32 %v89, 4294901760
    %2795 = vmatmul.mubr.f32.gmra.mrb[0].mxu0 %v2794
    %v2796 = vpop.f32.mrb[0].mxu0
    %v2797 = vadd.f32 %v2666, %v2796
    %v2798 = vpop.f32.mrb[0].mxu0
    %2799 = vmatprep.mubr.f32.mxu0 0.0
    %v2800 = vand.u32 %v92, 4294901760
    %2801 = vmatmul.mubr.f32.gmra.mrb[0].mxu0 %v2800
    %v2802 = vpop.f32.mrb[0].mxu0
    %v2803 = vadd.f32 %v2676, %v2802
    %v2804 = vpop.f32.mrb[0].mxu0
    %2805 = vmatprep.mubr.f32.mxu0 0.0
    %v2806 = vand.u32 %v95, 4294901760
    %2807 = vmatmul.mubr.f32.gmra.mrb[0].mxu0 %v2806
    %v2808 = vpop.f32.mrb[0].mxu0
    %v2809 = vadd.f32 %v2686, %v2808
    %v2810 = vpop.f32.mrb[0].mxu0
    %2811 = vdwg.mxu0
    %2812 = vmatprep.subr.mxu0 0.0
    %v2813 = vand.u32 %v51, 4294901760
    %v2814 = vsub.f32 %v51, %v2813
    %2815 = vmatpush1.msra.mxu0 %v2814
    %2816 = vmatprep.subr.mxu0 0.0
    %v2817 = vand.u32 %v54, 4294901760
    %v2818 = vsub.f32 %v54, %v2817
    %2819 = vmatpush1.msra.mxu0 %v2818
    %2820 = vmatprep.subr.mxu0 0.0
    %2821 = vmatpush1.msra.mxu0 0.0
    %2822 = vmatprep.subr.mxu0 0.0
    %2823 = vmatpush1.msra.mxu0 0.0
    %2824 = vmatprep.subr.mxu0 0.0
    %2825 = vmatpush1.msra.mxu0 0.0
    %2826 = vmatprep.subr.mxu0 0.0
    %2827 = vmatpush1.msra.mxu0 0.0
    %2828 = vmatprep.subr.mxu0 0.0
    %2829 = vmatpush1.msra.mxu0 0.0
    %2830 = vmatprep.subr.mxu0 0.0
    %2831 = vmatpush1.msra.mxu0 0.0
    %2832 = vmatprep.subr.mxu0 0.0
    %2833 = vmatpush1.msra.mxu0 0.0
    %2834 = vmatprep.subr.mxu0 0.0
    %2835 = vmatpush1.msra.mxu0 0.0
    %2836 = vmatprep.subr.mxu0 0.0
    %2837 = vmatpush1.msra.mxu0 0.0
    %2838 = vmatprep.subr.mxu0 0.0
    %2839 = vmatpush1.msra.mxu0 0.0
    %2840 = vmatprep.subr.mxu0 0.0
    %2841 = vmatpush1.msra.mxu0 0.0
    %2842 = vmatprep.subr.mxu0 0.0
    %2843 = vmatpush1.msra.mxu0 0.0
    %2844 = vmatprep.subr.mxu0 0.0
    %2845 = vmatpush1.msra.mxu0 0.0
    %2846 = vmatprep.subr.mxu0 0.0
    %2847 = vmatpush1.msra.mxu0 0.0
    %2848 = vmatprep.subr.mxu0 0.0
    %2849 = vmatpush1.msra.mxu0 0.0
    %2850 = vmatprep.subr.mxu0 0.0
    %2851 = vmatpush1.msra.mxu0 0.0
    %2852 = vmatprep.subr.mxu0 0.0
    %2853 = vmatpush1.msra.mxu0 0.0
    %2854 = vmatprep.subr.mxu0 0.0
    %2855 = vmatpush1.msra.mxu0 0.0
    %2856 = vmatprep.subr.mxu0 0.0
    %2857 = vmatpush1.msra.mxu0 0.0
    %2858 = vmatprep.subr.mxu0 0.0
    %2859 = vmatpush1.msra.mxu0 0.0
    %2860 = vmatprep.subr.mxu0 0.0
    %2861 = vmatpush1.msra.mxu0 0.0
    %2862 = vmatprep.subr.mxu0 0.0
    %2863 = vmatpush1.msra.mxu0 0.0
    %2864 = vmatprep.subr.mxu0 0.0
    %2865 = vmatpush1.msra.mxu0 0.0
    %2866 = vmatprep.subr.mxu0 0.0
    %2867 = vmatpush1.msra.mxu0 0.0
    %2868 = vmatprep.subr.mxu0 0.0
    %2869 = vmatpush1.msra.mxu0 0.0
    %2870 = vmatprep.subr.mxu0 0.0
    %2871 = vmatpush1.msra.mxu0 0.0
    %2872 = vmatprep.subr.mxu0 0.0
    %2873 = vmatpush1.msra.mxu0 0.0
    %2874 = vmatprep.subr.mxu0 0.0
    %2875 = vmatpush1.msra.mxu0 0.0
    %2876 = vmatprep.subr.mxu0 0.0
    %2877 = vmatpush1.msra.mxu0 0.0
    %2878 = vmatprep.subr.mxu0 0.0
    %2879 = vmatpush1.msra.mxu0 0.0
    %2880 = vmatprep.mubr.f32.mxu0 0.0
    %v2881 = vand.u32 %v74, 4294901760
    %v2882 = vsub.f32 %v74, %v2881
    %2883 = vmatmul.mubr.f32.gmra.mrb[0].mxu0 %v2882
    %v2884 = vpop.f32.mrb[0].mxu0
    %v2885 = vadd.f32 %v2767, %v2884
    %v2886 = vpop.f32.mrb[0].mxu0
    %2887 = vmatprep.mubr.f32.mxu0 0.0
    %v2888 = vand.u32 %v77, 4294901760
    %v2889 = vsub.f32 %v77, %v2888
    %2890 = vmatmul.mubr.f32.gmra.mrb[0].mxu0 %v2889
    %v2891 = vpop.f32.mrb[0].mxu0
    %v2892 = vadd.f32 %v2773, %v2891
    %v2893 = vpop.f32.mrb[0].mxu0
    %2894 = vmatprep.mubr.f32.mxu0 0.0
    %v2895 = vand.u32 %v80, 4294901760
    %v2896 = vsub.f32 %v80, %v2895
    %2897 = vmatmul.mubr.f32.gmra.mrb[0].mxu0 %v2896
    %v2898 = vpop.f32.mrb[0].mxu0
    %v2899 = vadd.f32 %v2779, %v2898
    %v2900 = vpop.f32.mrb[0].mxu0
    %2901 = vmatprep.mubr.f32.mxu0 0.0
    %v2902 = vand.u32 %v83, 4294901760
    %v2903 = vsub.f32 %v83, %v2902
    %2904 = vmatmul.mubr.f32.gmra.mrb[0].mxu0 %v2903
    %v2905 = vpop.f32.mrb[0].mxu0
    %v2906 = vadd.f32 %v2785, %v2905
    %v2907 = vpop.f32.mrb[0].mxu0
    %2908 = vmatprep.mubr.f32.mxu0 0.0
    %v2909 = vand.u32 %v86, 4294901760
    %v2910 = vsub.f32 %v86, %v2909
    %2911 = vmatmul.mubr.f32.gmra.mrb[0].mxu0 %v2910
    %v2912 = vpop.f32.mrb[0].mxu0
    %v2913 = vadd.f32 %v2791, %v2912
    %v2914 = vpop.f32.mrb[0].mxu0
    %2915 = vmatprep.mubr.f32.mxu0 0.0
    %v2916 = vand.u32 %v89, 4294901760
    %v2917 = vsub.f32 %v89, %v2916
    %2918 = vmatmul.mubr.f32.gmra.mrb[0].mxu0 %v2917
    %v2919 = vpop.f32.mrb[0].mxu0
    %v2920 = vadd.f32 %v2797, %v2919
    %v2921 = vpop.f32.mrb[0].mxu0
    %2922 = vmatprep.mubr.f32.mxu0 0.0
    %v2923 = vand.u32 %v92, 4294901760
    %v2924 = vsub.f32 %v92, %v2923
    %2925 = vmatmul.mubr.f32.gmra.mrb[0].mxu0 %v2924
    %v2926 = vpop.f32.mrb[0].mxu0
    %v2927 = vadd.f32 %v2803, %v2926
    %v2928 = vpop.f32.mrb[0].mxu0
    %2929 = vmatprep.mubr.f32.mxu0 0.0
    %v2930 = vand.u32 %v95, 4294901760
    %v2931 = vsub.f32 %v95, %v2930
    %2932 = vmatmul.mubr.f32.gmra.mrb[0].mxu0 %v2931
    %v2933 = vpop.f32.mrb[0].mxu0
    %v2934 = vadd.f32 %v2809, %v2933
    %v2935 = vpop.f32.mrb[0].mxu0
    %2936 = vdwg.mxu0
    %2937 = vmatprep.subr.mxu0 0.0
    %v2938 = vand.u32 %v51, 4294901760
    %2939 = vmatpush1.msra.mxu0 %v2938
    %2940 = vmatprep.subr.mxu0 0.0
    %v2941 = vand.u32 %v54, 4294901760
    %2942 = vmatpush1.msra.mxu0 %v2941
    %2943 = vmatprep.subr.mxu0 0.0
    %2944 = vmatpush1.msra.mxu0 0.0
    %2945 = vmatprep.subr.mxu0 0.0
    %2946 = vmatpush1.msra.mxu0 0.0
    %2947 = vmatprep.subr.mxu0 0.0
    %2948 = vmatpush1.msra.mxu0 0.0
    %2949 = vmatprep.subr.mxu0 0.0
    %2950 = vmatpush1.msra.mxu0 0.0
    %2951 = vmatprep.subr.mxu0 0.0
    %2952 = vmatpush1.msra.mxu0 0.0
    %2953 = vmatprep.subr.mxu0 0.0
    %2954 = vmatpush1.msra.mxu0 0.0
    %2955 = vmatprep.subr.mxu0 0.0
    %2956 = vmatpush1.msra.mxu0 0.0
    %2957 = vmatprep.subr.mxu0 0.0
    %2958 = vmatpush1.msra.mxu0 0.0
    %2959 = vmatprep.subr.mxu0 0.0
    %2960 = vmatpush1.msra.mxu0 0.0
    %2961 = vmatprep.subr.mxu0 0.0
    %2962 = vmatpush1.msra.mxu0 0.0
    %2963 = vmatprep.subr.mxu0 0.0
    %2964 = vmatpush1.msra.mxu0 0.0
    %2965 = vmatprep.subr.mxu0 0.0
    %2966 = vmatpush1.msra.mxu0 0.0
    %2967 = vmatprep.subr.mxu0 0.0
    %2968 = vmatpush1.msra.mxu0 0.0
    %2969 = vmatprep.subr.mxu0 0.0
    %2970 = vmatpush1.msra.mxu0 0.0
    %2971 = vmatprep.subr.mxu0 0.0
    %2972 = vmatpush1.msra.mxu0 0.0
    %2973 = vmatprep.subr.mxu0 0.0
    %2974 = vmatpush1.msra.mxu0 0.0
    %2975 = vmatprep.subr.mxu0 0.0
    %2976 = vmatpush1.msra.mxu0 0.0
    %2977 = vmatprep.subr.mxu0 0.0
    %2978 = vmatpush1.msra.mxu0 0.0
    %2979 = vmatprep.subr.mxu0 0.0
    %2980 = vmatpush1.msra.mxu0 0.0
    %2981 = vmatprep.subr.mxu0 0.0
    %2982 = vmatpush1.msra.mxu0 0.0
    %2983 = vmatprep.subr.mxu0 0.0
    %2984 = vmatpush1.msra.mxu0 0.0
    %2985 = vmatprep.subr.mxu0 0.0
    %2986 = vmatpush1.msra.mxu0 0.0
    %2987 = vmatprep.subr.mxu0 0.0
    %2988 = vmatpush1.msra.mxu0 0.0
    %2989 = vmatprep.subr.mxu0 0.0
    %2990 = vmatpush1.msra.mxu0 0.0
    %2991 = vmatprep.subr.mxu0 0.0
    %2992 = vmatpush1.msra.mxu0 0.0
    %2993 = vmatprep.subr.mxu0 0.0
    %2994 = vmatpush1.msra.mxu0 0.0
    %2995 = vmatprep.subr.mxu0 0.0
    %2996 = vmatpush1.msra.mxu0 0.0
    %2997 = vmatprep.subr.mxu0 0.0
    %2998 = vmatpush1.msra.mxu0 0.0
    %2999 = vmatprep.subr.mxu0 0.0
    %3000 = vmatpush1.msra.mxu0 0.0
    %3001 = vmatprep.subr.mxu0 0.0
    %3002 = vmatpush1.msra.mxu0 0.0
    %3003 = vmatprep.mubr.f32.mxu0 0.0
    %v3004 = vand.u32 %v74, 4294901760
    %v3005 = vsub.f32 %v74, %v3004
    %v3006 = vand.u32 %v3005, 4294901760
    %3007 = vmatmul.mubr.f32.gmra.mrb[0].mxu0 %v3006
    %v3008 = vpop.f32.mrb[0].mxu0
    %v3009 = vadd.f32 %v2885, %v3008
    %v3010 = vpop.f32.mrb[0].mxu0
    %3011 = vmatprep.mubr.f32.mxu0 0.0
    %v3012 = vand.u32 %v77, 4294901760
    %v3013 = vsub.f32 %v77, %v3012
    %v3014 = vand.u32 %v3013, 4294901760
    %3015 = vmatmul.mubr.f32.gmra.mrb[0].mxu0 %v3014
    %v3016 = vpop.f32.mrb[0].mxu0
    %v3017 = vadd.f32 %v2892, %v3016
    %v3018 = vpop.f32.mrb[0].mxu0
    %3019 = vmatprep.mubr.f32.mxu0 0.0
    %v3020 = vand.u32 %v80, 4294901760
    %v3021 = vsub.f32 %v80, %v3020
    %v3022 = vand.u32 %v3021, 4294901760
    %3023 = vmatmul.mubr.f32.gmra.mrb[0].mxu0 %v3022
    %v3024 = vpop.f32.mrb[0].mxu0
    %v3025 = vadd.f32 %v2899, %v3024
    %v3026 = vpop.f32.mrb[0].mxu0
    %3027 = vmatprep.mubr.f32.mxu0 0.0
    %v3028 = vand.u32 %v83, 4294901760
    %v3029 = vsub.f32 %v83, %v3028
    %v3030 = vand.u32 %v3029, 4294901760
    %3031 = vmatmul.mubr.f32.gmra.mrb[0].mxu0 %v3030
    %v3032 = vpop.f32.mrb[0].mxu0
    %v3033 = vadd.f32 %v2906, %v3032
    %v3034 = vpop.f32.mrb[0].mxu0
    %3035 = vmatprep.mubr.f32.mxu0 0.0
    %v3036 = vand.u32 %v86, 4294901760
    %v3037 = vsub.f32 %v86, %v3036
    %v3038 = vand.u32 %v3037, 4294901760
    %3039 = vmatmul.mubr.f32.gmra.mrb[0].mxu0 %v3038
    %v3040 = vpop.f32.mrb[0].mxu0
    %v3041 = vadd.f32 %v2913, %v3040
    %v3042 = vpop.f32.mrb[0].mxu0
    %3043 = vmatprep.mubr.f32.mxu0 0.0
    %v3044 = vand.u32 %v89, 4294901760
    %v3045 = vsub.f32 %v89, %v3044
    %v3046 = vand.u32 %v3045, 4294901760
    %3047 = vmatmul.mubr.f32.gmra.mrb[0].mxu0 %v3046
    %v3048 = vpop.f32.mrb[0].mxu0
    %v3049 = vadd.f32 %v2920, %v3048
    %v3050 = vpop.f32.mrb[0].mxu0
    %3051 = vmatprep.mubr.f32.mxu0 0.0
    %v3052 = vand.u32 %v92, 4294901760
    %v3053 = vsub.f32 %v92, %v3052
    %v3054 = vand.u32 %v3053, 4294901760
    %3055 = vmatmul.mubr.f32.gmra.mrb[0].mxu0 %v3054
    %v3056 = vpop.f32.mrb[0].mxu0
    %v3057 = vadd.f32 %v2927, %v3056
    %v3058 = vpop.f32.mrb[0].mxu0
    %3059 = vmatprep.mubr.f32.mxu0 0.0
    %v3060 = vand.u32 %v95, 4294901760
    %v3061 = vsub.f32 %v95, %v3060
    %v3062 = vand.u32 %v3061, 4294901760
    %3063 = vmatmul.mubr.f32.gmra.mrb[0].mxu0 %v3062
    %v3064 = vpop.f32.mrb[0].mxu0
    %v3065 = vadd.f32 %v2934, %v3064
    %v3066 = vpop.f32.mrb[0].mxu0
    %3067 = vdwg.mxu0
    %3068 = vmatprep.subr.mxu0 0.0
    %v3069 = vand.u32 %v51, 4294901760
    %v3070 = vsub.f32 %v51, %v3069
    %v3071 = vand.u32 %v3070, 4294901760
    %3072 = vmatpush1.msra.mxu0 %v3071
    %3073 = vmatprep.subr.mxu0 0.0
    %v3074 = vand.u32 %v54, 4294901760
    %v3075 = vsub.f32 %v54, %v3074
    %v3076 = vand.u32 %v3075, 4294901760
    %3077 = vmatpush1.msra.mxu0 %v3076
    %3078 = vmatprep.subr.mxu0 0.0
    %3079 = vmatpush1.msra.mxu0 0.0
    %3080 = vmatprep.subr.mxu0 0.0
    %3081 = vmatpush1.msra.mxu0 0.0
    %3082 = vmatprep.subr.mxu0 0.0
    %3083 = vmatpush1.msra.mxu0 0.0
    %3084 = vmatprep.subr.mxu0 0.0
    %3085 = vmatpush1.msra.mxu0 0.0
    %3086 = vmatprep.subr.mxu0 0.0
    %3087 = vmatpush1.msra.mxu0 0.0
    %3088 = vmatprep.subr.mxu0 0.0
    %3089 = vmatpush1.msra.mxu0 0.0
    %3090 = vmatprep.subr.mxu0 0.0
    %3091 = vmatpush1.msra.mxu0 0.0
    %3092 = vmatprep.subr.mxu0 0.0
    %3093 = vmatpush1.msra.mxu0 0.0
    %3094 = vmatprep.subr.mxu0 0.0
    %3095 = vmatpush1.msra.mxu0 0.0
    %3096 = vmatprep.subr.mxu0 0.0
    %3097 = vmatpush1.msra.mxu0 0.0
    %3098 = vmatprep.subr.mxu0 0.0
    %3099 = vmatpush1.msra.mxu0 0.0
    %3100 = vmatprep.subr.mxu0 0.0
    %3101 = vmatpush1.msra.mxu0 0.0
    %3102 = vmatprep.subr.mxu0 0.0
    %3103 = vmatpush1.msra.mxu0 0.0
    %3104 = vmatprep.subr.mxu0 0.0
    %3105 = vmatpush1.msra.mxu0 0.0
    %3106 = vmatprep.subr.mxu0 0.0
    %3107 = vmatpush1.msra.mxu0 0.0
    %3108 = vmatprep.subr.mxu0 0.0
    %3109 = vmatpush1.msra.mxu0 0.0
    %3110 = vmatprep.subr.mxu0 0.0
    %3111 = vmatpush1.msra.mxu0 0.0
    %3112 = vmatprep.subr.mxu0 0.0
    %3113 = vmatpush1.msra.mxu0 0.0
    %3114 = vmatprep.subr.mxu0 0.0
    %3115 = vmatpush1.msra.mxu0 0.0
    %3116 = vmatprep.subr.mxu0 0.0
    %3117 = vmatpush1.msra.mxu0 0.0
    %3118 = vmatprep.subr.mxu0 0.0
    %3119 = vmatpush1.msra.mxu0 0.0
    %3120 = vmatprep.subr.mxu0 0.0
    %3121 = vmatpush1.msra.mxu0 0.0
    %3122 = vmatprep.subr.mxu0 0.0
    %3123 = vmatpush1.msra.mxu0 0.0
    %3124 = vmatprep.subr.mxu0 0.0
    %3125 = vmatpush1.msra.mxu0 0.0
    %3126 = vmatprep.subr.mxu0 0.0
    %3127 = vmatpush1.msra.mxu0 0.0
    %3128 = vmatprep.subr.mxu0 0.0
    %3129 = vmatpush1.msra.mxu0 0.0
    %3130 = vmatprep.subr.mxu0 0.0
    %3131 = vmatpush1.msra.mxu0 0.0
    %3132 = vmatprep.subr.mxu0 0.0
    %3133 = vmatpush1.msra.mxu0 0.0
    %3134 = vmatprep.subr.mxu0 0.0
    %3135 = vmatpush1.msra.mxu0 0.0
    %3136 = vmatprep.subr.mxu0 0.0
    %3137 = vmatpush1.msra.mxu0 0.0
    %3138 = vmatprep.mubr.f32.mxu0 0.0
    %v3139 = vand.u32 %v74, 4294901760
    %3140 = vmatmul.mubr.f32.gmra.mrb[0].mxu0 %v3139
    %v3141 = vpop.f32.mrb[0].mxu0
    %v3142 = vadd.f32 %v3009, %v3141
    %v3143 = vpop.f32.mrb[0].mxu0
    %3144 = vmatprep.mubr.f32.mxu0 0.0
    %v3145 = vand.u32 %v77, 4294901760
    %3146 = vmatmul.mubr.f32.gmra.mrb[0].mxu0 %v3145
    %v3147 = vpop.f32.mrb[0].mxu0
    %v3148 = vadd.f32 %v3017, %v3147
    %v3149 = vpop.f32.mrb[0].mxu0
    %3150 = vmatprep.mubr.f32.mxu0 0.0
    %v3151 = vand.u32 %v80, 4294901760
    %3152 = vmatmul.mubr.f32.gmra.mrb[0].mxu0 %v3151
    %v3153 = vpop.f32.mrb[0].mxu0
    %v3154 = vadd.f32 %v3025, %v3153
    %v3155 = vpop.f32.mrb[0].mxu0
    %3156 = vmatprep.mubr.f32.mxu0 0.0
    %v3157 = vand.u32 %v83, 4294901760
    %3158 = vmatmul.mubr.f32.gmra.mrb[0].mxu0 %v3157
    %v3159 = vpop.f32.mrb[0].mxu0
    %v3160 = vadd.f32 %v3033, %v3159
    %v3161 = vpop.f32.mrb[0].mxu0
    %3162 = vmatprep.mubr.f32.mxu0 0.0
    %v3163 = vand.u32 %v86, 4294901760
    %3164 = vmatmul.mubr.f32.gmra.mrb[0].mxu0 %v3163
    %v3165 = vpop.f32.mrb[0].mxu0
    %v3166 = vadd.f32 %v3041, %v3165
    %v3167 = vpop.f32.mrb[0].mxu0
    %3168 = vmatprep.mubr.f32.mxu0 0.0
    %v3169 = vand.u32 %v89, 4294901760
    %3170 = vmatmul.mubr.f32.gmra.mrb[0].mxu0 %v3169
    %v3171 = vpop.f32.mrb[0].mxu0
    %v3172 = vadd.f32 %v3049, %v3171
    %v3173 = vpop.f32.mrb[0].mxu0
    %3174 = vmatprep.mubr.f32.mxu0 0.0
    %v3175 = vand.u32 %v92, 4294901760
    %3176 = vmatmul.mubr.f32.gmra.mrb[0].mxu0 %v3175
    %v3177 = vpop.f32.mrb[0].mxu0
    %v3178 = vadd.f32 %v3057, %v3177
    %v3179 = vpop.f32.mrb[0].mxu0
    %3180 = vmatprep.mubr.f32.mxu0 0.0
    %v3181 = vand.u32 %v95, 4294901760
    %3182 = vmatmul.mubr.f32.gmra.mrb[0].mxu0 %v3181
    %v3183 = vpop.f32.mrb[0].mxu0
    %v3184 = vadd.f32 %v3065, %v3183
    %v3185 = vpop.f32.mrb[0].mxu0
    %3186 = vdwg.mxu0
    %3187 = vmatprep.subr.mxu0 0.0
    %v3188 = vand.u32 %v51, 4294901760
    %3189 = vmatpush1.msra.mxu0 %v3188
    %3190 = vmatprep.subr.mxu0 0.0
    %v3191 = vand.u32 %v54, 4294901760
    %3192 = vmatpush1.msra.mxu0 %v3191
    %3193 = vmatprep.subr.mxu0 0.0
    %3194 = vmatpush1.msra.mxu0 0.0
    %3195 = vmatprep.subr.mxu0 0.0
    %3196 = vmatpush1.msra.mxu0 0.0
    %3197 = vmatprep.subr.mxu0 0.0
    %3198 = vmatpush1.msra.mxu0 0.0
    %3199 = vmatprep.subr.mxu0 0.0
    %3200 = vmatpush1.msra.mxu0 0.0
    %3201 = vmatprep.subr.mxu0 0.0
    %3202 = vmatpush1.msra.mxu0 0.0
    %3203 = vmatprep.subr.mxu0 0.0
    %3204 = vmatpush1.msra.mxu0 0.0
    %3205 = vmatprep.subr.mxu0 0.0
    %3206 = vmatpush1.msra.mxu0 0.0
    %3207 = vmatprep.subr.mxu0 0.0
    %3208 = vmatpush1.msra.mxu0 0.0
    %3209 = vmatprep.subr.mxu0 0.0
    %3210 = vmatpush1.msra.mxu0 0.0
    %3211 = vmatprep.subr.mxu0 0.0
    %3212 = vmatpush1.msra.mxu0 0.0
    %3213 = vmatprep.subr.mxu0 0.0
    %3214 = vmatpush1.msra.mxu0 0.0
    %3215 = vmatprep.subr.mxu0 0.0
    %3216 = vmatpush1.msra.mxu0 0.0
    %3217 = vmatprep.subr.mxu0 0.0
    %3218 = vmatpush1.msra.mxu0 0.0
    %3219 = vmatprep.subr.mxu0 0.0
    %3220 = vmatpush1.msra.mxu0 0.0
    %3221 = vmatprep.subr.mxu0 0.0
    %3222 = vmatpush1.msra.mxu0 0.0
    %3223 = vmatprep.subr.mxu0 0.0
    %3224 = vmatpush1.msra.mxu0 0.0
    %3225 = vmatprep.subr.mxu0 0.0
    %3226 = vmatpush1.msra.mxu0 0.0
    %3227 = vmatprep.subr.mxu0 0.0
    %3228 = vmatpush1.msra.mxu0 0.0
    %3229 = vmatprep.subr.mxu0 0.0
    %3230 = vmatpush1.msra.mxu0 0.0
    %3231 = vmatprep.subr.mxu0 0.0
    %3232 = vmatpush1.msra.mxu0 0.0
    %3233 = vmatprep.subr.mxu0 0.0
    %3234 = vmatpush1.msra.mxu0 0.0
    %3235 = vmatprep.subr.mxu0 0.0
    %3236 = vmatpush1.msra.mxu0 0.0
    %3237 = vmatprep.subr.mxu0 0.0
    %3238 = vmatpush1.msra.mxu0 0.0
    %3239 = vmatprep.subr.mxu0 0.0
    %3240 = vmatpush1.msra.mxu0 0.0
    %3241 = vmatprep.subr.mxu0 0.0
    %3242 = vmatpush1.msra.mxu0 0.0
    %3243 = vmatprep.subr.mxu0 0.0
    %3244 = vmatpush1.msra.mxu0 0.0
    %3245 = vmatprep.subr.mxu0 0.0
    %3246 = vmatpush1.msra.mxu0 0.0
    %3247 = vmatprep.subr.mxu0 0.0
    %3248 = vmatpush1.msra.mxu0 0.0
    %3249 = vmatprep.subr.mxu0 0.0
    %3250 = vmatpush1.msra.mxu0 0.0
    %3251 = vmatprep.subr.mxu0 0.0
    %3252 = vmatpush1.msra.mxu0 0.0
    %3253 = vmatprep.mubr.f32.mxu0 0.0
    %v3254 = vand.u32 %v74, 4294901760
    %3255 = vmatmul.mubr.f32.gmra.mrb[0].mxu0 %v3254
    %v3256 = vpop.f32.mrb[0].mxu0
    %v3257 = vadd.f32 %v3142, %v3256
    %v3258 = vpop.f32.mrb[0].mxu0
    %3259 = vmatprep.mubr.f32.mxu0 0.0
    %v3260 = vand.u32 %v77, 4294901760
    %3261 = vmatmul.mubr.f32.gmra.mrb[0].mxu0 %v3260
    %v3262 = vpop.f32.mrb[0].mxu0
    %v3263 = vadd.f32 %v3148, %v3262
    %v3264 = vpop.f32.mrb[0].mxu0
    %3265 = vmatprep.mubr.f32.mxu0 0.0
    %v3266 = vand.u32 %v80, 4294901760
    %3267 = vmatmul.mubr.f32.gmra.mrb[0].mxu0 %v3266
    %v3268 = vpop.f32.mrb[0].mxu0
    %v3269 = vadd.f32 %v3154, %v3268
    %v3270 = vpop.f32.mrb[0].mxu0
    %3271 = vmatprep.mubr.f32.mxu0 0.0
    %v3272 = vand.u32 %v83, 4294901760
    %3273 = vmatmul.mubr.f32.gmra.mrb[0].mxu0 %v3272
    %v3274 = vpop.f32.mrb[0].mxu0
    %v3275 = vadd.f32 %v3160, %v3274
    %v3276 = vpop.f32.mrb[0].mxu0
    %3277 = vmatprep.mubr.f32.mxu0 0.0
    %v3278 = vand.u32 %v86, 4294901760
    %3279 = vmatmul.mubr.f32.gmra.mrb[0].mxu0 %v3278
    %v3280 = vpop.f32.mrb[0].mxu0
    %v3281 = vadd.f32 %v3166, %v3280
    %v3282 = vpop.f32.mrb[0].mxu0
    %3283 = vmatprep.mubr.f32.mxu0 0.0
    %v3284 = vand.u32 %v89, 4294901760
    %3285 = vmatmul.mubr.f32.gmra.mrb[0].mxu0 %v3284
    %v3286 = vpop.f32.mrb[0].mxu0
    %v3287 = vadd.f32 %v3172, %v3286
    %v3288 = vpop.f32.mrb[0].mxu0
    %3289 = vmatprep.mubr.f32.mxu0 0.0
    %v3290 = vand.u32 %v92, 4294901760
    %3291 = vmatmul.mubr.f32.gmra.mrb[0].mxu0 %v3290
    %v3292 = vpop.f32.mrb[0].mxu0
    %v3293 = vadd.f32 %v3178, %v3292
    %v3294 = vpop.f32.mrb[0].mxu0
    %3295 = vmatprep.mubr.f32.mxu0 0.0
    %v3296 = vand.u32 %v95, 4294901760
    %3297 = vmatmul.mubr.f32.gmra.mrb[0].mxu0 %v3296
    %v3298 = vpop.f32.mrb[0].mxu0
    %v3299 = vadd.f32 %v3184, %v3298
    %v3300 = vpop.f32.mrb[0].mxu0
    %3301 = vdwg.mxu0
    %v3302 = vmul.f32 %v878, %v2489
    %v3303 = vmul.f32 %v880, %v2491
    %v3304 = vmul.f32 %v1646, %v3257
    %v3305 = vmul.f32 %v885, %v2496
    %v3306 = vmul.f32 %v887, %v2498
    %v3307 = vmul.f32 %v1652, %v3263
    %v3308 = vmul.f32 %v892, %v2503
    %v3309 = vmul.f32 %v894, %v2505
    %v3310 = vmul.f32 %v1658, %v3269
    %v3311 = vmul.f32 %v899, %v2510
    %v3312 = vmul.f32 %v901, %v2512
    %v3313 = vmul.f32 %v1664, %v3275
    %v3314 = vmul.f32 %v906, %v2517
    %v3315 = vmul.f32 %v908, %v2519
    %v3316 = vmul.f32 %v1670, %v3281
    %v3317 = vmul.f32 %v913, %v2524
    %v3318 = vmul.f32 %v915, %v2526
    %v3319 = vmul.f32 %v1676, %v3287
    %v3320 = vmul.f32 %v920, %v2531
    %v3321 = vmul.f32 %v922, %v2533
    %v3322 = vmul.f32 %v1682, %v3293
    %v3323 = vmul.f32 %v927, %v2538
    %v3324 = vmul.f32 %v929, %v2540
    %v3325 = vmul.f32 %v1688, %v3299
    %3326 = vst [vmem:[#allocation5] sm:$0xff] %v3302
    %3327 = vst [vmem:[#allocation5 + $0x8] sm:$0xff] %v3303
    %vm3328 = vcmask 138240
    %3329 = vst.msk [vmem:[#allocation5 + $0x10] sm:$0xff] %vm3328, %v3304
    %3330 = vst [vmem:[#allocation5 + $0x18] sm:$0xff] %v3305
    %3331 = vst [vmem:[#allocation5 + $0x20] sm:$0xff] %v3306
    %3332 = vst.msk [vmem:[#allocation5 + $0x28] sm:$0xff] %vm3328, %v3307
    %3333 = vst [vmem:[#allocation5 + $0x30] sm:$0xff] %v3308
    %3334 = vst [vmem:[#allocation5 + $0x38] sm:$0xff] %v3309
    %3335 = vst.msk [vmem:[#allocation5 + $0x40] sm:$0xff] %vm3328, %v3310
    %3336 = vst [vmem:[#allocation5 + $0x48] sm:$0xff] %v3311
    %3337 = vst [vmem:[#allocation5 + $0x50] sm:$0xff] %v3312
    %3338 = vst.msk [vmem:[#allocation5 + $0x58] sm:$0xff] %vm3328, %v3313
    %3339 = vst [vmem:[#allocation5 + $0x60] sm:$0xff] %v3314
    %3340 = vst [vmem:[#allocation5 + $0x68] sm:$0xff] %v3315
    %3341 = vst.msk [vmem:[#allocation5 + $0x70] sm:$0xff] %vm3328, %v3316
    %3342 = vst [vmem:[#allocation5 + $0x78] sm:$0xff] %v3317
    %3343 = vst [vmem:[#allocation5 + $0x80] sm:$0xff] %v3318
    %3344 = vst.msk [vmem:[#allocation5 + $0x88] sm:$0xff] %vm3328, %v3319
    %3345 = vst [vmem:[#allocation5 + $0x90] sm:$0xff] %v3320
    %3346 = vst [vmem:[#allocation5 + $0x98] sm:$0xff] %v3321
    %3347 = vst.msk [vmem:[#allocation5 + $0xa0] sm:$0xff] %vm3328, %v3322
    %3348 = vst [vmem:[#allocation5 + $0xa8] sm:$0xff] %v3323
    %3349 = vst [vmem:[#allocation5 + $0xb0] sm:$0xff] %v3324
    %3350 = vst.msk [vmem:[#allocation5 + $0xb8] sm:$0xff] %vm3328, %v3325
    // Predicated region
    $region26: #{tpu_custom_call.1} parent=1 // pred_check
      _
    $region27: #{tpu_custom_call.1} parent=1 // pred_check_branch
      %3352 = sbr.rel (0) target = $region29
    $region28: #{tpu_custom_call.1} parent=1 // pred_region
      %s3354 = ssub.s32 3072, 3072
      %3355 = vsyncadd [#allocation4], %s3354
      %s3356 = sshll.u32 [#allocation5], 4
      %s3357 = int_to_ptr.vmem [resolvable:$true] %s3356
      %3362 = dma.vmem_to_hbm [thread:$0]  %s3357, 3072, %s5, [#allocation4], 384, 384, 24
    $region29: #{tpu_custom_call.1} parent=1 // pred_fallthru
      _
    // Predicated region
    $region30: #{tpu_custom_call.1} parent=1 // pred_check
      _
    $region31: #{tpu_custom_call.1} parent=1 // pred_check_branch
      %3364 = sbr.rel (0) target = $region33
    $region32: #{tpu_custom_call.1} parent=1 // pred_region
      %3365 = dma.done [#allocation4], 3072
    $region33: #{tpu_custom_call.1} parent=1 // pred_fallthru
      _
    %3366 = vsyncpa [#allocation3], 1
    %3367 = vsyncpa [#allocation4], 1

</llo_original>
